<compile_context>
chip_gen: v7x
topology: tpu7x:2x2x1
jax: 0.10.0
libtpu: 0.0.40
codegen_flags: <defaults>
</compile_context>

<pallas_src>
import jax
import jax.numpy as jnp
from jax.experimental import pallas as pl
from jax.experimental.pallas import tpu as pltpu


# ------------------------------ fused kernel --------------------------------
def _amplitude_kernel(x_ref, akq_ref, tks_ref, sg_ref, htv1_ref, vg1_ref,
                      b1e_ref, a4v1_ref, rep_ref, w2_ref, b2_ref, out_ref):
    # x_ref    : (1, TB, 4N) f32   four-momenta, lane index = 4*particle + component
    # akq_ref  : (1, 4N, N)  f32   per-process x->score fold (includes 1/sqrt(H))
    # tks_ref  : (1, 1, N)   f32   type-token score offsets
    # sg_ref   : (1, 1, 1)   f32   global-token score
    # htv1_ref : (1, N, H)   f32   (type-token value) @ W1
    # vg1_ref  : (1, 1, H)   f32   (global-token value) @ W1
    # b1e_ref  : (1, 1, H)   f32   h_glob @ W1 + b1   (residual + bias fold)
    # a4v1_ref : (4N, H)     bf16  tiled (W_in[:4] @ Wv @ W1)
    # rep_ref  : (N, 4N)     f32   lane-repeat matrix  R[n, 4n+c] = 1
    # w2_ref   : (H, 1) f32, b2_ref : (1, 1) f32
    # out_ref  : (1, 1, TB)  f32   amplitudes, batch on lanes (lane-dense store)
    xr = x_ref[0]                                                    # (TB, 4N)

    # ---- attention scores at the global query; softmax over {global, particles}
    s = jnp.dot(xr, akq_ref[0], preferred_element_type=jnp.float32) + tks_ref[0]
    sg = sg_ref[0]                                                   # (1, 1)
    m = jnp.maximum(jnp.max(s, axis=-1, keepdims=True), sg)          # (TB, 1)
    e = jnp.exp(s - m)                                               # (TB, N)
    eg = jnp.exp(sg - m)                                             # (TB, 1)
    inv = 1.0 / (eg + jnp.sum(e, axis=-1, keepdims=True))            # exact reciprocal
    p = e * inv                                                      # (TB, N)
    pg = eg * inv                                                    # (TB, 1)

    # ---- attention output @ W1, fully folded via value-projection linearity
    p_rep = jnp.dot(p, rep_ref[...], preferred_element_type=jnp.float32)    # (TB, 4N)
    xw = (xr * p_rep).astype(jnp.bfloat16)                 # probability-weighted momenta
    h_pre = jnp.dot(xw, a4v1_ref[...], preferred_element_type=jnp.float32)  # (TB, H)
    h_pre = h_pre + jnp.dot(p, htv1_ref[0], preferred_element_type=jnp.float32)
    h_pre = h_pre + pg * vg1_ref[0] + b1e_ref[0]

    # ---- ReLU MLP head, read out at the global token only
    hidden = jnp.maximum(h_pre, 0.0)                                 # (TB, H)
    amp = jnp.dot(hidden, w2_ref[...],
                  preferred_element_type=jnp.float32) + b2_ref[...]  # (TB, 1)
    out_ref[0] = jnp.transpose(amp)                                  # (1, TB)


# ------------------------------- wrapper -------------------------------------
def amplitude_transformer_forward(inputs, type_token, global_token, params,
                                  token_size, attn_mask=None, batch_tile=512):
    """JAX/Pallas equivalent of AmplitudeTransformerWrapper.forward.

    inputs:       (nprocesses, batch, num_particles, 4)
    type_token:   (nprocesses, num_particles) int
    global_token: (nprocesses,) int
    returns amplitudes of shape (nprocesses, batch, 1).
    """
    if attn_mask is not None:
        # TODO(synk): attention masking of the external net is not modelled.
        raise NotImplementedError("attn_mask is not supported")

    f32 = jnp.float32
    P, B, N, c = inputs.shape
    assert c == 4
    T = token_size
    D = T + 4

    w_in = params["w_in"].astype(f32)   # (D, H)
    b_in = params["b_in"].astype(f32)   # (1, H)
    wq = params["wq"].astype(f32)
    wk = params["wk"].astype(f32)
    wv = params["wv"].astype(f32)
    w1 = params["w1"].astype(f32)
    b1 = params["b1"].astype(f32)
    w2 = params["w2"].astype(f32)       # (H, 1)
    b2 = params["b2"].astype(f32)       # (1, 1)
    H = w_in.shape[1]
    scale = float(H) ** -0.5

    # ---- batch-independent folds (tiny, computed once per call in JAX) -------
    w_in_x, w_in_t = w_in[:4], w_in[4:]
    ttoh = jax.nn.one_hot(type_token.astype(jnp.int32), T, dtype=f32)       # (P,N,T)
    gtoh = jax.nn.one_hot(global_token.astype(jnp.int32), D, dtype=f32)     # (P,D)

    ht = jnp.einsum("pnt,th->pnh", ttoh, w_in_t) + b_in                     # (P,N,H)
    h_glob = gtoh @ w_in + b_in                                             # (P,H)
    q0 = h_glob @ wq                                                        # (P,H)
    kq = scale * (q0 @ wk.T)                # key/query fold: score(tok) = h_tok . kq
    s_glob = jnp.sum(h_glob * kq, axis=-1)                                  # (P,)
    tks = jnp.einsum("pnh,ph->pn", ht, kq)                                  # (P,N)
    w4kq = jnp.einsum("ch,ph->pc", w_in_x, kq)                              # (P,4)
    akq = jnp.einsum("pc,nm->pncm", w4kq,
                     jnp.eye(N, dtype=f32)).reshape(P, 4 * N, N)            # (P,4N,N)
    w4v1 = (w_in_x @ wv) @ w1                                               # (4,H)
    a4v1 = jnp.tile(w4v1, (N, 1)).astype(jnp.bfloat16)                      # (4N,H)
    htv1 = (ht @ wv) @ w1                                                   # (P,N,H)
    vg1 = ((h_glob @ wv) @ w1).reshape(P, 1, H)                             # (P,1,H)
    b1e = (h_glob @ w1 + b1).reshape(P, 1, H)     # residual + MLP bias fold
    rep = jnp.repeat(jnp.eye(N, dtype=f32), 4, axis=1)                      # (N,4N)
    tks3 = tks.reshape(P, 1, N)
    sg3 = s_glob.reshape(P, 1, 1)

    # ---- batch tiling: lane-dense output, pad ragged batches -----------------
    TB = B if B <= batch_tile else batch_tile
    x2d = inputs.astype(f32).reshape(P, B, 4 * N)        # free, contiguous reshape
    pad = (-B) % TB
    if pad:
        x2d = jnp.pad(x2d, ((0, 0), (0, pad), (0, 0)))
    Bp = B + pad
    grid = (P, pl.cdiv(Bp, TB))

    def pspec(a):      # per-process tensors: blocked over the leading axis only
        nd = a.ndim
        return pl.BlockSpec((1,) + a.shape[1:],
                            lambda p, b, nd=nd: (p,) + (0,) * (nd - 1))

    def cspec(a):      # process-independent tensors: whole array, fetched once
        nd = a.ndim
        return pl.BlockSpec(a.shape, lambda p, b, nd=nd: (0,) * nd)

    out = pl.pallas_call(
        _amplitude_kernel,
        grid=grid,
        in_specs=[
            pl.BlockSpec((1, TB, 4 * N), lambda p, b: (p, b, 0)),
            pspec(akq), pspec(tks3), pspec(sg3),
            pspec(htv1), pspec(vg1), pspec(b1e),
            cspec(a4v1), cspec(rep), cspec(w2), cspec(b2),
        ],
        out_specs=pl.BlockSpec((1, 1, TB), lambda p, b: (p, 0, b)),
        out_shape=jax.ShapeDtypeStruct((P, 1, Bp), f32),
        compiler_params=pltpu.CompilerParams(
            dimension_semantics=("parallel", "parallel")),
    )(x2d, akq, tks3, sg3, htv1, vg1, b1e, a4v1, rep, w2, b2)

    return out[:, 0, :B][..., None]                       # (P, B, 1)


# --------------------------- pure-JAX reference ------------------------------
def _reference_forward(inputs, type_token, global_token, params, token_size):
    """Unfused reference: explicit token tensor + the same surrogate net."""
    f32 = jnp.float32
    P, B, N, _ = inputs.shape
    T = token_size
    D = T + 4
    H = params["w_in"].shape[1]
    scale = float(H) ** -0.5
    ttoh = jax.nn.one_hot(type_token.astype(jnp.int32), T, dtype=f32)       # (P,N,T)
    gtoh = jax.nn.one_hot(global_token.astype(jnp.int32), D, dtype=f32)     # (P,D)
    part = jnp.concatenate(
        [inputs.astype(f32), jnp.broadcast_to(ttoh[:, None], (P, B, N, T))], axis=-1)
    glob = jnp.broadcast_to(gtoh[:, None, None, :], (P, B, 1, D))
    tokens = jnp.concatenate([glob, part], axis=2)                          # (P,B,N+1,D)
    h = tokens @ params["w_in"] + params["b_in"]                            # (P,B,N+1,H)
    q0 = h[:, :, :1] @ params["wq"]
    k = h @ params["wk"]
    v = h @ params["wv"]
    s = scale * jnp.einsum("pbqh,pbkh->pbqk", q0, k)
    a = jax.nn.softmax(s, axis=-1)
    ctx = jnp.einsum("pbqk,pbkh->pbqh", a, v)[:, :, 0] + h[:, :, 0]         # (P,B,H)
    hid = jnp.maximum(ctx @ params["w1"] + params["b1"], 0.0)
    return hid @ params["w2"] + params["b2"]                                # (P,B,1)


# --------------------------------- main --------------------------------------
if __name__ == "__main__":
    key = jax.random.PRNGKey(0)
    P, B, N, T, H = 2, 1024, 8, 8, 128       # H=256 would fully fill v6e/v7x MXU width
    D = T + 4
    ks = jax.random.split(key, 8)

    inputs = jax.random.normal(ks[0], (P, B, N, 4), dtype=jnp.float32)
    type_token = jax.random.randint(ks[1], (P, N), 0, T, dtype=jnp.int32)
    global_token = jnp.array([0, 3], dtype=jnp.int32)[:P]

    # deterministic synthetic parameters for the surrogate net
    params = {
        "w_in": jax.random.normal(ks[2], (D, H), jnp.float32) * (float(D) ** -0.5),
        "b_in": jnp.zeros((1, H), jnp.float32),
        "wq": jax.random.normal(ks[3], (H, H), jnp.float32) * (float(H) ** -0.5),
        "wk": jax.random.normal(ks[4], (H, H), jnp.float32) * (float(H) ** -0.5),
        "wv": jax.random.normal(ks[5], (H, H), jnp.float32) * (float(H) ** -0.5),
        "w1": jax.random.normal(ks[6], (H, H), jnp.float32) * (float(H) ** -0.5),
        "b1": jnp.zeros((1, H), jnp.float32),
        "w2": jax.random.normal(ks[7], (H, 1), jnp.float32) * (float(H) ** -0.5),
        "b2": jnp.zeros((1, 1), jnp.float32),
    }

    out = amplitude_transformer_forward(inputs, type_token, global_token,
                                        params, token_size=T, batch_tile=512)
    out = jax.block_until_ready(out)
    assert out.shape == (P, B, 1) and out.dtype == jnp.float32

    ref = _reference_forward(inputs, type_token, global_token, params, token_size=T)
    err = float(jnp.max(jnp.abs(out - ref)))
    assert err < 5e-2, f"max abs error vs reference too large: {err}"
    print("KERNEL_OK")
</pallas_src>

<mosaic_0001>
module attributes {stable_mosaic.version = 11 : i64} {
  func.func @_amplitude_kernel(%arg0: i32, %arg1: i32, %arg2: memref<1x512x32xf32, #tpu.memory_space<vmem>>, %arg3: memref<1x32x8xf32, #tpu.memory_space<vmem>>, %arg4: memref<1x1x8xf32, #tpu.memory_space<vmem>>, %arg5: memref<1x1x1xf32, #tpu.memory_space<vmem>>, %arg6: memref<1x8x128xf32, #tpu.memory_space<vmem>>, %arg7: memref<1x1x128xf32, #tpu.memory_space<vmem>>, %arg8: memref<1x1x128xf32, #tpu.memory_space<vmem>>, %arg9: memref<32x128xbf16, #tpu.memory_space<vmem>>, %arg10: memref<8x32xf32, #tpu.memory_space<vmem>>, %arg11: memref<128x1xf32, #tpu.memory_space<vmem>>, %arg12: memref<1x1xf32, #tpu.memory_space<vmem>>, %arg13: memref<1x1x512xf32, #tpu.memory_space<vmem>>) attributes {dimension_semantics = [#tpu.dimension_semantics<parallel>, #tpu.dimension_semantics<parallel>], iteration_bounds = array<i64: 2, 2>, scalar_prefetch = 0 : i64, scratch_operands = 0 : i64, tpu.core_type = #tpu.core_type<tc>, window_params = [{transform_indices = @transform_0, window_bounds = array<i64: 1, 512, 32>}, {transform_indices = @transform_1, window_bounds = array<i64: 1, 32, 8>}, {transform_indices = @transform_2, window_bounds = array<i64: 1, 1, 8>}, {transform_indices = @transform_3, window_bounds = array<i64: 1, 1, 1>}, {transform_indices = @transform_4, window_bounds = array<i64: 1, 8, 128>}, {transform_indices = @transform_5, window_bounds = array<i64: 1, 1, 128>}, {transform_indices = @transform_6, window_bounds = array<i64: 1, 1, 128>}, {pipeline_mode = #tpu.pipeline_mode<synchronous>, transform_indices = @transform_7, window_bounds = array<i64: 32, 128>}, {pipeline_mode = #tpu.pipeline_mode<synchronous>, transform_indices = @transform_8, window_bounds = array<i64: 8, 32>}, {pipeline_mode = #tpu.pipeline_mode<synchronous>, transform_indices = @transform_9, window_bounds = array<i64: 128, 1>}, {pipeline_mode = #tpu.pipeline_mode<synchronous>, transform_indices = @transform_10, window_bounds = array<i64: 1, 1>}, {transform_indices = @transform_11, window_bounds = array<i64: 1, 1, 512>}]} {
    %c0 = arith.constant 0 : index
    %c0_0 = arith.constant 0 : index
    %c0_1 = arith.constant 0 : index
    %0 = vector.load %arg2[%c0, %c0_0, %c0_1] : memref<1x512x32xf32, #tpu.memory_space<vmem>>, vector<1x512x32xf32>
    %1 = vector.shape_cast %0 : vector<1x512x32xf32> to vector<512x32xf32>
    %c0_2 = arith.constant 0 : index
    %c0_3 = arith.constant 0 : index
    %c0_4 = arith.constant 0 : index
    %2 = vector.load %arg3[%c0_2, %c0_3, %c0_4] : memref<1x32x8xf32, #tpu.memory_space<vmem>>, vector<1x32x8xf32>
    %3 = vector.shape_cast %2 : vector<1x32x8xf32> to vector<32x8xf32>
    %cst = arith.constant dense<0.000000e+00> : vector<512x8xf32>
    %4 = tpu.matmul %1, %3, %cst {dimension_numbers = #tpu.dot_dimension_numbers<[1], [0], [0], [1], [0, 0, 1, 1], [], []>} : vector<512x32xf32>, vector<32x8xf32>, vector<512x8xf32> -> vector<512x8xf32>
    %c0_5 = arith.constant 0 : index
    %c0_6 = arith.constant 0 : index
    %c0_7 = arith.constant 0 : index
    %5 = vector.load %arg4[%c0_5, %c0_6, %c0_7] : memref<1x1x8xf32, #tpu.memory_space<vmem>>, vector<1x1x8xf32>
    %6 = vector.shape_cast %5 : vector<1x1x8xf32> to vector<1x8xf32>
    %7 = vector.broadcast %6 : vector<1x8xf32> to vector<512x8xf32>
    %8 = arith.addf %4, %7 : vector<512x8xf32>
    %c0_8 = arith.constant 0 : index
    %c0_9 = arith.constant 0 : index
    %c0_10 = arith.constant 0 : index
    %9 = vector.load %arg5[%c0_8, %c0_9, %c0_10] : memref<1x1x1xf32, #tpu.memory_space<vmem>>, vector<1x1x1xf32>
    %10 = vector.shape_cast %9 : vector<1x1x1xf32> to vector<1x1xf32>
    %cst_11 = arith.constant dense<0xFF800000> : vector<512xf32>
    %11 = vector.multi_reduction <maximumf>, %8, %cst_11 [1] : vector<512x8xf32> to vector<512xf32>
    %12 = vector.shape_cast %11 : vector<512xf32> to vector<512x1xf32>
    %13 = vector.broadcast %10 : vector<1x1xf32> to vector<512x1xf32>
    %14 = arith.maximumf %12, %13 : vector<512x1xf32>
    %15 = vector.broadcast %14 : vector<512x1xf32> to vector<512x8xf32>
    %16 = arith.subf %8, %15 : vector<512x8xf32>
    %17 = math.exp %16 : vector<512x8xf32>
    %18 = vector.broadcast %10 : vector<1x1xf32> to vector<512x1xf32>
    %19 = arith.subf %18, %14 : vector<512x1xf32>
    %20 = math.exp %19 : vector<512x1xf32>
    %cst_12 = arith.constant dense<0.000000e+00> : vector<512xf32>
    %21 = vector.multi_reduction <add>, %17, %cst_12 [1] : vector<512x8xf32> to vector<512xf32>
    %22 = vector.shape_cast %21 : vector<512xf32> to vector<512x1xf32>
    %23 = arith.addf %20, %22 : vector<512x1xf32>
    %cst_13 = arith.constant 1.000000e+00 : f32
    %24 = vector.broadcast %cst_13 : f32 to vector<512x1xf32>
    %25 = arith.divf %24, %23 : vector<512x1xf32>
    %26 = vector.broadcast %25 : vector<512x1xf32> to vector<512x8xf32>
    %27 = arith.mulf %17, %26 : vector<512x8xf32>
    %28 = arith.mulf %20, %25 : vector<512x1xf32>
    %c0_14 = arith.constant 0 : index
    %c0_15 = arith.constant 0 : index
    %29 = vector.load %arg10[%c0_14, %c0_15] : memref<8x32xf32, #tpu.memory_space<vmem>>, vector<8x32xf32>
    %cst_16 = arith.constant dense<0.000000e+00> : vector<512x32xf32>
    %30 = tpu.matmul %27, %29, %cst_16 {dimension_numbers = #tpu.dot_dimension_numbers<[1], [0], [0], [1], [0, 0, 1, 1], [], []>} : vector<512x8xf32>, vector<8x32xf32>, vector<512x32xf32> -> vector<512x32xf32>
    %31 = arith.mulf %1, %30 : vector<512x32xf32>
    %32 = arith.truncf %31 : vector<512x32xf32> to vector<512x32xbf16>
    %c0_17 = arith.constant 0 : index
    %c0_18 = arith.constant 0 : index
    %33 = vector.load %arg9[%c0_17, %c0_18] : memref<32x128xbf16, #tpu.memory_space<vmem>>, vector<32x128xbf16>
    %cst_19 = arith.constant dense<0.000000e+00> : vector<512x128xf32>
    %34 = tpu.matmul %32, %33, %cst_19 {dimension_numbers = #tpu.dot_dimension_numbers<[1], [0], [0], [1], [0, 0, 1, 1], [], []>} : vector<512x32xbf16>, vector<32x128xbf16>, vector<512x128xf32> -> vector<512x128xf32>
    %c0_20 = arith.constant 0 : index
    %c0_21 = arith.constant 0 : index
    %c0_22 = arith.constant 0 : index
    %35 = vector.load %arg6[%c0_20, %c0_21, %c0_22] : memref<1x8x128xf32, #tpu.memory_space<vmem>>, vector<1x8x128xf32>
    %36 = vector.shape_cast %35 : vector<1x8x128xf32> to vector<8x128xf32>
    %cst_23 = arith.constant dense<0.000000e+00> : vector<512x128xf32>
    %37 = tpu.matmul %27, %36, %cst_23 {dimension_numbers = #tpu.dot_dimension_numbers<[1], [0], [0], [1], [0, 0, 1, 1], [], []>} : vector<512x8xf32>, vector<8x128xf32>, vector<512x128xf32> -> vector<512x128xf32>
    %38 = arith.addf %34, %37 : vector<512x128xf32>
    %c0_24 = arith.constant 0 : index
    %c0_25 = arith.constant 0 : index
    %c0_26 = arith.constant 0 : index
    %39 = vector.load %arg7[%c0_24, %c0_25, %c0_26] : memref<1x1x128xf32, #tpu.memory_space<vmem>>, vector<1x1x128xf32>
    %40 = vector.shape_cast %39 : vector<1x1x128xf32> to vector<1x128xf32>
    %41 = vector.broadcast %28 : vector<512x1xf32> to vector<512x128xf32>
    %42 = vector.broadcast %40 : vector<1x128xf32> to vector<512x128xf32>
    %43 = arith.mulf %41, %42 : vector<512x128xf32>
    %44 = arith.addf %38, %43 : vector<512x128xf32>
    %c0_27 = arith.constant 0 : index
    %c0_28 = arith.constant 0 : index
    %c0_29 = arith.constant 0 : index
    %45 = vector.load %arg8[%c0_27, %c0_28, %c0_29] : memref<1x1x128xf32, #tpu.memory_space<vmem>>, vector<1x1x128xf32>
    %46 = vector.shape_cast %45 : vector<1x1x128xf32> to vector<1x128xf32>
    %47 = vector.broadcast %46 : vector<1x128xf32> to vector<512x128xf32>
    %48 = arith.addf %44, %47 : vector<512x128xf32>
    %cst_30 = arith.constant 0.000000e+00 : f32
    %49 = vector.broadcast %cst_30 : f32 to vector<512x128xf32>
    %50 = arith.maximumf %48, %49 : vector<512x128xf32>
    %c0_31 = arith.constant 0 : index
    %c0_32 = arith.constant 0 : index
    %51 = vector.load %arg11[%c0_31, %c0_32] : memref<128x1xf32, #tpu.memory_space<vmem>>, vector<128x1xf32>
    %cst_33 = arith.constant dense<0.000000e+00> : vector<512x1xf32>
    %52 = tpu.matmul %50, %51, %cst_33 {dimension_numbers = #tpu.dot_dimension_numbers<[1], [0], [0], [1], [0, 0, 1, 1], [], []>} : vector<512x128xf32>, vector<128x1xf32>, vector<512x1xf32> -> vector<512x1xf32>
    %c0_34 = arith.constant 0 : index
    %c0_35 = arith.constant 0 : index
    %53 = vector.load %arg12[%c0_34, %c0_35] : memref<1x1xf32, #tpu.memory_space<vmem>>, vector<1x1xf32>
    %54 = vector.broadcast %53 : vector<1x1xf32> to vector<512x1xf32>
    %55 = arith.addf %52, %54 : vector<512x1xf32>
    %56 = tpu.transpose %55, [1, 0] : vector<512x1xf32> -> vector<1x512xf32>
    %c0_36 = arith.constant 0 : index
    %c0_37 = arith.constant 0 : index
    %c0_38 = arith.constant 0 : index
    %57 = vector.load %arg13[%c0_36, %c0_37, %c0_38] : memref<1x1x512xf32, #tpu.memory_space<vmem>>, vector<1x1x512xf32>
    %58 = vector.shape_cast %57 : vector<1x1x512xf32> to vector<1x512xf32>
    %59 = vector.shape_cast %56 : vector<1x512xf32> to vector<1x1x512xf32>
    tpu.vector_store %arg13[%c0_36, %c0_37, %c0_38], %59 {strides = array<i32>} : memref<1x1x512xf32, #tpu.memory_space<vmem>>, vector<1x1x512xf32>,
    return
  }
  func.func @transform_0(%arg0: i32, %arg1: i32) -> (i32, i32, i32) {
    %c0_i32 = arith.constant 0 : i32
    %c0_i32_0 = arith.constant 0 : i32
    return %arg0, %arg1, %c0_i32 : i32, i32, i32
  }
  func.func @transform_1(%arg0: i32, %arg1: i32) -> (i32, i32, i32) {
    %c0_i32 = arith.constant 0 : i32
    %c0_i32_0 = arith.constant 0 : i32
    %c0_i32_1 = arith.constant 0 : i32
    return %arg0, %c0_i32, %c0_i32_0 : i32, i32, i32
  }
  func.func @transform_2(%arg0: i32, %arg1: i32) -> (i32, i32, i32) {
    %c0_i32 = arith.constant 0 : i32
    %c0_i32_0 = arith.constant 0 : i32
    %c0_i32_1 = arith.constant 0 : i32
    return %arg0, %c0_i32, %c0_i32_0 : i32, i32, i32
  }
  func.func @transform_3(%arg0: i32, %arg1: i32) -> (i32, i32, i32) {
    %c0_i32 = arith.constant 0 : i32
    %c0_i32_0 = arith.constant 0 : i32
    %c0_i32_1 = arith.constant 0 : i32
    return %arg0, %c0_i32, %c0_i32_0 : i32, i32, i32
  }
  func.func @transform_4(%arg0: i32, %arg1: i32) -> (i32, i32, i32) {
    %c0_i32 = arith.constant 0 : i32
    %c0_i32_0 = arith.constant 0 : i32
    %c0_i32_1 = arith.constant 0 : i32
    return %arg0, %c0_i32, %c0_i32_0 : i32, i32, i32
  }
  func.func @transform_5(%arg0: i32, %arg1: i32) -> (i32, i32, i32) {
    %c0_i32 = arith.constant 0 : i32
    %c0_i32_0 = arith.constant 0 : i32
    %c0_i32_1 = arith.constant 0 : i32
    return %arg0, %c0_i32, %c0_i32_0 : i32, i32, i32
  }
  func.func @transform_6(%arg0: i32, %arg1: i32) -> (i32, i32, i32) {
    %c0_i32 = arith.constant 0 : i32
    %c0_i32_0 = arith.constant 0 : i32
    %c0_i32_1 = arith.constant 0 : i32
    return %arg0, %c0_i32, %c0_i32_0 : i32, i32, i32
  }
  func.func @transform_7(%arg0: i32, %arg1: i32) -> (i32, i32) {
    %c0_i32 = arith.constant 0 : i32
    %c0_i32_0 = arith.constant 0 : i32
    %c0_i32_1 = arith.constant 0 : i32
    return %c0_i32, %c0_i32_0 : i32, i32
  }
  func.func @transform_8(%arg0: i32, %arg1: i32) -> (i32, i32) {
    %c0_i32 = arith.constant 0 : i32
    %c0_i32_0 = arith.constant 0 : i32
    %c0_i32_1 = arith.constant 0 : i32
    return %c0_i32, %c0_i32_0 : i32, i32
  }
  func.func @transform_9(%arg0: i32, %arg1: i32) -> (i32, i32) {
    %c0_i32 = arith.constant 0 : i32
    %c0_i32_0 = arith.constant 0 : i32
    %c0_i32_1 = arith.constant 0 : i32
    return %c0_i32, %c0_i32_0 : i32, i32
  }
  func.func @transform_10(%arg0: i32, %arg1: i32) -> (i32, i32) {
    %c0_i32 = arith.constant 0 : i32
    %c0_i32_0 = arith.constant 0 : i32
    %c0_i32_1 = arith.constant 0 : i32
    return %c0_i32, %c0_i32_0 : i32, i32
  }
  func.func @transform_11(%arg0: i32, %arg1: i32) -> (i32, i32, i32) {
    %c0_i32 = arith.constant 0 : i32
    %c0_i32_0 = arith.constant 0 : i32
    return %arg0, %c0_i32, %arg1 : i32, i32, i32
  }
}

</mosaic_0001>

<llo_original>
// kernel: tpu_custom_call.1
$region0: #{tpu_custom_call.1}
  #allocation0 [shape = 'u32[]', space=smem, size = 0x4, offset = 0x4, fixed_abs, tag = 'smem constant byte address 0x4 - core index']
  #allocation1 [shape = 'u32[144,128]{1,0:T(1,128)}', space=vmem, size = 0x12000, scoped, tag = 'internal scratch']
  #allocation2 [shape = 'f32[1,1]{1,0:T(1,128)S(1)}', space=vmem, size = 0x200, scoped, tag = 'scoped memory for tpu_custom_call.1']
  %s0 = inlined_call_operand.vmem [shape: f32[2,1024,32], index: 0, kind: input, shape index: {}]
  %s1 = inlined_call_operand.vmem [shape: f32[2,32,8], index: 1, kind: input, shape index: {}]
  %s2 = inlined_call_operand.vmem [shape: f32[2,1,8], index: 2, kind: input, shape index: {}]
  %s3 = inlined_call_operand.vmem [shape: f32[2,1,1], index: 3, kind: input, shape index: {}]
  %s4 = inlined_call_operand.vmem [shape: f32[2,8,128], index: 4, kind: input, shape index: {}]
  %s5 = inlined_call_operand.vmem [shape: f32[2,1,128], index: 5, kind: input, shape index: {}]
  %s6 = inlined_call_operand.vmem [shape: f32[2,1,128], index: 6, kind: input, shape index: {}]
  %s7 = inlined_call_operand.vmem [shape: bf16[32,128], index: 7, kind: input, shape index: {}]
  %s8 = inlined_call_operand.vmem [shape: f32[8,32], index: 8, kind: input, shape index: {}]
  %s9 = inlined_call_operand.vmem [shape: f32[128,1], index: 9, kind: input, shape index: {}]
  %s10 = inlined_call_operand.<no memory space> [shape: f32[1,1], index: 10, kind: input, shape index: {}]
  %s11 = inlined_call_operand.hbm [shape: f32[2,1,1024], index: 11, kind: output, shape index: {}]
  %s12 = sld [smem:[#allocation0]]
  $region77: #{tpu_custom_call.1} parent=0
    _
  %s14 = ssub.s32 1, %s12
  %s15 = scalar_select 0, %s14, %s12
  %v16 = vstv %s10
  %17 = vst [vmem:[#allocation2] sm:$0x1] %v16
  $region1: #{tpu_custom_call.1} parent=0
    #allocation3 [shape = 'u8[4096]{0}', space=vmem, size = 0x1000, scoped, tag = 'output window, operand 0']
    #allocation4 [shape = 's32[2]{0}', space=sflag, size = 0x8, scoped, tag = 'scoped memory for tpu_custom_call.1']
    %18 = vsyncpa [#allocation4], 0
    %s19 = scalar_lea.sflag [#allocation4], 1
    %20 = vsyncpa %s19, 0
    loop: start=0, step=1, limit=6
    $region2: #{tpu_custom_call.1} parent=1 // loop_pre_header
      _
    $region3: #{tpu_custom_call.1} parent=1 // loop_header
      %s22 = sphi 0, %s26
      %p23 = scmp.ge.s32.totalorder %s22, 6
      %s29 = sphi 0, %s41
      %s30 = sphi 0, %s37
      %s31 = sphi 0, %s29
      %s32 = sphi 0, %s30
      %s33 = sphi 0, %s31
      %s34 = sphi 0, %s32
      %s46 = sphi 0, %s48
      %s49 = sphi 0, %s46
      %s50 = sphi 0, %s49
      %s66 = sphi 0, %s50
      %s72 = sphi 0, %s74
      %s75 = sphi 0, %s72
      %s76 = sphi 0, %s75
      %s92 = sphi 0, %s76
      %s98 = sphi 0, %s100
      %s101 = sphi 0, %s98
      %s102 = sphi 0, %s101
      %s118 = sphi 0, %s102
      %s124 = sphi 0, %s126
      %s127 = sphi 0, %s124
      %s128 = sphi 0, %s127
      %s144 = sphi 0, %s128
      %s150 = sphi 0, %s152
      %s153 = sphi 0, %s150
      %s154 = sphi 0, %s153
      %s170 = sphi 0, %s154
      %s176 = sphi 0, %s178
      %s179 = sphi 0, %s176
      %s180 = sphi 0, %s179
      %s196 = sphi 0, %s180
      %s202 = sphi 0, %s204
      %s205 = sphi 0, %s202
      %s206 = sphi 0, %s205
      %s222 = sphi 0, %s206
      %s226 = sphi 0, %s226
      %s228 = sphi 0, %s226
      %s229 = sphi 0, %s228
      %s243 = sphi 0, %s229
      %s247 = sphi 0, %s247
      %s249 = sphi 0, %s247
      %s250 = sphi 0, %s249
      %s264 = sphi 0, %s250
      %s268 = sphi 0, %s268
      %s270 = sphi 0, %s268
      %s271 = sphi 0, %s270
      %s285 = sphi 0, %s271
      %s289 = sphi 0, %s289
      %s291 = sphi 0, %s289
      %s292 = sphi 0, %s291
      %s306 = sphi 0, %s292
      %s314 = sphi 0, %s316
      %s317 = sphi 0, %s314
      %s318 = sphi 0, %s317
      %s334 = sphi 0, %s318
    $region4: #{tpu_custom_call.1} parent=1 // loop_header_branch
      %25 = sbr.rel (%p23) target = $region8
    $region5: #{tpu_custom_call.1} parent=1 // loop_body
      %s27 = ssub.s32 %s22, 1
      %s28 = ssub.s32 %s22, 2
      %s35 = sadd.s32 1, %s30
      %p36 = scmp.ge.s32.totalorder %s35, 2
      %s37 = scalar_select %p36, 0, %s35
      %s38 = sadd.s32 1, %s29
      %s39 = scalar_select %p36, %s38, %s29
      %p40 = scmp.ge.s32.totalorder %s39, 2
      %s41 = scalar_select %p40, 0, %s39
      %s42 = ssub.s32 %s29, %s41
      %s43 = ssub.s32 %s30, %s37
      %s44 = sor.u32 %s42, %s43
      %p45 = scmp.eq.s32.totalorder %s44, 0
      %s47 = sadd.s32 %s46, 1
      %s48 = scalar_select %p45, %s46, %s47
      %p51 = pneg %p45
      %p52 = scmp.eq.s32.totalorder %s22, 3
      %p53 = por %p51, %p52
      %p54 = scmp.ne.s32.totalorder %s46, %s49
      %p55 = scmp.eq.s32.totalorder %s22, 0
      %p56 = por %p54, %p55
      %p57 = scmp.ne.s32.totalorder %s46, %s49
      %p58 = scmp.eq.s32.totalorder %s27, 3
      %p59 = por %p57, %p58
      %p60 = scmp.ne.s32.totalorder %s49, %s50
      %p61 = scmp.eq.s32.totalorder %s27, 0
      %p62 = por %p60, %p61
      %p63 = scmp.ne.s32.totalorder %s49, %s50
      %p64 = scmp.eq.s32.totalorder %s28, 3
      %p65 = por %p63, %p64
      %p67 = scmp.ne.s32.totalorder %s50, %s66
      %p68 = scmp.eq.s32.totalorder %s28, 0
      %p69 = por %p67, %p68
      %s70 = ssub.s32 %s29, %s41
      %p71 = scmp.eq.s32.totalorder %s70, 0
      %s73 = sadd.s32 %s72, 1
      %s74 = scalar_select %p71, %s72, %s73
      %p77 = pneg %p71
      %p78 = scmp.eq.s32.totalorder %s22, 3
      %p79 = por %p77, %p78
      %p80 = scmp.ne.s32.totalorder %s72, %s75
      %p81 = scmp.eq.s32.totalorder %s22, 0
      %p82 = por %p80, %p81
      %p83 = scmp.ne.s32.totalorder %s72, %s75
      %p84 = scmp.eq.s32.totalorder %s27, 3
      %p85 = por %p83, %p84
      %p86 = scmp.ne.s32.totalorder %s75, %s76
      %p87 = scmp.eq.s32.totalorder %s27, 0
      %p88 = por %p86, %p87
      %p89 = scmp.ne.s32.totalorder %s75, %s76
      %p90 = scmp.eq.s32.totalorder %s28, 3
      %p91 = por %p89, %p90
      %p93 = scmp.ne.s32.totalorder %s76, %s92
      %p94 = scmp.eq.s32.totalorder %s28, 0
      %p95 = por %p93, %p94
      %s96 = ssub.s32 %s29, %s41
      %p97 = scmp.eq.s32.totalorder %s96, 0
      %s99 = sadd.s32 %s98, 1
      %s100 = scalar_select %p97, %s98, %s99
      %p103 = pneg %p97
      %p104 = scmp.eq.s32.totalorder %s22, 3
      %p105 = por %p103, %p104
      %p106 = scmp.ne.s32.totalorder %s98, %s101
      %p107 = scmp.eq.s32.totalorder %s22, 0
      %p108 = por %p106, %p107
      %p109 = scmp.ne.s32.totalorder %s98, %s101
      %p110 = scmp.eq.s32.totalorder %s27, 3
      %p111 = por %p109, %p110
      %p112 = scmp.ne.s32.totalorder %s101, %s102
      %p113 = scmp.eq.s32.totalorder %s27, 0
      %p114 = por %p112, %p113
      %p115 = scmp.ne.s32.totalorder %s101, %s102
      %p116 = scmp.eq.s32.totalorder %s28, 3
      %p117 = por %p115, %p116
      %p119 = scmp.ne.s32.totalorder %s102, %s118
      %p120 = scmp.eq.s32.totalorder %s28, 0
      %p121 = por %p119, %p120
      %s122 = ssub.s32 %s29, %s41
      %p123 = scmp.eq.s32.totalorder %s122, 0
      %s125 = sadd.s32 %s124, 1
      %s126 = scalar_select %p123, %s124, %s125
      %p129 = pneg %p123
      %p130 = scmp.eq.s32.totalorder %s22, 3
      %p131 = por %p129, %p130
      %p132 = scmp.ne.s32.totalorder %s124, %s127
      %p133 = scmp.eq.s32.totalorder %s22, 0
      %p134 = por %p132, %p133
      %p135 = scmp.ne.s32.totalorder %s124, %s127
      %p136 = scmp.eq.s32.totalorder %s27, 3
      %p137 = por %p135, %p136
      %p138 = scmp.ne.s32.totalorder %s127, %s128
      %p139 = scmp.eq.s32.totalorder %s27, 0
      %p140 = por %p138, %p139
      %p141 = scmp.ne.s32.totalorder %s127, %s128
      %p142 = scmp.eq.s32.totalorder %s28, 3
      %p143 = por %p141, %p142
      %p145 = scmp.ne.s32.totalorder %s128, %s144
      %p146 = scmp.eq.s32.totalorder %s28, 0
      %p147 = por %p145, %p146
      %s148 = ssub.s32 %s29, %s41
      %p149 = scmp.eq.s32.totalorder %s148, 0
      %s151 = sadd.s32 %s150, 1
      %s152 = scalar_select %p149, %s150, %s151
      %p155 = pneg %p149
      %p156 = scmp.eq.s32.totalorder %s22, 3
      %p157 = por %p155, %p156
      %p158 = scmp.ne.s32.totalorder %s150, %s153
      %p159 = scmp.eq.s32.totalorder %s22, 0
      %p160 = por %p158, %p159
      %p161 = scmp.ne.s32.totalorder %s150, %s153
      %p162 = scmp.eq.s32.totalorder %s27, 3
      %p163 = por %p161, %p162
      %p164 = scmp.ne.s32.totalorder %s153, %s154
      %p165 = scmp.eq.s32.totalorder %s27, 0
      %p166 = por %p164, %p165
      %p167 = scmp.ne.s32.totalorder %s153, %s154
      %p168 = scmp.eq.s32.totalorder %s28, 3
      %p169 = por %p167, %p168
      %p171 = scmp.ne.s32.totalorder %s154, %s170
      %p172 = scmp.eq.s32.totalorder %s28, 0
      %p173 = por %p171, %p172
      %s174 = ssub.s32 %s29, %s41
      %p175 = scmp.eq.s32.totalorder %s174, 0
      %s177 = sadd.s32 %s176, 1
      %s178 = scalar_select %p175, %s176, %s177
      %p181 = pneg %p175
      %p182 = scmp.eq.s32.totalorder %s22, 3
      %p183 = por %p181, %p182
      %p184 = scmp.ne.s32.totalorder %s176, %s179
      %p185 = scmp.eq.s32.totalorder %s22, 0
      %p186 = por %p184, %p185
      %p187 = scmp.ne.s32.totalorder %s176, %s179
      %p188 = scmp.eq.s32.totalorder %s27, 3
      %p189 = por %p187, %p188
      %p190 = scmp.ne.s32.totalorder %s179, %s180
      %p191 = scmp.eq.s32.totalorder %s27, 0
      %p192 = por %p190, %p191
      %p193 = scmp.ne.s32.totalorder %s179, %s180
      %p194 = scmp.eq.s32.totalorder %s28, 3
      %p195 = por %p193, %p194
      %p197 = scmp.ne.s32.totalorder %s180, %s196
      %p198 = scmp.eq.s32.totalorder %s28, 0
      %p199 = por %p197, %p198
      %s200 = ssub.s32 %s29, %s41
      %p201 = scmp.eq.s32.totalorder %s200, 0
      %s203 = sadd.s32 %s202, 1
      %s204 = scalar_select %p201, %s202, %s203
      %p207 = pneg %p201
      %p208 = scmp.eq.s32.totalorder %s22, 3
      %p209 = por %p207, %p208
      %p210 = scmp.ne.s32.totalorder %s202, %s205
      %p211 = scmp.eq.s32.totalorder %s22, 0
      %p212 = por %p210, %p211
      %p213 = scmp.ne.s32.totalorder %s202, %s205
      %p214 = scmp.eq.s32.totalorder %s27, 3
      %p215 = por %p213, %p214
      %p216 = scmp.ne.s32.totalorder %s205, %s206
      %p217 = scmp.eq.s32.totalorder %s27, 0
      %p218 = por %p216, %p217
      %p219 = scmp.ne.s32.totalorder %s205, %s206
      %p220 = scmp.eq.s32.totalorder %s28, 3
      %p221 = por %p219, %p220
      %p223 = scmp.ne.s32.totalorder %s206, %s222
      %p224 = scmp.eq.s32.totalorder %s28, 0
      %p225 = por %p223, %p224
      %s227 = sadd.s32 %s226, 1
      %p230 = scmp.eq.s32.totalorder %s22, 3
      %p231 = scmp.ne.s32.totalorder %s226, %s228
      %p232 = scmp.eq.s32.totalorder %s22, 0
      %p233 = por %p231, %p232
      %p234 = scmp.ne.s32.totalorder %s226, %s228
      %p235 = scmp.eq.s32.totalorder %s27, 3
      %p236 = por %p234, %p235
      %p237 = scmp.ne.s32.totalorder %s228, %s229
      %p238 = scmp.eq.s32.totalorder %s27, 0
      %p239 = por %p237, %p238
      %p240 = scmp.ne.s32.totalorder %s228, %s229
      %p241 = scmp.eq.s32.totalorder %s28, 3
      %p242 = por %p240, %p241
      %p244 = scmp.ne.s32.totalorder %s229, %s243
      %p245 = scmp.eq.s32.totalorder %s28, 0
      %p246 = por %p244, %p245
      %s248 = sadd.s32 %s247, 1
      %p251 = scmp.eq.s32.totalorder %s22, 3
      %p252 = scmp.ne.s32.totalorder %s247, %s249
      %p253 = scmp.eq.s32.totalorder %s22, 0
      %p254 = por %p252, %p253
      %p255 = scmp.ne.s32.totalorder %s247, %s249
      %p256 = scmp.eq.s32.totalorder %s27, 3
      %p257 = por %p255, %p256
      %p258 = scmp.ne.s32.totalorder %s249, %s250
      %p259 = scmp.eq.s32.totalorder %s27, 0
      %p260 = por %p258, %p259
      %p261 = scmp.ne.s32.totalorder %s249, %s250
      %p262 = scmp.eq.s32.totalorder %s28, 3
      %p263 = por %p261, %p262
      %p265 = scmp.ne.s32.totalorder %s250, %s264
      %p266 = scmp.eq.s32.totalorder %s28, 0
      %p267 = por %p265, %p266
      %s269 = sadd.s32 %s268, 1
      %p272 = scmp.eq.s32.totalorder %s22, 3
      %p273 = scmp.ne.s32.totalorder %s268, %s270
      %p274 = scmp.eq.s32.totalorder %s22, 0
      %p275 = por %p273, %p274
      %p276 = scmp.ne.s32.totalorder %s268, %s270
      %p277 = scmp.eq.s32.totalorder %s27, 3
      %p278 = por %p276, %p277
      %p279 = scmp.ne.s32.totalorder %s270, %s271
      %p280 = scmp.eq.s32.totalorder %s27, 0
      %p281 = por %p279, %p280
      %p282 = scmp.ne.s32.totalorder %s270, %s271
      %p283 = scmp.eq.s32.totalorder %s28, 3
      %p284 = por %p282, %p283
      %p286 = scmp.ne.s32.totalorder %s271, %s285
      %p287 = scmp.eq.s32.totalorder %s28, 0
      %p288 = por %p286, %p287
      %s290 = sadd.s32 %s289, 1
      %p293 = scmp.eq.s32.totalorder %s22, 3
      %p294 = scmp.ne.s32.totalorder %s289, %s291
      %p295 = scmp.eq.s32.totalorder %s22, 0
      %p296 = por %p294, %p295
      %p297 = scmp.ne.s32.totalorder %s289, %s291
      %p298 = scmp.eq.s32.totalorder %s27, 3
      %p299 = por %p297, %p298
      %p300 = scmp.ne.s32.totalorder %s291, %s292
      %p301 = scmp.eq.s32.totalorder %s27, 0
      %p302 = por %p300, %p301
      %p303 = scmp.ne.s32.totalorder %s291, %s292
      %p304 = scmp.eq.s32.totalorder %s28, 3
      %p305 = por %p303, %p304
      %p307 = scmp.ne.s32.totalorder %s292, %s306
      %p308 = scmp.eq.s32.totalorder %s28, 0
      %p309 = por %p307, %p308
      %s310 = ssub.s32 %s29, %s41
      %s311 = ssub.s32 %s30, %s37
      %s312 = sor.u32 %s310, %s311
      %p313 = scmp.eq.s32.totalorder %s312, 0
      %s315 = sadd.s32 %s314, 1
      %s316 = scalar_select %p313, %s314, %s315
      %p319 = pneg %p313
      %p320 = scmp.eq.s32.totalorder %s22, 3
      %p321 = por %p319, %p320
      %p322 = scmp.ne.s32.totalorder %s314, %s317
      %p323 = scmp.eq.s32.totalorder %s22, 0
      %p324 = por %p322, %p323
      %p325 = scmp.ne.s32.totalorder %s314, %s317
      %p326 = scmp.eq.s32.totalorder %s27, 3
      %p327 = por %p325, %p326
      %p328 = scmp.ne.s32.totalorder %s317, %s318
      %p329 = scmp.eq.s32.totalorder %s27, 0
      %p330 = por %p328, %p329
      %p331 = scmp.ne.s32.totalorder %s317, %s318
      %p332 = scmp.eq.s32.totalorder %s28, 3
      %p333 = por %p331, %p332
      %p335 = scmp.ne.s32.totalorder %s318, %s334
      %p336 = scmp.eq.s32.totalorder %s28, 0
      %p337 = por %p335, %p336
      %p338 = scmp.le.s32.totalorder 1, %s22
      %p339 = scmp.lt.s32.totalorder %s22, 5
      %p340 = pnand %p338, %p339
      %p341 = pneg %p340
      // Predicated region
      $region9: #{tpu_custom_call.1} parent=5 // pred_check
        _
      $region10: #{tpu_custom_call.1} parent=5 // pred_check_branch
        %343 = sbr.rel (%p340) target = $region12
      $region11: #{tpu_custom_call.1} parent=5 // pred_region
        %s344 = ssub.s32 %s22, 1
        // Predicated region
        $region13: #{tpu_custom_call.1} parent=11 // pred_check
          %p345 = pneg %p239
        $region14: #{tpu_custom_call.1} parent=11 // pred_check_branch
          %347 = sbr.rel (%p345) target = $region16
        $region15: #{tpu_custom_call.1} parent=11 // pred_region
          _
        $region16: #{tpu_custom_call.1} parent=11 // pred_fallthru
          _
        // Predicated region
        $region17: #{tpu_custom_call.1} parent=11 // pred_check
          %p348 = pneg %p260
        $region18: #{tpu_custom_call.1} parent=11 // pred_check_branch
          %350 = sbr.rel (%p348) target = $region20
        $region19: #{tpu_custom_call.1} parent=11 // pred_region
          _
        $region20: #{tpu_custom_call.1} parent=11 // pred_fallthru
          _
        // Predicated region
        $region21: #{tpu_custom_call.1} parent=11 // pred_check
          %p351 = pneg %p281
        $region22: #{tpu_custom_call.1} parent=11 // pred_check_branch
          %353 = sbr.rel (%p351) target = $region24
        $region23: #{tpu_custom_call.1} parent=11 // pred_region
          _
        $region24: #{tpu_custom_call.1} parent=11 // pred_fallthru
          _
        // Predicated region
        $region25: #{tpu_custom_call.1} parent=11 // pred_check
          %p354 = pneg %p302
        $region26: #{tpu_custom_call.1} parent=11 // pred_check_branch
          %356 = sbr.rel (%p354) target = $region28
        $region27: #{tpu_custom_call.1} parent=11 // pred_region
          _
        $region28: #{tpu_custom_call.1} parent=11 // pred_fallthru
          _
      $region12: #{tpu_custom_call.1} parent=5 // pred_fallthru
        _
      %p357 = scmp.lt.s32.totalorder %s22, 4
      // Predicated region
      $region29: #{tpu_custom_call.1} parent=5 // pred_check
        %p358 = pneg %p357
      $region30: #{tpu_custom_call.1} parent=5 // pred_check_branch
        %360 = sbr.rel (%p358) target = $region32
      $region31: #{tpu_custom_call.1} parent=5 // pred_region
        // Predicated region
        $region33: #{tpu_custom_call.1} parent=31 // pred_check
          %p361 = pneg %p56
        $region34: #{tpu_custom_call.1} parent=31 // pred_check_branch
          %363 = sbr.rel (%p361) target = $region36
        $region35: #{tpu_custom_call.1} parent=31 // pred_region
          %s364 = smul.u32 64, %s30
          %p365 = scmp.lt.s32.totalorder %s29, 1
          %s366 = scalar_select %p365, %s29, 1
          %p367 = scmp.lt.s32.totalorder %s364, 127
          %s368 = scalar_select %p367, %s364, 127
          %s369 = smul.addr %s366, 128
          %s370 = sadd.s32 %s368, %s369
          %s371 = smul.addr %s370, 8
          %s372 = scalar_lea.vmem %s0, %s371
          %s373 = smul.u32 64, %s30
        $region36: #{tpu_custom_call.1} parent=31 // pred_fallthru
          _
        // Predicated region
        $region37: #{tpu_custom_call.1} parent=31 // pred_check
          %p374 = pneg %p82
        $region38: #{tpu_custom_call.1} parent=31 // pred_check_branch
          %376 = sbr.rel (%p374) target = $region40
        $region39: #{tpu_custom_call.1} parent=31 // pred_region
          %p377 = scmp.lt.s32.totalorder %s29, 1
          %s378 = scalar_select %p377, %s29, 1
          %s379 = smul.addr %s378, 4
          %s380 = smul.addr %s379, 8
          %s381 = scalar_lea.vmem %s1, %s380
        $region40: #{tpu_custom_call.1} parent=31 // pred_fallthru
          _
        // Predicated region
        $region41: #{tpu_custom_call.1} parent=31 // pred_check
          %p382 = pneg %p108
        $region42: #{tpu_custom_call.1} parent=31 // pred_check_branch
          %384 = sbr.rel (%p382) target = $region44
        $region43: #{tpu_custom_call.1} parent=31 // pred_region
          %p385 = scmp.lt.s32.totalorder %s29, 1
          %s386 = scalar_select %p385, %s29, 1
          %s387 = scalar_lea.vmem %s2, %s386
        $region44: #{tpu_custom_call.1} parent=31 // pred_fallthru
          _
        // Predicated region
        $region45: #{tpu_custom_call.1} parent=31 // pred_check
          %p388 = pneg %p134
        $region46: #{tpu_custom_call.1} parent=31 // pred_check_branch
          %390 = sbr.rel (%p388) target = $region48
        $region47: #{tpu_custom_call.1} parent=31 // pred_region
          %p391 = scmp.lt.s32.totalorder %s29, 1
          %s392 = scalar_select %p391, %s29, 1
          %s393 = scalar_lea.vmem %s3, %s392
        $region48: #{tpu_custom_call.1} parent=31 // pred_fallthru
          _
        // Predicated region
        $region49: #{tpu_custom_call.1} parent=31 // pred_check
          %p394 = pneg %p160
        $region50: #{tpu_custom_call.1} parent=31 // pred_check_branch
          %396 = sbr.rel (%p394) target = $region52
        $region51: #{tpu_custom_call.1} parent=31 // pred_region
          %p397 = scmp.lt.s32.totalorder %s29, 1
          %s398 = scalar_select %p397, %s29, 1
          %s399 = smul.addr %s398, 8
          %s400 = scalar_lea.vmem %s4, %s399
        $region52: #{tpu_custom_call.1} parent=31 // pred_fallthru
          _
        // Predicated region
        $region53: #{tpu_custom_call.1} parent=31 // pred_check
          %p401 = pneg %p186
        $region54: #{tpu_custom_call.1} parent=31 // pred_check_branch
          %403 = sbr.rel (%p401) target = $region56
        $region55: #{tpu_custom_call.1} parent=31 // pred_region
          %p404 = scmp.lt.s32.totalorder %s29, 1
          %s405 = scalar_select %p404, %s29, 1
          %s406 = scalar_lea.vmem %s5, %s405
        $region56: #{tpu_custom_call.1} parent=31 // pred_fallthru
          _
        // Predicated region
        $region57: #{tpu_custom_call.1} parent=31 // pred_check
          %p407 = pneg %p212
        $region58: #{tpu_custom_call.1} parent=31 // pred_check_branch
          %409 = sbr.rel (%p407) target = $region60
        $region59: #{tpu_custom_call.1} parent=31 // pred_region
          %p410 = scmp.lt.s32.totalorder %s29, 1
          %s411 = scalar_select %p410, %s29, 1
          %s412 = scalar_lea.vmem %s6, %s411
        $region60: #{tpu_custom_call.1} parent=31 // pred_fallthru
          _
      $region32: #{tpu_custom_call.1} parent=5 // pred_fallthru
        _
      %p413 = scmp.le.s32.totalorder 1, %s22
      %p414 = scmp.lt.s32.totalorder %s22, 5
      %p415 = pnand %p413, %p414
      %p416 = pneg %p415
      // Predicated region
      $region61: #{tpu_custom_call.1} parent=5 // pred_check
        _
      $region62: #{tpu_custom_call.1} parent=5 // pred_check_branch
        %418 = sbr.rel (%p415) target = $region64
      $region63: #{tpu_custom_call.1} parent=5 // pred_region
        %s419 = ssub.s32 %s22, 1
        %s420 = smul.u32 64, %s32
        %p421 = scmp.lt.s32.totalorder %s31, 1
        %s422 = scalar_select %p421, %s31, 1
        %p423 = scmp.lt.s32.totalorder %s420, 127
        %s424 = scalar_select %p423, %s420, 127
        %s425 = smul.addr %s422, 128
        %s426 = sadd.s32 %s424, %s425
        %s427 = smul.addr %s426, 8
        %s428 = scalar_lea.vmem %s0, %s427
        %p429 = pneg %p62
        %p430 = pneg %p59
        %p431 = scmp.lt.s32.totalorder %s31, 1
        %s432 = scalar_select %p431, %s31, 1
        %s433 = smul.addr %s432, 4
        %s434 = smul.addr %s433, 8
        %s435 = scalar_lea.vmem %s1, %s434
        %p436 = pneg %p88
        %p437 = pneg %p85
        %p438 = scmp.lt.s32.totalorder %s31, 1
        %s439 = scalar_select %p438, %s31, 1
        %s440 = scalar_lea.vmem %s2, %s439
        %p441 = pneg %p114
        %p442 = pneg %p111
        %p443 = scmp.lt.s32.totalorder %s31, 1
        %s444 = scalar_select %p443, %s31, 1
        %s445 = scalar_lea.vmem %s3, %s444
        %p446 = pneg %p140
        %p447 = pneg %p137
        %p448 = scmp.lt.s32.totalorder %s31, 1
        %s449 = scalar_select %p448, %s31, 1
        %s450 = smul.addr %s449, 8
        %s451 = scalar_lea.vmem %s4, %s450
        %p452 = pneg %p166
        %p453 = pneg %p163
        %p454 = scmp.lt.s32.totalorder %s31, 1
        %s455 = scalar_select %p454, %s31, 1
        %s456 = scalar_lea.vmem %s5, %s455
        %p457 = pneg %p192
        %p458 = pneg %p189
        %p459 = scmp.lt.s32.totalorder %s31, 1
        %s460 = scalar_select %p459, %s31, 1
        %s461 = scalar_lea.vmem %s6, %s460
        %p462 = pneg %p218
        %p463 = pneg %p215
        %p464 = pneg %p239
        %p465 = pneg %p236
        %p466 = pneg %p260
        %p467 = pneg %p257
        %p468 = pneg %p281
        %p469 = pneg %p278
        %p470 = pneg %p302
        %p471 = pneg %p299
        %p472 = pneg %p330
        %p473 = pneg %p327
        %s474 = sand.u32 %s317, 1
        %s475 = scalar_lea.sflag [#allocation4], %s474
        %s476 = sand.u32 %s317, 1
        %s477 = smul.addr %s476, 4
        %s478 = scalar_lea.vmem [#allocation3], %s477
        %s479 = smul.u32 64, %s32
        %p480 = scmp.lt.s32.totalorder %s31, 1
        %s481 = scalar_select %p480, %s31, 1
        %p482 = scmp.lt.s32.totalorder %s479, 127
        %s483 = scalar_select %p482, %s479, 127
        %s484 = smul.addr %s481, 128
        %s485 = sadd.s32 %s483, %s484
        %s486 = smul.addr %s485, 8
        %s487 = scalar_lea.vmem %s0, %s486
        %s488 = smul.u32 64, %s32
        %p489 = scmp.lt.s32.totalorder %s31, 1
        %s490 = scalar_select %p489, %s31, 1
        %s491 = smul.addr %s490, 4
        %s492 = smul.addr %s491, 8
        %s493 = scalar_lea.vmem %s1, %s492
        %p494 = scmp.lt.s32.totalorder %s31, 1
        %s495 = scalar_select %p494, %s31, 1
        %s496 = scalar_lea.vmem %s2, %s495
        %p497 = scmp.lt.s32.totalorder %s31, 1
        %s498 = scalar_select %p497, %s31, 1
        %s499 = scalar_lea.vmem %s3, %s498
        %p500 = scmp.lt.s32.totalorder %s31, 1
        %s501 = scalar_select %p500, %s31, 1
        %s502 = smul.addr %s501, 8
        %s503 = scalar_lea.vmem %s4, %s502
        %p504 = scmp.lt.s32.totalorder %s31, 1
        %s505 = scalar_select %p504, %s31, 1
        %s506 = scalar_lea.vmem %s5, %s505
        %p507 = scmp.lt.s32.totalorder %s31, 1
        %s508 = scalar_select %p507, %s31, 1
        %s509 = scalar_lea.vmem %s6, %s508
        %s510 = smul.u32 4, %s32
        %v512 = vld [vmem:[%s487] sm:$0xff]
        %v513 = vld [vmem:[%s487 + $0x8] sm:$0xff]
        %v514 = vld [vmem:[%s487 + $0x10] sm:$0xff]
        %v515 = vld [vmem:[%s487 + $0x18] sm:$0xff]
        %v516 = vld [vmem:[%s487 + $0x20] sm:$0xff]
        %v517 = vld [vmem:[%s487 + $0x28] sm:$0xff]
        %v518 = vld [vmem:[%s487 + $0x30] sm:$0xff]
        %v519 = vld [vmem:[%s487 + $0x38] sm:$0xff]
        %v520 = vld [vmem:[%s487 + $0x40] sm:$0xff]
        %v521 = vld [vmem:[%s487 + $0x48] sm:$0xff]
        %v522 = vld [vmem:[%s487 + $0x50] sm:$0xff]
        %v523 = vld [vmem:[%s487 + $0x58] sm:$0xff]
        %v524 = vld [vmem:[%s487 + $0x60] sm:$0xff]
        %v525 = vld [vmem:[%s487 + $0x68] sm:$0xff]
        %v526 = vld [vmem:[%s487 + $0x70] sm:$0xff]
        %v527 = vld [vmem:[%s487 + $0x78] sm:$0xff]
        %v528 = vld [vmem:[%s487 + $0x80] sm:$0xff]
        %v529 = vld [vmem:[%s487 + $0x88] sm:$0xff]
        %v530 = vld [vmem:[%s487 + $0x90] sm:$0xff]
        %v531 = vld [vmem:[%s487 + $0x98] sm:$0xff]
        %v532 = vld [vmem:[%s487 + $0xa0] sm:$0xff]
        %v533 = vld [vmem:[%s487 + $0xa8] sm:$0xff]
        %v534 = vld [vmem:[%s487 + $0xb0] sm:$0xff]
        %v535 = vld [vmem:[%s487 + $0xb8] sm:$0xff]
        %v536 = vld [vmem:[%s487 + $0xc0] sm:$0xff]
        %v537 = vld [vmem:[%s487 + $0xc8] sm:$0xff]
        %v538 = vld [vmem:[%s487 + $0xd0] sm:$0xff]
        %v539 = vld [vmem:[%s487 + $0xd8] sm:$0xff]
        %v540 = vld [vmem:[%s487 + $0xe0] sm:$0xff]
        %v541 = vld [vmem:[%s487 + $0xe8] sm:$0xff]
        %v542 = vld [vmem:[%s487 + $0xf0] sm:$0xff]
        %v543 = vld [vmem:[%s487 + $0xf8] sm:$0xff]
        %v544 = vld [vmem:[%s487 + $0x100] sm:$0xff]
        %v545 = vld [vmem:[%s487 + $0x108] sm:$0xff]
        %v546 = vld [vmem:[%s487 + $0x110] sm:$0xff]
        %v547 = vld [vmem:[%s487 + $0x118] sm:$0xff]
        %v548 = vld [vmem:[%s487 + $0x120] sm:$0xff]
        %v549 = vld [vmem:[%s487 + $0x128] sm:$0xff]
        %v550 = vld [vmem:[%s487 + $0x130] sm:$0xff]
        %v551 = vld [vmem:[%s487 + $0x138] sm:$0xff]
        %v552 = vld [vmem:[%s487 + $0x140] sm:$0xff]
        %v553 = vld [vmem:[%s487 + $0x148] sm:$0xff]
        %v554 = vld [vmem:[%s487 + $0x150] sm:$0xff]
        %v555 = vld [vmem:[%s487 + $0x158] sm:$0xff]
        %v556 = vld [vmem:[%s487 + $0x160] sm:$0xff]
        %v557 = vld [vmem:[%s487 + $0x168] sm:$0xff]
        %v558 = vld [vmem:[%s487 + $0x170] sm:$0xff]
        %v559 = vld [vmem:[%s487 + $0x178] sm:$0xff]
        %v560 = vld [vmem:[%s487 + $0x180] sm:$0xff]
        %v561 = vld [vmem:[%s487 + $0x188] sm:$0xff]
        %v562 = vld [vmem:[%s487 + $0x190] sm:$0xff]
        %v563 = vld [vmem:[%s487 + $0x198] sm:$0xff]
        %v564 = vld [vmem:[%s487 + $0x1a0] sm:$0xff]
        %v565 = vld [vmem:[%s487 + $0x1a8] sm:$0xff]
        %v566 = vld [vmem:[%s487 + $0x1b0] sm:$0xff]
        %v567 = vld [vmem:[%s487 + $0x1b8] sm:$0xff]
        %v568 = vld [vmem:[%s487 + $0x1c0] sm:$0xff]
        %v569 = vld [vmem:[%s487 + $0x1c8] sm:$0xff]
        %v570 = vld [vmem:[%s487 + $0x1d0] sm:$0xff]
        %v571 = vld [vmem:[%s487 + $0x1d8] sm:$0xff]
        %v572 = vld [vmem:[%s487 + $0x1e0] sm:$0xff]
        %v573 = vld [vmem:[%s487 + $0x1e8] sm:$0xff]
        %v574 = vld [vmem:[%s487 + $0x1f0] sm:$0xff]
        %v575 = vld [vmem:[%s487 + $0x1f8] sm:$0xff]
        %v576 = vld [vmem:[%s493] sm:$0xff]
        %v577 = vld [vmem:[%s493 + $0x8] sm:$0xff]
        %v578 = vld [vmem:[%s493 + $0x10] sm:$0xff]
        %v579 = vld [vmem:[%s493 + $0x18] sm:$0xff]
        %v580 = vld [vmem:[%s496] sm:$0x1]
        %v582 = vlaneseq
        %v583 = vshrl.u32 %v582, 7
        %v584 = vsub.s32 0, %v583
        %v585 = vrot.slane %v580, %v584
        %vm587 = vcmask 261120
        %v589 = vsel %vm587, %v512, 0
        %v592 = vsel %vm587, %v513, 0
        %v595 = vsel %vm587, %v514, 0
        %v598 = vsel %vm587, %v515, 0
        %v601 = vsel %vm587, %v516, 0
        %v604 = vsel %vm587, %v517, 0
        %v607 = vsel %vm587, %v518, 0
        %v610 = vsel %vm587, %v519, 0
        %v613 = vsel %vm587, %v520, 0
        %v616 = vsel %vm587, %v521, 0
        %v619 = vsel %vm587, %v522, 0
        %v622 = vsel %vm587, %v523, 0
        %v625 = vsel %vm587, %v524, 0
        %v628 = vsel %vm587, %v525, 0
        %v631 = vsel %vm587, %v526, 0
        %v634 = vsel %vm587, %v527, 0
        %v637 = vsel %vm587, %v528, 0
        %v640 = vsel %vm587, %v529, 0
        %v643 = vsel %vm587, %v530, 0
        %v646 = vsel %vm587, %v531, 0
        %v649 = vsel %vm587, %v532, 0
        %v652 = vsel %vm587, %v533, 0
        %v655 = vsel %vm587, %v534, 0
        %v658 = vsel %vm587, %v535, 0
        %v661 = vsel %vm587, %v536, 0
        %v664 = vsel %vm587, %v537, 0
        %v667 = vsel %vm587, %v538, 0
        %v670 = vsel %vm587, %v539, 0
        %v673 = vsel %vm587, %v540, 0
        %v676 = vsel %vm587, %v541, 0
        %v679 = vsel %vm587, %v542, 0
        %v682 = vsel %vm587, %v543, 0
        %v685 = vsel %vm587, %v544, 0
        %v688 = vsel %vm587, %v545, 0
        %v691 = vsel %vm587, %v546, 0
        %v694 = vsel %vm587, %v547, 0
        %v697 = vsel %vm587, %v548, 0
        %v700 = vsel %vm587, %v549, 0
        %v703 = vsel %vm587, %v550, 0
        %v706 = vsel %vm587, %v551, 0
        %v709 = vsel %vm587, %v552, 0
        %v712 = vsel %vm587, %v553, 0
        %v715 = vsel %vm587, %v554, 0
        %v718 = vsel %vm587, %v555, 0
        %v721 = vsel %vm587, %v556, 0
        %v724 = vsel %vm587, %v557, 0
        %v727 = vsel %vm587, %v558, 0
        %v730 = vsel %vm587, %v559, 0
        %v733 = vsel %vm587, %v560, 0
        %v736 = vsel %vm587, %v561, 0
        %v739 = vsel %vm587, %v562, 0
        %v742 = vsel %vm587, %v563, 0
        %v745 = vsel %vm587, %v564, 0
        %v748 = vsel %vm587, %v565, 0
        %v751 = vsel %vm587, %v566, 0
        %v754 = vsel %vm587, %v567, 0
        %v757 = vsel %vm587, %v568, 0
        %v760 = vsel %vm587, %v569, 0
        %v763 = vsel %vm587, %v570, 0
        %v766 = vsel %vm587, %v571, 0
        %v769 = vsel %vm587, %v572, 0
        %v772 = vsel %vm587, %v573, 0
        %v775 = vsel %vm587, %v574, 0
        %v778 = vsel %vm587, %v575, 0
        %780 = vmatprep.subr.mxu0 0.0
        %781 = vmatpush1.msra.mxu0 %v576
        %782 = vmatprep.subr.mxu0 0.0
        %783 = vmatpush1.msra.mxu0 %v577
        %784 = vmatprep.subr.mxu0 0.0
        %785 = vmatpush1.msra.mxu0 %v578
        %786 = vmatprep.subr.mxu0 0.0
        %787 = vmatpush1.msra.mxu0 %v579
        %788 = vmatprep.subr.mxu0 0.0
        %789 = vmatpush1.msra.mxu0 0.0
        %790 = vmatprep.subr.mxu0 0.0
        %791 = vmatpush1.msra.mxu0 0.0
        %792 = vmatprep.subr.mxu0 0.0
        %793 = vmatpush1.msra.mxu0 0.0
        %794 = vmatprep.subr.mxu0 0.0
        %795 = vmatpush1.msra.mxu0 0.0
        %796 = vmatprep.subr.mxu0 0.0
        %797 = vmatpush1.msra.mxu0 0.0
        %798 = vmatprep.subr.mxu0 0.0
        %799 = vmatpush1.msra.mxu0 0.0
        %800 = vmatprep.subr.mxu0 0.0
        %801 = vmatpush1.msra.mxu0 0.0
        %802 = vmatprep.subr.mxu0 0.0
        %803 = vmatpush1.msra.mxu0 0.0
        %804 = vmatprep.subr.mxu0 0.0
        %805 = vmatpush1.msra.mxu0 0.0
        %806 = vmatprep.subr.mxu0 0.0
        %807 = vmatpush1.msra.mxu0 0.0
        %808 = vmatprep.subr.mxu0 0.0
        %809 = vmatpush1.msra.mxu0 0.0
        %810 = vmatprep.subr.mxu0 0.0
        %811 = vmatpush1.msra.mxu0 0.0
        %812 = vmatprep.subr.mxu0 0.0
        %813 = vmatpush1.msra.mxu0 0.0
        %814 = vmatprep.subr.mxu0 0.0
        %815 = vmatpush1.msra.mxu0 0.0
        %816 = vmatprep.subr.mxu0 0.0
        %817 = vmatpush1.msra.mxu0 0.0
        %818 = vmatprep.subr.mxu0 0.0
        %819 = vmatpush1.msra.mxu0 0.0
        %820 = vmatprep.subr.mxu0 0.0
        %821 = vmatpush1.msra.mxu0 0.0
        %822 = vmatprep.subr.mxu0 0.0
        %823 = vmatpush1.msra.mxu0 0.0
        %824 = vmatprep.subr.mxu0 0.0
        %825 = vmatpush1.msra.mxu0 0.0
        %826 = vmatprep.subr.mxu0 0.0
        %827 = vmatpush1.msra.mxu0 0.0
        %828 = vmatprep.subr.mxu0 0.0
        %829 = vmatpush1.msra.mxu0 0.0
        %830 = vmatprep.subr.mxu0 0.0
        %831 = vmatpush1.msra.mxu0 0.0
        %832 = vmatprep.subr.mxu0 0.0
        %833 = vmatpush1.msra.mxu0 0.0
        %834 = vmatprep.subr.mxu0 0.0
        %835 = vmatpush1.msra.mxu0 0.0
        %836 = vmatprep.subr.mxu0 0.0
        %837 = vmatpush1.msra.mxu0 0.0
        %838 = vmatprep.subr.mxu0 0.0
        %839 = vmatpush1.msra.mxu0 0.0
        %840 = vmatprep.subr.mxu0 0.0
        %841 = vmatpush1.msra.mxu0 0.0
        %842 = vmatprep.subr.mxu0 0.0
        %843 = vmatpush1.msra.mxu0 0.0
        %844 = vmatprep.mubr.f32.mxu0 0.0
        %845 = vmatmul.mubr.f32.gmra.mrb[0].mxu0 %v589
        %v846 = vpop.f32.mrb[0].mxu0
        %v847 = vadd.f32 %v585, %v846
        %v848 = vpop.f32.mrb[0].mxu0
        %849 = vmatprep.mubr.f32.mxu0 0.0
        %850 = vmatmul.mubr.f32.gmra.mrb[0].mxu0 %v592
        %v851 = vpop.f32.mrb[0].mxu0
        %v852 = vadd.f32 %v585, %v851
        %v853 = vpop.f32.mrb[0].mxu0
        %854 = vmatprep.mubr.f32.mxu0 0.0
        %855 = vmatmul.mubr.f32.gmra.mrb[0].mxu0 %v595
        %v856 = vpop.f32.mrb[0].mxu0
        %v857 = vadd.f32 %v585, %v856
        %v858 = vpop.f32.mrb[0].mxu0
        %859 = vmatprep.mubr.f32.mxu0 0.0
        %860 = vmatmul.mubr.f32.gmra.mrb[0].mxu0 %v598
        %v861 = vpop.f32.mrb[0].mxu0
        %v862 = vadd.f32 %v585, %v861
        %v863 = vpop.f32.mrb[0].mxu0
        %864 = vmatprep.mubr.f32.mxu0 0.0
        %865 = vmatmul.mubr.f32.gmra.mrb[0].mxu0 %v601
        %v866 = vpop.f32.mrb[0].mxu0
        %v867 = vadd.f32 %v585, %v866
        %v868 = vpop.f32.mrb[0].mxu0
        %869 = vmatprep.mubr.f32.mxu0 0.0
        %870 = vmatmul.mubr.f32.gmra.mrb[0].mxu0 %v604
        %v871 = vpop.f32.mrb[0].mxu0
        %v872 = vadd.f32 %v585, %v871
        %v873 = vpop.f32.mrb[0].mxu0
        %874 = vmatprep.mubr.f32.mxu0 0.0
        %875 = vmatmul.mubr.f32.gmra.mrb[0].mxu0 %v607
        %v876 = vpop.f32.mrb[0].mxu0
        %v877 = vadd.f32 %v585, %v876
        %v878 = vpop.f32.mrb[0].mxu0
        %879 = vmatprep.mubr.f32.mxu0 0.0
        %880 = vmatmul.mubr.f32.gmra.mrb[0].mxu0 %v610
        %v881 = vpop.f32.mrb[0].mxu0
        %v882 = vadd.f32 %v585, %v881
        %v883 = vpop.f32.mrb[0].mxu0
        %884 = vmatprep.mubr.f32.mxu0 0.0
        %885 = vmatmul.mubr.f32.gmra.mrb[0].mxu0 %v613
        %v886 = vpop.f32.mrb[0].mxu0
        %v887 = vadd.f32 %v585, %v886
        %v888 = vpop.f32.mrb[0].mxu0
        %889 = vmatprep.mubr.f32.mxu0 0.0
        %890 = vmatmul.mubr.f32.gmra.mrb[0].mxu0 %v616
        %v891 = vpop.f32.mrb[0].mxu0
        %v892 = vadd.f32 %v585, %v891
        %v893 = vpop.f32.mrb[0].mxu0
        %894 = vmatprep.mubr.f32.mxu0 0.0
        %895 = vmatmul.mubr.f32.gmra.mrb[0].mxu0 %v619
        %v896 = vpop.f32.mrb[0].mxu0
        %v897 = vadd.f32 %v585, %v896
        %v898 = vpop.f32.mrb[0].mxu0
        %899 = vmatprep.mubr.f32.mxu0 0.0
        %900 = vmatmul.mubr.f32.gmra.mrb[0].mxu0 %v622
        %v901 = vpop.f32.mrb[0].mxu0
        %v902 = vadd.f32 %v585, %v901
        %v903 = vpop.f32.mrb[0].mxu0
        %904 = vmatprep.mubr.f32.mxu0 0.0
        %905 = vmatmul.mubr.f32.gmra.mrb[0].mxu0 %v625
        %v906 = vpop.f32.mrb[0].mxu0
        %v907 = vadd.f32 %v585, %v906
        %v908 = vpop.f32.mrb[0].mxu0
        %909 = vmatprep.mubr.f32.mxu0 0.0
        %910 = vmatmul.mubr.f32.gmra.mrb[0].mxu0 %v628
        %v911 = vpop.f32.mrb[0].mxu0
        %v912 = vadd.f32 %v585, %v911
        %v913 = vpop.f32.mrb[0].mxu0
        %914 = vmatprep.mubr.f32.mxu0 0.0
        %915 = vmatmul.mubr.f32.gmra.mrb[0].mxu0 %v631
        %v916 = vpop.f32.mrb[0].mxu0
        %v917 = vadd.f32 %v585, %v916
        %v918 = vpop.f32.mrb[0].mxu0
        %919 = vmatprep.mubr.f32.mxu0 0.0
        %920 = vmatmul.mubr.f32.gmra.mrb[0].mxu0 %v634
        %v921 = vpop.f32.mrb[0].mxu0
        %v922 = vadd.f32 %v585, %v921
        %v923 = vpop.f32.mrb[0].mxu0
        %924 = vmatprep.mubr.f32.mxu0 0.0
        %925 = vmatmul.mubr.f32.gmra.mrb[0].mxu0 %v637
        %v926 = vpop.f32.mrb[0].mxu0
        %v927 = vadd.f32 %v585, %v926
        %v928 = vpop.f32.mrb[0].mxu0
        %929 = vmatprep.mubr.f32.mxu0 0.0
        %930 = vmatmul.mubr.f32.gmra.mrb[0].mxu0 %v640
        %v931 = vpop.f32.mrb[0].mxu0
        %v932 = vadd.f32 %v585, %v931
        %v933 = vpop.f32.mrb[0].mxu0
        %934 = vmatprep.mubr.f32.mxu0 0.0
        %935 = vmatmul.mubr.f32.gmra.mrb[0].mxu0 %v643
        %v936 = vpop.f32.mrb[0].mxu0
        %v937 = vadd.f32 %v585, %v936
        %v938 = vpop.f32.mrb[0].mxu0
        %939 = vmatprep.mubr.f32.mxu0 0.0
        %940 = vmatmul.mubr.f32.gmra.mrb[0].mxu0 %v646
        %v941 = vpop.f32.mrb[0].mxu0
        %v942 = vadd.f32 %v585, %v941
        %v943 = vpop.f32.mrb[0].mxu0
        %944 = vmatprep.mubr.f32.mxu0 0.0
        %945 = vmatmul.mubr.f32.gmra.mrb[0].mxu0 %v649
        %v946 = vpop.f32.mrb[0].mxu0
        %v947 = vadd.f32 %v585, %v946
        %v948 = vpop.f32.mrb[0].mxu0
        %949 = vmatprep.mubr.f32.mxu0 0.0
        %950 = vmatmul.mubr.f32.gmra.mrb[0].mxu0 %v652
        %v951 = vpop.f32.mrb[0].mxu0
        %v952 = vadd.f32 %v585, %v951
        %v953 = vpop.f32.mrb[0].mxu0
        %954 = vmatprep.mubr.f32.mxu0 0.0
        %955 = vmatmul.mubr.f32.gmra.mrb[0].mxu0 %v655
        %v956 = vpop.f32.mrb[0].mxu0
        %v957 = vadd.f32 %v585, %v956
        %v958 = vpop.f32.mrb[0].mxu0
        %959 = vmatprep.mubr.f32.mxu0 0.0
        %960 = vmatmul.mubr.f32.gmra.mrb[0].mxu0 %v658
        %v961 = vpop.f32.mrb[0].mxu0
        %v962 = vadd.f32 %v585, %v961
        %v963 = vpop.f32.mrb[0].mxu0
        %964 = vmatprep.mubr.f32.mxu0 0.0
        %965 = vmatmul.mubr.f32.gmra.mrb[0].mxu0 %v661
        %v966 = vpop.f32.mrb[0].mxu0
        %v967 = vadd.f32 %v585, %v966
        %v968 = vpop.f32.mrb[0].mxu0
        %969 = vmatprep.mubr.f32.mxu0 0.0
        %970 = vmatmul.mubr.f32.gmra.mrb[0].mxu0 %v664
        %v971 = vpop.f32.mrb[0].mxu0
        %v972 = vadd.f32 %v585, %v971
        %v973 = vpop.f32.mrb[0].mxu0
        %974 = vmatprep.mubr.f32.mxu0 0.0
        %975 = vmatmul.mubr.f32.gmra.mrb[0].mxu0 %v667
        %v976 = vpop.f32.mrb[0].mxu0
        %v977 = vadd.f32 %v585, %v976
        %v978 = vpop.f32.mrb[0].mxu0
        %979 = vmatprep.mubr.f32.mxu0 0.0
        %980 = vmatmul.mubr.f32.gmra.mrb[0].mxu0 %v670
        %v981 = vpop.f32.mrb[0].mxu0
        %v982 = vadd.f32 %v585, %v981
        %v983 = vpop.f32.mrb[0].mxu0
        %984 = vmatprep.mubr.f32.mxu0 0.0
        %985 = vmatmul.mubr.f32.gmra.mrb[0].mxu0 %v673
        %v986 = vpop.f32.mrb[0].mxu0
        %v987 = vadd.f32 %v585, %v986
        %v988 = vpop.f32.mrb[0].mxu0
        %989 = vmatprep.mubr.f32.mxu0 0.0
        %990 = vmatmul.mubr.f32.gmra.mrb[0].mxu0 %v676
        %v991 = vpop.f32.mrb[0].mxu0
        %v992 = vadd.f32 %v585, %v991
        %v993 = vpop.f32.mrb[0].mxu0
        %994 = vmatprep.mubr.f32.mxu0 0.0
        %995 = vmatmul.mubr.f32.gmra.mrb[0].mxu0 %v679
        %v996 = vpop.f32.mrb[0].mxu0
        %v997 = vadd.f32 %v585, %v996
        %v998 = vpop.f32.mrb[0].mxu0
        %999 = vmatprep.mubr.f32.mxu0 0.0
        %1000 = vmatmul.mubr.f32.gmra.mrb[0].mxu0 %v682
        %v1001 = vpop.f32.mrb[0].mxu0
        %v1002 = vadd.f32 %v585, %v1001
        %v1003 = vpop.f32.mrb[0].mxu0
        %1004 = vmatprep.mubr.f32.mxu0 0.0
        %1005 = vmatmul.mubr.f32.gmra.mrb[0].mxu0 %v685
        %v1006 = vpop.f32.mrb[0].mxu0
        %v1007 = vadd.f32 %v585, %v1006
        %v1008 = vpop.f32.mrb[0].mxu0
        %1009 = vmatprep.mubr.f32.mxu0 0.0
        %1010 = vmatmul.mubr.f32.gmra.mrb[0].mxu0 %v688
        %v1011 = vpop.f32.mrb[0].mxu0
        %v1012 = vadd.f32 %v585, %v1011
        %v1013 = vpop.f32.mrb[0].mxu0
        %1014 = vmatprep.mubr.f32.mxu0 0.0
        %1015 = vmatmul.mubr.f32.gmra.mrb[0].mxu0 %v691
        %v1016 = vpop.f32.mrb[0].mxu0
        %v1017 = vadd.f32 %v585, %v1016
        %v1018 = vpop.f32.mrb[0].mxu0
        %1019 = vmatprep.mubr.f32.mxu0 0.0
        %1020 = vmatmul.mubr.f32.gmra.mrb[0].mxu0 %v694
        %v1021 = vpop.f32.mrb[0].mxu0
        %v1022 = vadd.f32 %v585, %v1021
        %v1023 = vpop.f32.mrb[0].mxu0
        %1024 = vmatprep.mubr.f32.mxu0 0.0
        %1025 = vmatmul.mubr.f32.gmra.mrb[0].mxu0 %v697
        %v1026 = vpop.f32.mrb[0].mxu0
        %v1027 = vadd.f32 %v585, %v1026
        %v1028 = vpop.f32.mrb[0].mxu0
        %1029 = vmatprep.mubr.f32.mxu0 0.0
        %1030 = vmatmul.mubr.f32.gmra.mrb[0].mxu0 %v700
        %v1031 = vpop.f32.mrb[0].mxu0
        %v1032 = vadd.f32 %v585, %v1031
        %v1033 = vpop.f32.mrb[0].mxu0
        %1034 = vmatprep.mubr.f32.mxu0 0.0
        %1035 = vmatmul.mubr.f32.gmra.mrb[0].mxu0 %v703
        %v1036 = vpop.f32.mrb[0].mxu0
        %v1037 = vadd.f32 %v585, %v1036
        %v1038 = vpop.f32.mrb[0].mxu0
        %1039 = vmatprep.mubr.f32.mxu0 0.0
        %1040 = vmatmul.mubr.f32.gmra.mrb[0].mxu0 %v706
        %v1041 = vpop.f32.mrb[0].mxu0
        %v1042 = vadd.f32 %v585, %v1041
        %v1043 = vpop.f32.mrb[0].mxu0
        %1044 = vmatprep.mubr.f32.mxu0 0.0
        %1045 = vmatmul.mubr.f32.gmra.mrb[0].mxu0 %v709
        %v1046 = vpop.f32.mrb[0].mxu0
        %v1047 = vadd.f32 %v585, %v1046
        %v1048 = vpop.f32.mrb[0].mxu0
        %1049 = vmatprep.mubr.f32.mxu0 0.0
        %1050 = vmatmul.mubr.f32.gmra.mrb[0].mxu0 %v712
        %v1051 = vpop.f32.mrb[0].mxu0
        %v1052 = vadd.f32 %v585, %v1051
        %v1053 = vpop.f32.mrb[0].mxu0
        %1054 = vmatprep.mubr.f32.mxu0 0.0
        %1055 = vmatmul.mubr.f32.gmra.mrb[0].mxu0 %v715
        %v1056 = vpop.f32.mrb[0].mxu0
        %v1057 = vadd.f32 %v585, %v1056
        %v1058 = vpop.f32.mrb[0].mxu0
        %1059 = vmatprep.mubr.f32.mxu0 0.0
        %1060 = vmatmul.mubr.f32.gmra.mrb[0].mxu0 %v718
        %v1061 = vpop.f32.mrb[0].mxu0
        %v1062 = vadd.f32 %v585, %v1061
        %v1063 = vpop.f32.mrb[0].mxu0
        %1064 = vmatprep.mubr.f32.mxu0 0.0
        %1065 = vmatmul.mubr.f32.gmra.mrb[0].mxu0 %v721
        %v1066 = vpop.f32.mrb[0].mxu0
        %v1067 = vadd.f32 %v585, %v1066
        %v1068 = vpop.f32.mrb[0].mxu0
        %1069 = vmatprep.mubr.f32.mxu0 0.0
        %1070 = vmatmul.mubr.f32.gmra.mrb[0].mxu0 %v724
        %v1071 = vpop.f32.mrb[0].mxu0
        %v1072 = vadd.f32 %v585, %v1071
        %v1073 = vpop.f32.mrb[0].mxu0
        %1074 = vmatprep.mubr.f32.mxu0 0.0
        %1075 = vmatmul.mubr.f32.gmra.mrb[0].mxu0 %v727
        %v1076 = vpop.f32.mrb[0].mxu0
        %v1077 = vadd.f32 %v585, %v1076
        %v1078 = vpop.f32.mrb[0].mxu0
        %1079 = vmatprep.mubr.f32.mxu0 0.0
        %1080 = vmatmul.mubr.f32.gmra.mrb[0].mxu0 %v730
        %v1081 = vpop.f32.mrb[0].mxu0
        %v1082 = vadd.f32 %v585, %v1081
        %v1083 = vpop.f32.mrb[0].mxu0
        %1084 = vmatprep.mubr.f32.mxu0 0.0
        %1085 = vmatmul.mubr.f32.gmra.mrb[0].mxu0 %v733
        %v1086 = vpop.f32.mrb[0].mxu0
        %v1087 = vadd.f32 %v585, %v1086
        %v1088 = vpop.f32.mrb[0].mxu0
        %1089 = vmatprep.mubr.f32.mxu0 0.0
        %1090 = vmatmul.mubr.f32.gmra.mrb[0].mxu0 %v736
        %v1091 = vpop.f32.mrb[0].mxu0
        %v1092 = vadd.f32 %v585, %v1091
        %v1093 = vpop.f32.mrb[0].mxu0
        %1094 = vmatprep.mubr.f32.mxu0 0.0
        %1095 = vmatmul.mubr.f32.gmra.mrb[0].mxu0 %v739
        %v1096 = vpop.f32.mrb[0].mxu0
        %v1097 = vadd.f32 %v585, %v1096
        %v1098 = vpop.f32.mrb[0].mxu0
        %1099 = vmatprep.mubr.f32.mxu0 0.0
        %1100 = vmatmul.mubr.f32.gmra.mrb[0].mxu0 %v742
        %v1101 = vpop.f32.mrb[0].mxu0
        %v1102 = vadd.f32 %v585, %v1101
        %v1103 = vpop.f32.mrb[0].mxu0
        %1104 = vmatprep.mubr.f32.mxu0 0.0
        %1105 = vmatmul.mubr.f32.gmra.mrb[0].mxu0 %v745
        %v1106 = vpop.f32.mrb[0].mxu0
        %v1107 = vadd.f32 %v585, %v1106
        %v1108 = vpop.f32.mrb[0].mxu0
        %1109 = vmatprep.mubr.f32.mxu0 0.0
        %1110 = vmatmul.mubr.f32.gmra.mrb[0].mxu0 %v748
        %v1111 = vpop.f32.mrb[0].mxu0
        %v1112 = vadd.f32 %v585, %v1111
        %v1113 = vpop.f32.mrb[0].mxu0
        %1114 = vmatprep.mubr.f32.mxu0 0.0
        %1115 = vmatmul.mubr.f32.gmra.mrb[0].mxu0 %v751
        %v1116 = vpop.f32.mrb[0].mxu0
        %v1117 = vadd.f32 %v585, %v1116
        %v1118 = vpop.f32.mrb[0].mxu0
        %1119 = vmatprep.mubr.f32.mxu0 0.0
        %1120 = vmatmul.mubr.f32.gmra.mrb[0].mxu0 %v754
        %v1121 = vpop.f32.mrb[0].mxu0
        %v1122 = vadd.f32 %v585, %v1121
        %v1123 = vpop.f32.mrb[0].mxu0
        %1124 = vmatprep.mubr.f32.mxu0 0.0
        %1125 = vmatmul.mubr.f32.gmra.mrb[0].mxu0 %v757
        %v1126 = vpop.f32.mrb[0].mxu0
        %v1127 = vadd.f32 %v585, %v1126
        %v1128 = vpop.f32.mrb[0].mxu0
        %1129 = vmatprep.mubr.f32.mxu0 0.0
        %1130 = vmatmul.mubr.f32.gmra.mrb[0].mxu0 %v760
        %v1131 = vpop.f32.mrb[0].mxu0
        %v1132 = vadd.f32 %v585, %v1131
        %v1133 = vpop.f32.mrb[0].mxu0
        %1134 = vmatprep.mubr.f32.mxu0 0.0
        %1135 = vmatmul.mubr.f32.gmra.mrb[0].mxu0 %v763
        %v1136 = vpop.f32.mrb[0].mxu0
        %v1137 = vadd.f32 %v585, %v1136
        %v1138 = vpop.f32.mrb[0].mxu0
        %1139 = vmatprep.mubr.f32.mxu0 0.0
        %1140 = vmatmul.mubr.f32.gmra.mrb[0].mxu0 %v766
        %v1141 = vpop.f32.mrb[0].mxu0
        %v1142 = vadd.f32 %v585, %v1141
        %v1143 = vpop.f32.mrb[0].mxu0
        %1144 = vmatprep.mubr.f32.mxu0 0.0
        %1145 = vmatmul.mubr.f32.gmra.mrb[0].mxu0 %v769
        %v1146 = vpop.f32.mrb[0].mxu0
        %v1147 = vadd.f32 %v585, %v1146
        %v1148 = vpop.f32.mrb[0].mxu0
        %1149 = vmatprep.mubr.f32.mxu0 0.0
        %1150 = vmatmul.mubr.f32.gmra.mrb[0].mxu0 %v772
        %v1151 = vpop.f32.mrb[0].mxu0
        %v1152 = vadd.f32 %v585, %v1151
        %v1153 = vpop.f32.mrb[0].mxu0
        %1154 = vmatprep.mubr.f32.mxu0 0.0
        %1155 = vmatmul.mubr.f32.gmra.mrb[0].mxu0 %v775
        %v1156 = vpop.f32.mrb[0].mxu0
        %v1157 = vadd.f32 %v585, %v1156
        %v1158 = vpop.f32.mrb[0].mxu0
        %1159 = vmatprep.mubr.f32.mxu0 0.0
        %1160 = vmatmul.mubr.f32.gmra.mrb[0].mxu0 %v778
        %v1161 = vpop.f32.mrb[0].mxu0
        %v1162 = vadd.f32 %v585, %v1161
        %v1163 = vpop.f32.mrb[0].mxu0
        %1164 = vdwg.mxu0
        %v1165 = vld [vmem:[%s499] sm:$0x1]
        %vm1166 = vcmask 64512
        %v1167 = vsel %vm1166, %v847, -inf
        %1168 = vmax.xlane.f32.xlu0 %v1167
        %v1169 = vpop.xlane.xlu0 %1168
        %v1170 = vsel %vm1166, %v852, -inf
        %1171 = vmax.xlane.f32.xlu0 %v1170
        %v1172 = vpop.xlane.xlu0 %1171
        %v1173 = vsel %vm1166, %v857, -inf
        %1174 = vmax.xlane.f32.xlu0 %v1173
        %v1175 = vpop.xlane.xlu0 %1174
        %v1176 = vsel %vm1166, %v862, -inf
        %1177 = vmax.xlane.f32.xlu0 %v1176
        %v1178 = vpop.xlane.xlu0 %1177
        %v1179 = vsel %vm1166, %v867, -inf
        %1180 = vmax.xlane.f32.xlu0 %v1179
        %v1181 = vpop.xlane.xlu0 %1180
        %v1182 = vsel %vm1166, %v872, -inf
        %1183 = vmax.xlane.f32.xlu0 %v1182
        %v1184 = vpop.xlane.xlu0 %1183
        %v1185 = vsel %vm1166, %v877, -inf
        %1186 = vmax.xlane.f32.xlu0 %v1185
        %v1187 = vpop.xlane.xlu0 %1186
        %v1188 = vsel %vm1166, %v882, -inf
        %1189 = vmax.xlane.f32.xlu0 %v1188
        %v1190 = vpop.xlane.xlu0 %1189
        %v1191 = vsel %vm1166, %v887, -inf
        %1192 = vmax.xlane.f32.xlu0 %v1191
        %v1193 = vpop.xlane.xlu0 %1192
        %v1194 = vsel %vm1166, %v892, -inf
        %1195 = vmax.xlane.f32.xlu0 %v1194
        %v1196 = vpop.xlane.xlu0 %1195
        %v1197 = vsel %vm1166, %v897, -inf
        %1198 = vmax.xlane.f32.xlu0 %v1197
        %v1199 = vpop.xlane.xlu0 %1198
        %v1200 = vsel %vm1166, %v902, -inf
        %1201 = vmax.xlane.f32.xlu0 %v1200
        %v1202 = vpop.xlane.xlu0 %1201
        %v1203 = vsel %vm1166, %v907, -inf
        %1204 = vmax.xlane.f32.xlu0 %v1203
        %v1205 = vpop.xlane.xlu0 %1204
        %v1206 = vsel %vm1166, %v912, -inf
        %1207 = vmax.xlane.f32.xlu0 %v1206
        %v1208 = vpop.xlane.xlu0 %1207
        %v1209 = vsel %vm1166, %v917, -inf
        %1210 = vmax.xlane.f32.xlu0 %v1209
        %v1211 = vpop.xlane.xlu0 %1210
        %v1212 = vsel %vm1166, %v922, -inf
        %1213 = vmax.xlane.f32.xlu0 %v1212
        %v1214 = vpop.xlane.xlu0 %1213
        %v1215 = vsel %vm1166, %v927, -inf
        %1216 = vmax.xlane.f32.xlu0 %v1215
        %v1217 = vpop.xlane.xlu0 %1216
        %v1218 = vsel %vm1166, %v932, -inf
        %1219 = vmax.xlane.f32.xlu0 %v1218
        %v1220 = vpop.xlane.xlu0 %1219
        %v1221 = vsel %vm1166, %v937, -inf
        %1222 = vmax.xlane.f32.xlu0 %v1221
        %v1223 = vpop.xlane.xlu0 %1222
        %v1224 = vsel %vm1166, %v942, -inf
        %1225 = vmax.xlane.f32.xlu0 %v1224
        %v1226 = vpop.xlane.xlu0 %1225
        %v1227 = vsel %vm1166, %v947, -inf
        %1228 = vmax.xlane.f32.xlu0 %v1227
        %v1229 = vpop.xlane.xlu0 %1228
        %v1230 = vsel %vm1166, %v952, -inf
        %1231 = vmax.xlane.f32.xlu0 %v1230
        %v1232 = vpop.xlane.xlu0 %1231
        %v1233 = vsel %vm1166, %v957, -inf
        %1234 = vmax.xlane.f32.xlu0 %v1233
        %v1235 = vpop.xlane.xlu0 %1234
        %v1236 = vsel %vm1166, %v962, -inf
        %1237 = vmax.xlane.f32.xlu0 %v1236
        %v1238 = vpop.xlane.xlu0 %1237
        %v1239 = vsel %vm1166, %v967, -inf
        %1240 = vmax.xlane.f32.xlu0 %v1239
        %v1241 = vpop.xlane.xlu0 %1240
        %v1242 = vsel %vm1166, %v972, -inf
        %1243 = vmax.xlane.f32.xlu0 %v1242
        %v1244 = vpop.xlane.xlu0 %1243
        %v1245 = vsel %vm1166, %v977, -inf
        %1246 = vmax.xlane.f32.xlu0 %v1245
        %v1247 = vpop.xlane.xlu0 %1246
        %v1248 = vsel %vm1166, %v982, -inf
        %1249 = vmax.xlane.f32.xlu0 %v1248
        %v1250 = vpop.xlane.xlu0 %1249
        %v1251 = vsel %vm1166, %v987, -inf
        %1252 = vmax.xlane.f32.xlu0 %v1251
        %v1253 = vpop.xlane.xlu0 %1252
        %v1254 = vsel %vm1166, %v992, -inf
        %1255 = vmax.xlane.f32.xlu0 %v1254
        %v1256 = vpop.xlane.xlu0 %1255
        %v1257 = vsel %vm1166, %v997, -inf
        %1258 = vmax.xlane.f32.xlu0 %v1257
        %v1259 = vpop.xlane.xlu0 %1258
        %v1260 = vsel %vm1166, %v1002, -inf
        %1261 = vmax.xlane.f32.xlu0 %v1260
        %v1262 = vpop.xlane.xlu0 %1261
        %v1263 = vsel %vm1166, %v1007, -inf
        %1264 = vmax.xlane.f32.xlu0 %v1263
        %v1265 = vpop.xlane.xlu0 %1264
        %v1266 = vsel %vm1166, %v1012, -inf
        %1267 = vmax.xlane.f32.xlu0 %v1266
        %v1268 = vpop.xlane.xlu0 %1267
        %v1269 = vsel %vm1166, %v1017, -inf
        %1270 = vmax.xlane.f32.xlu0 %v1269
        %v1271 = vpop.xlane.xlu0 %1270
        %v1272 = vsel %vm1166, %v1022, -inf
        %1273 = vmax.xlane.f32.xlu0 %v1272
        %v1274 = vpop.xlane.xlu0 %1273
        %v1275 = vsel %vm1166, %v1027, -inf
        %1276 = vmax.xlane.f32.xlu0 %v1275
        %v1277 = vpop.xlane.xlu0 %1276
        %v1278 = vsel %vm1166, %v1032, -inf
        %1279 = vmax.xlane.f32.xlu0 %v1278
        %v1280 = vpop.xlane.xlu0 %1279
        %v1281 = vsel %vm1166, %v1037, -inf
        %1282 = vmax.xlane.f32.xlu0 %v1281
        %v1283 = vpop.xlane.xlu0 %1282
        %v1284 = vsel %vm1166, %v1042, -inf
        %1285 = vmax.xlane.f32.xlu0 %v1284
        %v1286 = vpop.xlane.xlu0 %1285
        %v1287 = vsel %vm1166, %v1047, -inf
        %1288 = vmax.xlane.f32.xlu0 %v1287
        %v1289 = vpop.xlane.xlu0 %1288
        %v1290 = vsel %vm1166, %v1052, -inf
        %1291 = vmax.xlane.f32.xlu0 %v1290
        %v1292 = vpop.xlane.xlu0 %1291
        %v1293 = vsel %vm1166, %v1057, -inf
        %1294 = vmax.xlane.f32.xlu0 %v1293
        %v1295 = vpop.xlane.xlu0 %1294
        %v1296 = vsel %vm1166, %v1062, -inf
        %1297 = vmax.xlane.f32.xlu0 %v1296
        %v1298 = vpop.xlane.xlu0 %1297
        %v1299 = vsel %vm1166, %v1067, -inf
        %1300 = vmax.xlane.f32.xlu0 %v1299
        %v1301 = vpop.xlane.xlu0 %1300
        %v1302 = vsel %vm1166, %v1072, -inf
        %1303 = vmax.xlane.f32.xlu0 %v1302
        %v1304 = vpop.xlane.xlu0 %1303
        %v1305 = vsel %vm1166, %v1077, -inf
        %1306 = vmax.xlane.f32.xlu0 %v1305
        %v1307 = vpop.xlane.xlu0 %1306
        %v1308 = vsel %vm1166, %v1082, -inf
        %1309 = vmax.xlane.f32.xlu0 %v1308
        %v1310 = vpop.xlane.xlu0 %1309
        %v1311 = vsel %vm1166, %v1087, -inf
        %1312 = vmax.xlane.f32.xlu0 %v1311
        %v1313 = vpop.xlane.xlu0 %1312
        %v1314 = vsel %vm1166, %v1092, -inf
        %1315 = vmax.xlane.f32.xlu0 %v1314
        %v1316 = vpop.xlane.xlu0 %1315
        %v1317 = vsel %vm1166, %v1097, -inf
        %1318 = vmax.xlane.f32.xlu0 %v1317
        %v1319 = vpop.xlane.xlu0 %1318
        %v1320 = vsel %vm1166, %v1102, -inf
        %1321 = vmax.xlane.f32.xlu0 %v1320
        %v1322 = vpop.xlane.xlu0 %1321
        %v1323 = vsel %vm1166, %v1107, -inf
        %1324 = vmax.xlane.f32.xlu0 %v1323
        %v1325 = vpop.xlane.xlu0 %1324
        %v1326 = vsel %vm1166, %v1112, -inf
        %1327 = vmax.xlane.f32.xlu0 %v1326
        %v1328 = vpop.xlane.xlu0 %1327
        %v1329 = vsel %vm1166, %v1117, -inf
        %1330 = vmax.xlane.f32.xlu0 %v1329
        %v1331 = vpop.xlane.xlu0 %1330
        %v1332 = vsel %vm1166, %v1122, -inf
        %1333 = vmax.xlane.f32.xlu0 %v1332
        %v1334 = vpop.xlane.xlu0 %1333
        %v1335 = vsel %vm1166, %v1127, -inf
        %1336 = vmax.xlane.f32.xlu0 %v1335
        %v1337 = vpop.xlane.xlu0 %1336
        %v1338 = vsel %vm1166, %v1132, -inf
        %1339 = vmax.xlane.f32.xlu0 %v1338
        %v1340 = vpop.xlane.xlu0 %1339
        %v1341 = vsel %vm1166, %v1137, -inf
        %1342 = vmax.xlane.f32.xlu0 %v1341
        %v1343 = vpop.xlane.xlu0 %1342
        %v1344 = vsel %vm1166, %v1142, -inf
        %1345 = vmax.xlane.f32.xlu0 %v1344
        %v1346 = vpop.xlane.xlu0 %1345
        %v1347 = vsel %vm1166, %v1147, -inf
        %1348 = vmax.xlane.f32.xlu0 %v1347
        %v1349 = vpop.xlane.xlu0 %1348
        %v1350 = vsel %vm1166, %v1152, -inf
        %1351 = vmax.xlane.f32.xlu0 %v1350
        %v1352 = vpop.xlane.xlu0 %1351
        %v1353 = vsel %vm1166, %v1157, -inf
        %1354 = vmax.xlane.f32.xlu0 %v1353
        %v1355 = vpop.xlane.xlu0 %1354
        %v1356 = vsel %vm1166, %v1162, -inf
        %1357 = vmax.xlane.f32.xlu0 %v1356
        %v1358 = vpop.xlane.xlu0 %1357
        %v1360 = vlaneseq
        %v1361 = vshrl.u32 %v1360, 7
        %v1362 = vsub.s32 0, %v1361
        %v1363 = vrot.slane %v1165, %v1362
        %v1365 = vmax.f32 %v1169, %v1363
        %v1366 = vmax.f32 %v1172, %v1363
        %v1367 = vmax.f32 %v1175, %v1363
        %v1368 = vmax.f32 %v1178, %v1363
        %v1369 = vmax.f32 %v1181, %v1363
        %v1370 = vmax.f32 %v1184, %v1363
        %v1371 = vmax.f32 %v1187, %v1363
        %v1372 = vmax.f32 %v1190, %v1363
        %v1373 = vmax.f32 %v1193, %v1363
        %v1374 = vmax.f32 %v1196, %v1363
        %v1375 = vmax.f32 %v1199, %v1363
        %v1376 = vmax.f32 %v1202, %v1363
        %v1377 = vmax.f32 %v1205, %v1363
        %v1378 = vmax.f32 %v1208, %v1363
        %v1379 = vmax.f32 %v1211, %v1363
        %v1380 = vmax.f32 %v1214, %v1363
        %v1381 = vmax.f32 %v1217, %v1363
        %v1382 = vmax.f32 %v1220, %v1363
        %v1383 = vmax.f32 %v1223, %v1363
        %v1384 = vmax.f32 %v1226, %v1363
        %v1385 = vmax.f32 %v1229, %v1363
        %v1386 = vmax.f32 %v1232, %v1363
        %v1387 = vmax.f32 %v1235, %v1363
        %v1388 = vmax.f32 %v1238, %v1363
        %v1389 = vmax.f32 %v1241, %v1363
        %v1390 = vmax.f32 %v1244, %v1363
        %v1391 = vmax.f32 %v1247, %v1363
        %v1392 = vmax.f32 %v1250, %v1363
        %v1393 = vmax.f32 %v1253, %v1363
        %v1394 = vmax.f32 %v1256, %v1363
        %v1395 = vmax.f32 %v1259, %v1363
        %v1396 = vmax.f32 %v1262, %v1363
        %v1397 = vmax.f32 %v1265, %v1363
        %v1398 = vmax.f32 %v1268, %v1363
        %v1399 = vmax.f32 %v1271, %v1363
        %v1400 = vmax.f32 %v1274, %v1363
        %v1401 = vmax.f32 %v1277, %v1363
        %v1402 = vmax.f32 %v1280, %v1363
        %v1403 = vmax.f32 %v1283, %v1363
        %v1404 = vmax.f32 %v1286, %v1363
        %v1405 = vmax.f32 %v1289, %v1363
        %v1406 = vmax.f32 %v1292, %v1363
        %v1407 = vmax.f32 %v1295, %v1363
        %v1408 = vmax.f32 %v1298, %v1363
        %v1409 = vmax.f32 %v1301, %v1363
        %v1410 = vmax.f32 %v1304, %v1363
        %v1411 = vmax.f32 %v1307, %v1363
        %v1412 = vmax.f32 %v1310, %v1363
        %v1413 = vmax.f32 %v1313, %v1363
        %v1414 = vmax.f32 %v1316, %v1363
        %v1415 = vmax.f32 %v1319, %v1363
        %v1416 = vmax.f32 %v1322, %v1363
        %v1417 = vmax.f32 %v1325, %v1363
        %v1418 = vmax.f32 %v1328, %v1363
        %v1419 = vmax.f32 %v1331, %v1363
        %v1420 = vmax.f32 %v1334, %v1363
        %v1421 = vmax.f32 %v1337, %v1363
        %v1422 = vmax.f32 %v1340, %v1363
        %v1423 = vmax.f32 %v1343, %v1363
        %v1424 = vmax.f32 %v1346, %v1363
        %v1425 = vmax.f32 %v1349, %v1363
        %v1426 = vmax.f32 %v1352, %v1363
        %v1427 = vmax.f32 %v1355, %v1363
        %v1428 = vmax.f32 %v1358, %v1363
        %1430 = vset.pattern.permute.xlu0 0
        %1431 = vperm.xlu0 %1430, %v1365
        %v1432 = vpop.permute.xlu0 %1431
        %1435 = vset.pattern.permute.xlu0 0
        %1436 = vperm.xlu0 %1435, %v1366
        %v1437 = vpop.permute.xlu0 %1436
        %1440 = vset.pattern.permute.xlu0 0
        %1441 = vperm.xlu0 %1440, %v1367
        %v1442 = vpop.permute.xlu0 %1441
        %1445 = vset.pattern.permute.xlu0 0
        %1446 = vperm.xlu0 %1445, %v1368
        %v1447 = vpop.permute.xlu0 %1446
        %1450 = vset.pattern.permute.xlu0 0
        %1451 = vperm.xlu0 %1450, %v1369
        %v1452 = vpop.permute.xlu0 %1451
        %1455 = vset.pattern.permute.xlu0 0
        %1456 = vperm.xlu0 %1455, %v1370
        %v1457 = vpop.permute.xlu0 %1456
        %1460 = vset.pattern.permute.xlu0 0
        %1461 = vperm.xlu0 %1460, %v1371
        %v1462 = vpop.permute.xlu0 %1461
        %1465 = vset.pattern.permute.xlu0 0
        %1466 = vperm.xlu0 %1465, %v1372
        %v1467 = vpop.permute.xlu0 %1466
        %1470 = vset.pattern.permute.xlu0 0
        %1471 = vperm.xlu0 %1470, %v1373
        %v1472 = vpop.permute.xlu0 %1471
        %1475 = vset.pattern.permute.xlu0 0
        %1476 = vperm.xlu0 %1475, %v1374
        %v1477 = vpop.permute.xlu0 %1476
        %1480 = vset.pattern.permute.xlu0 0
        %1481 = vperm.xlu0 %1480, %v1375
        %v1482 = vpop.permute.xlu0 %1481
        %1485 = vset.pattern.permute.xlu0 0
        %1486 = vperm.xlu0 %1485, %v1376
        %v1487 = vpop.permute.xlu0 %1486
        %1490 = vset.pattern.permute.xlu0 0
        %1491 = vperm.xlu0 %1490, %v1377
        %v1492 = vpop.permute.xlu0 %1491
        %1495 = vset.pattern.permute.xlu0 0
        %1496 = vperm.xlu0 %1495, %v1378
        %v1497 = vpop.permute.xlu0 %1496
        %1500 = vset.pattern.permute.xlu0 0
        %1501 = vperm.xlu0 %1500, %v1379
        %v1502 = vpop.permute.xlu0 %1501
        %1505 = vset.pattern.permute.xlu0 0
        %1506 = vperm.xlu0 %1505, %v1380
        %v1507 = vpop.permute.xlu0 %1506
        %1510 = vset.pattern.permute.xlu0 0
        %1511 = vperm.xlu0 %1510, %v1381
        %v1512 = vpop.permute.xlu0 %1511
        %1515 = vset.pattern.permute.xlu0 0
        %1516 = vperm.xlu0 %1515, %v1382
        %v1517 = vpop.permute.xlu0 %1516
        %1520 = vset.pattern.permute.xlu0 0
        %1521 = vperm.xlu0 %1520, %v1383
        %v1522 = vpop.permute.xlu0 %1521
        %1525 = vset.pattern.permute.xlu0 0
        %1526 = vperm.xlu0 %1525, %v1384
        %v1527 = vpop.permute.xlu0 %1526
        %1530 = vset.pattern.permute.xlu0 0
        %1531 = vperm.xlu0 %1530, %v1385
        %v1532 = vpop.permute.xlu0 %1531
        %1535 = vset.pattern.permute.xlu0 0
        %1536 = vperm.xlu0 %1535, %v1386
        %v1537 = vpop.permute.xlu0 %1536
        %1540 = vset.pattern.permute.xlu0 0
        %1541 = vperm.xlu0 %1540, %v1387
        %v1542 = vpop.permute.xlu0 %1541
        %1545 = vset.pattern.permute.xlu0 0
        %1546 = vperm.xlu0 %1545, %v1388
        %v1547 = vpop.permute.xlu0 %1546
        %1550 = vset.pattern.permute.xlu0 0
        %1551 = vperm.xlu0 %1550, %v1389
        %v1552 = vpop.permute.xlu0 %1551
        %1555 = vset.pattern.permute.xlu0 0
        %1556 = vperm.xlu0 %1555, %v1390
        %v1557 = vpop.permute.xlu0 %1556
        %1560 = vset.pattern.permute.xlu0 0
        %1561 = vperm.xlu0 %1560, %v1391
        %v1562 = vpop.permute.xlu0 %1561
        %1565 = vset.pattern.permute.xlu0 0
        %1566 = vperm.xlu0 %1565, %v1392
        %v1567 = vpop.permute.xlu0 %1566
        %1570 = vset.pattern.permute.xlu0 0
        %1571 = vperm.xlu0 %1570, %v1393
        %v1572 = vpop.permute.xlu0 %1571
        %1575 = vset.pattern.permute.xlu0 0
        %1576 = vperm.xlu0 %1575, %v1394
        %v1577 = vpop.permute.xlu0 %1576
        %1580 = vset.pattern.permute.xlu0 0
        %1581 = vperm.xlu0 %1580, %v1395
        %v1582 = vpop.permute.xlu0 %1581
        %1585 = vset.pattern.permute.xlu0 0
        %1586 = vperm.xlu0 %1585, %v1396
        %v1587 = vpop.permute.xlu0 %1586
        %1590 = vset.pattern.permute.xlu0 0
        %1591 = vperm.xlu0 %1590, %v1397
        %v1592 = vpop.permute.xlu0 %1591
        %1595 = vset.pattern.permute.xlu0 0
        %1596 = vperm.xlu0 %1595, %v1398
        %v1597 = vpop.permute.xlu0 %1596
        %1600 = vset.pattern.permute.xlu0 0
        %1601 = vperm.xlu0 %1600, %v1399
        %v1602 = vpop.permute.xlu0 %1601
        %1605 = vset.pattern.permute.xlu0 0
        %1606 = vperm.xlu0 %1605, %v1400
        %v1607 = vpop.permute.xlu0 %1606
        %1610 = vset.pattern.permute.xlu0 0
        %1611 = vperm.xlu0 %1610, %v1401
        %v1612 = vpop.permute.xlu0 %1611
        %1615 = vset.pattern.permute.xlu0 0
        %1616 = vperm.xlu0 %1615, %v1402
        %v1617 = vpop.permute.xlu0 %1616
        %1620 = vset.pattern.permute.xlu0 0
        %1621 = vperm.xlu0 %1620, %v1403
        %v1622 = vpop.permute.xlu0 %1621
        %1625 = vset.pattern.permute.xlu0 0
        %1626 = vperm.xlu0 %1625, %v1404
        %v1627 = vpop.permute.xlu0 %1626
        %1630 = vset.pattern.permute.xlu0 0
        %1631 = vperm.xlu0 %1630, %v1405
        %v1632 = vpop.permute.xlu0 %1631
        %1635 = vset.pattern.permute.xlu0 0
        %1636 = vperm.xlu0 %1635, %v1406
        %v1637 = vpop.permute.xlu0 %1636
        %1640 = vset.pattern.permute.xlu0 0
        %1641 = vperm.xlu0 %1640, %v1407
        %v1642 = vpop.permute.xlu0 %1641
        %1645 = vset.pattern.permute.xlu0 0
        %1646 = vperm.xlu0 %1645, %v1408
        %v1647 = vpop.permute.xlu0 %1646
        %1650 = vset.pattern.permute.xlu0 0
        %1651 = vperm.xlu0 %1650, %v1409
        %v1652 = vpop.permute.xlu0 %1651
        %1655 = vset.pattern.permute.xlu0 0
        %1656 = vperm.xlu0 %1655, %v1410
        %v1657 = vpop.permute.xlu0 %1656
        %1660 = vset.pattern.permute.xlu0 0
        %1661 = vperm.xlu0 %1660, %v1411
        %v1662 = vpop.permute.xlu0 %1661
        %1665 = vset.pattern.permute.xlu0 0
        %1666 = vperm.xlu0 %1665, %v1412
        %v1667 = vpop.permute.xlu0 %1666
        %1670 = vset.pattern.permute.xlu0 0
        %1671 = vperm.xlu0 %1670, %v1413
        %v1672 = vpop.permute.xlu0 %1671
        %1675 = vset.pattern.permute.xlu0 0
        %1676 = vperm.xlu0 %1675, %v1414
        %v1677 = vpop.permute.xlu0 %1676
        %1680 = vset.pattern.permute.xlu0 0
        %1681 = vperm.xlu0 %1680, %v1415
        %v1682 = vpop.permute.xlu0 %1681
        %1685 = vset.pattern.permute.xlu0 0
        %1686 = vperm.xlu0 %1685, %v1416
        %v1687 = vpop.permute.xlu0 %1686
        %1690 = vset.pattern.permute.xlu0 0
        %1691 = vperm.xlu0 %1690, %v1417
        %v1692 = vpop.permute.xlu0 %1691
        %1695 = vset.pattern.permute.xlu0 0
        %1696 = vperm.xlu0 %1695, %v1418
        %v1697 = vpop.permute.xlu0 %1696
        %1700 = vset.pattern.permute.xlu0 0
        %1701 = vperm.xlu0 %1700, %v1419
        %v1702 = vpop.permute.xlu0 %1701
        %1705 = vset.pattern.permute.xlu0 0
        %1706 = vperm.xlu0 %1705, %v1420
        %v1707 = vpop.permute.xlu0 %1706
        %1710 = vset.pattern.permute.xlu0 0
        %1711 = vperm.xlu0 %1710, %v1421
        %v1712 = vpop.permute.xlu0 %1711
        %1715 = vset.pattern.permute.xlu0 0
        %1716 = vperm.xlu0 %1715, %v1422
        %v1717 = vpop.permute.xlu0 %1716
        %1720 = vset.pattern.permute.xlu0 0
        %1721 = vperm.xlu0 %1720, %v1423
        %v1722 = vpop.permute.xlu0 %1721
        %1725 = vset.pattern.permute.xlu0 0
        %1726 = vperm.xlu0 %1725, %v1424
        %v1727 = vpop.permute.xlu0 %1726
        %1730 = vset.pattern.permute.xlu0 0
        %1731 = vperm.xlu0 %1730, %v1425
        %v1732 = vpop.permute.xlu0 %1731
        %1735 = vset.pattern.permute.xlu0 0
        %1736 = vperm.xlu0 %1735, %v1426
        %v1737 = vpop.permute.xlu0 %1736
        %1740 = vset.pattern.permute.xlu0 0
        %1741 = vperm.xlu0 %1740, %v1427
        %v1742 = vpop.permute.xlu0 %1741
        %1745 = vset.pattern.permute.xlu0 0
        %1746 = vperm.xlu0 %1745, %v1428
        %v1747 = vpop.permute.xlu0 %1746
        %v1749 = vsub.f32 %v847, %v1432
        %v1750 = vsub.f32 %v852, %v1437
        %v1751 = vsub.f32 %v857, %v1442
        %v1752 = vsub.f32 %v862, %v1447
        %v1753 = vsub.f32 %v867, %v1452
        %v1754 = vsub.f32 %v872, %v1457
        %v1755 = vsub.f32 %v877, %v1462
        %v1756 = vsub.f32 %v882, %v1467
        %v1757 = vsub.f32 %v887, %v1472
        %v1758 = vsub.f32 %v892, %v1477
        %v1759 = vsub.f32 %v897, %v1482
        %v1760 = vsub.f32 %v902, %v1487
        %v1761 = vsub.f32 %v907, %v1492
        %v1762 = vsub.f32 %v912, %v1497
        %v1763 = vsub.f32 %v917, %v1502
        %v1764 = vsub.f32 %v922, %v1507
        %v1765 = vsub.f32 %v927, %v1512
        %v1766 = vsub.f32 %v932, %v1517
        %v1767 = vsub.f32 %v937, %v1522
        %v1768 = vsub.f32 %v942, %v1527
        %v1769 = vsub.f32 %v947, %v1532
        %v1770 = vsub.f32 %v952, %v1537
        %v1771 = vsub.f32 %v957, %v1542
        %v1772 = vsub.f32 %v962, %v1547
        %v1773 = vsub.f32 %v967, %v1552
        %v1774 = vsub.f32 %v972, %v1557
        %v1775 = vsub.f32 %v977, %v1562
        %v1776 = vsub.f32 %v982, %v1567
        %v1777 = vsub.f32 %v987, %v1572
        %v1778 = vsub.f32 %v992, %v1577
        %v1779 = vsub.f32 %v997, %v1582
        %v1780 = vsub.f32 %v1002, %v1587
        %v1781 = vsub.f32 %v1007, %v1592
        %v1782 = vsub.f32 %v1012, %v1597
        %v1783 = vsub.f32 %v1017, %v1602
        %v1784 = vsub.f32 %v1022, %v1607
        %v1785 = vsub.f32 %v1027, %v1612
        %v1786 = vsub.f32 %v1032, %v1617
        %v1787 = vsub.f32 %v1037, %v1622
        %v1788 = vsub.f32 %v1042, %v1627
        %v1789 = vsub.f32 %v1047, %v1632
        %v1790 = vsub.f32 %v1052, %v1637
        %v1791 = vsub.f32 %v1057, %v1642
        %v1792 = vsub.f32 %v1062, %v1647
        %v1793 = vsub.f32 %v1067, %v1652
        %v1794 = vsub.f32 %v1072, %v1657
        %v1795 = vsub.f32 %v1077, %v1662
        %v1796 = vsub.f32 %v1082, %v1667
        %v1797 = vsub.f32 %v1087, %v1672
        %v1798 = vsub.f32 %v1092, %v1677
        %v1799 = vsub.f32 %v1097, %v1682
        %v1800 = vsub.f32 %v1102, %v1687
        %v1801 = vsub.f32 %v1107, %v1692
        %v1802 = vsub.f32 %v1112, %v1697
        %v1803 = vsub.f32 %v1117, %v1702
        %v1804 = vsub.f32 %v1122, %v1707
        %v1805 = vsub.f32 %v1127, %v1712
        %v1806 = vsub.f32 %v1132, %v1717
        %v1807 = vsub.f32 %v1137, %v1722
        %v1808 = vsub.f32 %v1142, %v1727
        %v1809 = vsub.f32 %v1147, %v1732
        %v1810 = vsub.f32 %v1152, %v1737
        %v1811 = vsub.f32 %v1157, %v1742
        %v1812 = vsub.f32 %v1162, %v1747
        %v1813 = vmul.f32 %v1749, 1.442695
        %v1814 = vpow.pop %v1813
        %v1815 = vmul.f32 %v1750, 1.442695
        %v1816 = vpow.pop %v1815
        %v1817 = vmul.f32 %v1751, 1.442695
        %v1818 = vpow.pop %v1817
        %v1819 = vmul.f32 %v1752, 1.442695
        %v1820 = vpow.pop %v1819
        %v1821 = vmul.f32 %v1753, 1.442695
        %v1822 = vpow.pop %v1821
        %v1823 = vmul.f32 %v1754, 1.442695
        %v1824 = vpow.pop %v1823
        %v1825 = vmul.f32 %v1755, 1.442695
        %v1826 = vpow.pop %v1825
        %v1827 = vmul.f32 %v1756, 1.442695
        %v1828 = vpow.pop %v1827
        %v1829 = vmul.f32 %v1757, 1.442695
        %v1830 = vpow.pop %v1829
        %v1831 = vmul.f32 %v1758, 1.442695
        %v1832 = vpow.pop %v1831
        %v1833 = vmul.f32 %v1759, 1.442695
        %v1834 = vpow.pop %v1833
        %v1835 = vmul.f32 %v1760, 1.442695
        %v1836 = vpow.pop %v1835
        %v1837 = vmul.f32 %v1761, 1.442695
        %v1838 = vpow.pop %v1837
        %v1839 = vmul.f32 %v1762, 1.442695
        %v1840 = vpow.pop %v1839
        %v1841 = vmul.f32 %v1763, 1.442695
        %v1842 = vpow.pop %v1841
        %v1843 = vmul.f32 %v1764, 1.442695
        %v1844 = vpow.pop %v1843
        %v1845 = vmul.f32 %v1765, 1.442695
        %v1846 = vpow.pop %v1845
        %v1847 = vmul.f32 %v1766, 1.442695
        %v1848 = vpow.pop %v1847
        %v1849 = vmul.f32 %v1767, 1.442695
        %v1850 = vpow.pop %v1849
        %v1851 = vmul.f32 %v1768, 1.442695
        %v1852 = vpow.pop %v1851
        %v1853 = vmul.f32 %v1769, 1.442695
        %v1854 = vpow.pop %v1853
        %v1855 = vmul.f32 %v1770, 1.442695
        %v1856 = vpow.pop %v1855
        %v1857 = vmul.f32 %v1771, 1.442695
        %v1858 = vpow.pop %v1857
        %v1859 = vmul.f32 %v1772, 1.442695
        %v1860 = vpow.pop %v1859
        %v1861 = vmul.f32 %v1773, 1.442695
        %v1862 = vpow.pop %v1861
        %v1863 = vmul.f32 %v1774, 1.442695
        %v1864 = vpow.pop %v1863
        %v1865 = vmul.f32 %v1775, 1.442695
        %v1866 = vpow.pop %v1865
        %v1867 = vmul.f32 %v1776, 1.442695
        %v1868 = vpow.pop %v1867
        %v1869 = vmul.f32 %v1777, 1.442695
        %v1870 = vpow.pop %v1869
        %v1871 = vmul.f32 %v1778, 1.442695
        %v1872 = vpow.pop %v1871
        %v1873 = vmul.f32 %v1779, 1.442695
        %v1874 = vpow.pop %v1873
        %v1875 = vmul.f32 %v1780, 1.442695
        %v1876 = vpow.pop %v1875
        %v1877 = vmul.f32 %v1781, 1.442695
        %v1878 = vpow.pop %v1877
        %v1879 = vmul.f32 %v1782, 1.442695
        %v1880 = vpow.pop %v1879
        %v1881 = vmul.f32 %v1783, 1.442695
        %v1882 = vpow.pop %v1881
        %v1883 = vmul.f32 %v1784, 1.442695
        %v1884 = vpow.pop %v1883
        %v1885 = vmul.f32 %v1785, 1.442695
        %v1886 = vpow.pop %v1885
        %v1887 = vmul.f32 %v1786, 1.442695
        %v1888 = vpow.pop %v1887
        %v1889 = vmul.f32 %v1787, 1.442695
        %v1890 = vpow.pop %v1889
        %v1891 = vmul.f32 %v1788, 1.442695
        %v1892 = vpow.pop %v1891
        %v1893 = vmul.f32 %v1789, 1.442695
        %v1894 = vpow.pop %v1893
        %v1895 = vmul.f32 %v1790, 1.442695
        %v1896 = vpow.pop %v1895
        %v1897 = vmul.f32 %v1791, 1.442695
        %v1898 = vpow.pop %v1897
        %v1899 = vmul.f32 %v1792, 1.442695
        %v1900 = vpow.pop %v1899
        %v1901 = vmul.f32 %v1793, 1.442695
        %v1902 = vpow.pop %v1901
        %v1903 = vmul.f32 %v1794, 1.442695
        %v1904 = vpow.pop %v1903
        %v1905 = vmul.f32 %v1795, 1.442695
        %v1906 = vpow.pop %v1905
        %v1907 = vmul.f32 %v1796, 1.442695
        %v1908 = vpow.pop %v1907
        %v1909 = vmul.f32 %v1797, 1.442695
        %v1910 = vpow.pop %v1909
        %v1911 = vmul.f32 %v1798, 1.442695
        %v1912 = vpow.pop %v1911
        %v1913 = vmul.f32 %v1799, 1.442695
        %v1914 = vpow.pop %v1913
        %v1915 = vmul.f32 %v1800, 1.442695
        %v1916 = vpow.pop %v1915
        %v1917 = vmul.f32 %v1801, 1.442695
        %v1918 = vpow.pop %v1917
        %v1919 = vmul.f32 %v1802, 1.442695
        %v1920 = vpow.pop %v1919
        %v1921 = vmul.f32 %v1803, 1.442695
        %v1922 = vpow.pop %v1921
        %v1923 = vmul.f32 %v1804, 1.442695
        %v1924 = vpow.pop %v1923
        %v1925 = vmul.f32 %v1805, 1.442695
        %v1926 = vpow.pop %v1925
        %v1927 = vmul.f32 %v1806, 1.442695
        %v1928 = vpow.pop %v1927
        %v1929 = vmul.f32 %v1807, 1.442695
        %v1930 = vpow.pop %v1929
        %v1931 = vmul.f32 %v1808, 1.442695
        %v1932 = vpow.pop %v1931
        %v1933 = vmul.f32 %v1809, 1.442695
        %v1934 = vpow.pop %v1933
        %v1935 = vmul.f32 %v1810, 1.442695
        %v1936 = vpow.pop %v1935
        %v1937 = vmul.f32 %v1811, 1.442695
        %v1938 = vpow.pop %v1937
        %v1939 = vmul.f32 %v1812, 1.442695
        %v1940 = vpow.pop %v1939
        %v1941 = vsub.f32 %v1363, %v1365
        %v1942 = vsub.f32 %v1363, %v1366
        %v1943 = vsub.f32 %v1363, %v1367
        %v1944 = vsub.f32 %v1363, %v1368
        %v1945 = vsub.f32 %v1363, %v1369
        %v1946 = vsub.f32 %v1363, %v1370
        %v1947 = vsub.f32 %v1363, %v1371
        %v1948 = vsub.f32 %v1363, %v1372
        %v1949 = vsub.f32 %v1363, %v1373
        %v1950 = vsub.f32 %v1363, %v1374
        %v1951 = vsub.f32 %v1363, %v1375
        %v1952 = vsub.f32 %v1363, %v1376
        %v1953 = vsub.f32 %v1363, %v1377
        %v1954 = vsub.f32 %v1363, %v1378
        %v1955 = vsub.f32 %v1363, %v1379
        %v1956 = vsub.f32 %v1363, %v1380
        %v1957 = vsub.f32 %v1363, %v1381
        %v1958 = vsub.f32 %v1363, %v1382
        %v1959 = vsub.f32 %v1363, %v1383
        %v1960 = vsub.f32 %v1363, %v1384
        %v1961 = vsub.f32 %v1363, %v1385
        %v1962 = vsub.f32 %v1363, %v1386
        %v1963 = vsub.f32 %v1363, %v1387
        %v1964 = vsub.f32 %v1363, %v1388
        %v1965 = vsub.f32 %v1363, %v1389
        %v1966 = vsub.f32 %v1363, %v1390
        %v1967 = vsub.f32 %v1363, %v1391
        %v1968 = vsub.f32 %v1363, %v1392
        %v1969 = vsub.f32 %v1363, %v1393
        %v1970 = vsub.f32 %v1363, %v1394
        %v1971 = vsub.f32 %v1363, %v1395
        %v1972 = vsub.f32 %v1363, %v1396
        %v1973 = vsub.f32 %v1363, %v1397
        %v1974 = vsub.f32 %v1363, %v1398
        %v1975 = vsub.f32 %v1363, %v1399
        %v1976 = vsub.f32 %v1363, %v1400
        %v1977 = vsub.f32 %v1363, %v1401
        %v1978 = vsub.f32 %v1363, %v1402
        %v1979 = vsub.f32 %v1363, %v1403
        %v1980 = vsub.f32 %v1363, %v1404
        %v1981 = vsub.f32 %v1363, %v1405
        %v1982 = vsub.f32 %v1363, %v1406
        %v1983 = vsub.f32 %v1363, %v1407
        %v1984 = vsub.f32 %v1363, %v1408
        %v1985 = vsub.f32 %v1363, %v1409
        %v1986 = vsub.f32 %v1363, %v1410
        %v1987 = vsub.f32 %v1363, %v1411
        %v1988 = vsub.f32 %v1363, %v1412
        %v1989 = vsub.f32 %v1363, %v1413
        %v1990 = vsub.f32 %v1363, %v1414
        %v1991 = vsub.f32 %v1363, %v1415
        %v1992 = vsub.f32 %v1363, %v1416
        %v1993 = vsub.f32 %v1363, %v1417
        %v1994 = vsub.f32 %v1363, %v1418
        %v1995 = vsub.f32 %v1363, %v1419
        %v1996 = vsub.f32 %v1363, %v1420
        %v1997 = vsub.f32 %v1363, %v1421
        %v1998 = vsub.f32 %v1363, %v1422
        %v1999 = vsub.f32 %v1363, %v1423
        %v2000 = vsub.f32 %v1363, %v1424
        %v2001 = vsub.f32 %v1363, %v1425
        %v2002 = vsub.f32 %v1363, %v1426
        %v2003 = vsub.f32 %v1363, %v1427
        %v2004 = vsub.f32 %v1363, %v1428
        %v2005 = vmul.f32 %v1941, 1.442695
        %v2006 = vpow.pop %v2005
        %v2007 = vmul.f32 %v1942, 1.442695
        %v2008 = vpow.pop %v2007
        %v2009 = vmul.f32 %v1943, 1.442695
        %v2010 = vpow.pop %v2009
        %v2011 = vmul.f32 %v1944, 1.442695
        %v2012 = vpow.pop %v2011
        %v2013 = vmul.f32 %v1945, 1.442695
        %v2014 = vpow.pop %v2013
        %v2015 = vmul.f32 %v1946, 1.442695
        %v2016 = vpow.pop %v2015
        %v2017 = vmul.f32 %v1947, 1.442695
        %v2018 = vpow.pop %v2017
        %v2019 = vmul.f32 %v1948, 1.442695
        %v2020 = vpow.pop %v2019
        %v2021 = vmul.f32 %v1949, 1.442695
        %v2022 = vpow.pop %v2021
        %v2023 = vmul.f32 %v1950, 1.442695
        %v2024 = vpow.pop %v2023
        %v2025 = vmul.f32 %v1951, 1.442695
        %v2026 = vpow.pop %v2025
        %v2027 = vmul.f32 %v1952, 1.442695
        %v2028 = vpow.pop %v2027
        %v2029 = vmul.f32 %v1953, 1.442695
        %v2030 = vpow.pop %v2029
        %v2031 = vmul.f32 %v1954, 1.442695
        %v2032 = vpow.pop %v2031
        %v2033 = vmul.f32 %v1955, 1.442695
        %v2034 = vpow.pop %v2033
        %v2035 = vmul.f32 %v1956, 1.442695
        %v2036 = vpow.pop %v2035
        %v2037 = vmul.f32 %v1957, 1.442695
        %v2038 = vpow.pop %v2037
        %v2039 = vmul.f32 %v1958, 1.442695
        %v2040 = vpow.pop %v2039
        %v2041 = vmul.f32 %v1959, 1.442695
        %v2042 = vpow.pop %v2041
        %v2043 = vmul.f32 %v1960, 1.442695
        %v2044 = vpow.pop %v2043
        %v2045 = vmul.f32 %v1961, 1.442695
        %v2046 = vpow.pop %v2045
        %v2047 = vmul.f32 %v1962, 1.442695
        %v2048 = vpow.pop %v2047
        %v2049 = vmul.f32 %v1963, 1.442695
        %v2050 = vpow.pop %v2049
        %v2051 = vmul.f32 %v1964, 1.442695
        %v2052 = vpow.pop %v2051
        %v2053 = vmul.f32 %v1965, 1.442695
        %v2054 = vpow.pop %v2053
        %v2055 = vmul.f32 %v1966, 1.442695
        %v2056 = vpow.pop %v2055
        %v2057 = vmul.f32 %v1967, 1.442695
        %v2058 = vpow.pop %v2057
        %v2059 = vmul.f32 %v1968, 1.442695
        %v2060 = vpow.pop %v2059
        %v2061 = vmul.f32 %v1969, 1.442695
        %v2062 = vpow.pop %v2061
        %v2063 = vmul.f32 %v1970, 1.442695
        %v2064 = vpow.pop %v2063
        %v2065 = vmul.f32 %v1971, 1.442695
        %v2066 = vpow.pop %v2065
        %v2067 = vmul.f32 %v1972, 1.442695
        %v2068 = vpow.pop %v2067
        %v2069 = vmul.f32 %v1973, 1.442695
        %v2070 = vpow.pop %v2069
        %v2071 = vmul.f32 %v1974, 1.442695
        %v2072 = vpow.pop %v2071
        %v2073 = vmul.f32 %v1975, 1.442695
        %v2074 = vpow.pop %v2073
        %v2075 = vmul.f32 %v1976, 1.442695
        %v2076 = vpow.pop %v2075
        %v2077 = vmul.f32 %v1977, 1.442695
        %v2078 = vpow.pop %v2077
        %v2079 = vmul.f32 %v1978, 1.442695
        %v2080 = vpow.pop %v2079
        %v2081 = vmul.f32 %v1979, 1.442695
        %v2082 = vpow.pop %v2081
        %v2083 = vmul.f32 %v1980, 1.442695
        %v2084 = vpow.pop %v2083
        %v2085 = vmul.f32 %v1981, 1.442695
        %v2086 = vpow.pop %v2085
        %v2087 = vmul.f32 %v1982, 1.442695
        %v2088 = vpow.pop %v2087
        %v2089 = vmul.f32 %v1983, 1.442695
        %v2090 = vpow.pop %v2089
        %v2091 = vmul.f32 %v1984, 1.442695
        %v2092 = vpow.pop %v2091
        %v2093 = vmul.f32 %v1985, 1.442695
        %v2094 = vpow.pop %v2093
        %v2095 = vmul.f32 %v1986, 1.442695
        %v2096 = vpow.pop %v2095
        %v2097 = vmul.f32 %v1987, 1.442695
        %v2098 = vpow.pop %v2097
        %v2099 = vmul.f32 %v1988, 1.442695
        %v2100 = vpow.pop %v2099
        %v2101 = vmul.f32 %v1989, 1.442695
        %v2102 = vpow.pop %v2101
        %v2103 = vmul.f32 %v1990, 1.442695
        %v2104 = vpow.pop %v2103
        %v2105 = vmul.f32 %v1991, 1.442695
        %v2106 = vpow.pop %v2105
        %v2107 = vmul.f32 %v1992, 1.442695
        %v2108 = vpow.pop %v2107
        %v2109 = vmul.f32 %v1993, 1.442695
        %v2110 = vpow.pop %v2109
        %v2111 = vmul.f32 %v1994, 1.442695
        %v2112 = vpow.pop %v2111
        %v2113 = vmul.f32 %v1995, 1.442695
        %v2114 = vpow.pop %v2113
        %v2115 = vmul.f32 %v1996, 1.442695
        %v2116 = vpow.pop %v2115
        %v2117 = vmul.f32 %v1997, 1.442695
        %v2118 = vpow.pop %v2117
        %v2119 = vmul.f32 %v1998, 1.442695
        %v2120 = vpow.pop %v2119
        %v2121 = vmul.f32 %v1999, 1.442695
        %v2122 = vpow.pop %v2121
        %v2123 = vmul.f32 %v2000, 1.442695
        %v2124 = vpow.pop %v2123
        %v2125 = vmul.f32 %v2001, 1.442695
        %v2126 = vpow.pop %v2125
        %v2127 = vmul.f32 %v2002, 1.442695
        %v2128 = vpow.pop %v2127
        %v2129 = vmul.f32 %v2003, 1.442695
        %v2130 = vpow.pop %v2129
        %v2131 = vmul.f32 %v2004, 1.442695
        %v2132 = vpow.pop %v2131
        %v2133 = vsel %vm1166, %v1814, 0.0
        %2134 = vadd.xlane.f32.xlu0 %v2133
        %v2135 = vpop.xlane.xlu0 %2134
        %v2136 = vsel %vm1166, %v1816, 0.0
        %2137 = vadd.xlane.f32.xlu0 %v2136
        %v2138 = vpop.xlane.xlu0 %2137
        %v2139 = vsel %vm1166, %v1818, 0.0
        %2140 = vadd.xlane.f32.xlu0 %v2139
        %v2141 = vpop.xlane.xlu0 %2140
        %v2142 = vsel %vm1166, %v1820, 0.0
        %2143 = vadd.xlane.f32.xlu0 %v2142
        %v2144 = vpop.xlane.xlu0 %2143
        %v2145 = vsel %vm1166, %v1822, 0.0
        %2146 = vadd.xlane.f32.xlu0 %v2145
        %v2147 = vpop.xlane.xlu0 %2146
        %v2148 = vsel %vm1166, %v1824, 0.0
        %2149 = vadd.xlane.f32.xlu0 %v2148
        %v2150 = vpop.xlane.xlu0 %2149
        %v2151 = vsel %vm1166, %v1826, 0.0
        %2152 = vadd.xlane.f32.xlu0 %v2151
        %v2153 = vpop.xlane.xlu0 %2152
        %v2154 = vsel %vm1166, %v1828, 0.0
        %2155 = vadd.xlane.f32.xlu0 %v2154
        %v2156 = vpop.xlane.xlu0 %2155
        %v2157 = vsel %vm1166, %v1830, 0.0
        %2158 = vadd.xlane.f32.xlu0 %v2157
        %v2159 = vpop.xlane.xlu0 %2158
        %v2160 = vsel %vm1166, %v1832, 0.0
        %2161 = vadd.xlane.f32.xlu0 %v2160
        %v2162 = vpop.xlane.xlu0 %2161
        %v2163 = vsel %vm1166, %v1834, 0.0
        %2164 = vadd.xlane.f32.xlu0 %v2163
        %v2165 = vpop.xlane.xlu0 %2164
        %v2166 = vsel %vm1166, %v1836, 0.0
        %2167 = vadd.xlane.f32.xlu0 %v2166
        %v2168 = vpop.xlane.xlu0 %2167
        %v2169 = vsel %vm1166, %v1838, 0.0
        %2170 = vadd.xlane.f32.xlu0 %v2169
        %v2171 = vpop.xlane.xlu0 %2170
        %v2172 = vsel %vm1166, %v1840, 0.0
        %2173 = vadd.xlane.f32.xlu0 %v2172
        %v2174 = vpop.xlane.xlu0 %2173
        %v2175 = vsel %vm1166, %v1842, 0.0
        %2176 = vadd.xlane.f32.xlu0 %v2175
        %v2177 = vpop.xlane.xlu0 %2176
        %v2178 = vsel %vm1166, %v1844, 0.0
        %2179 = vadd.xlane.f32.xlu0 %v2178
        %v2180 = vpop.xlane.xlu0 %2179
        %v2181 = vsel %vm1166, %v1846, 0.0
        %2182 = vadd.xlane.f32.xlu0 %v2181
        %v2183 = vpop.xlane.xlu0 %2182
        %v2184 = vsel %vm1166, %v1848, 0.0
        %2185 = vadd.xlane.f32.xlu0 %v2184
        %v2186 = vpop.xlane.xlu0 %2185
        %v2187 = vsel %vm1166, %v1850, 0.0
        %2188 = vadd.xlane.f32.xlu0 %v2187
        %v2189 = vpop.xlane.xlu0 %2188
        %v2190 = vsel %vm1166, %v1852, 0.0
        %2191 = vadd.xlane.f32.xlu0 %v2190
        %v2192 = vpop.xlane.xlu0 %2191
        %v2193 = vsel %vm1166, %v1854, 0.0
        %2194 = vadd.xlane.f32.xlu0 %v2193
        %v2195 = vpop.xlane.xlu0 %2194
        %v2196 = vsel %vm1166, %v1856, 0.0
        %2197 = vadd.xlane.f32.xlu0 %v2196
        %v2198 = vpop.xlane.xlu0 %2197
        %v2199 = vsel %vm1166, %v1858, 0.0
        %2200 = vadd.xlane.f32.xlu0 %v2199
        %v2201 = vpop.xlane.xlu0 %2200
        %v2202 = vsel %vm1166, %v1860, 0.0
        %2203 = vadd.xlane.f32.xlu0 %v2202
        %v2204 = vpop.xlane.xlu0 %2203
        %v2205 = vsel %vm1166, %v1862, 0.0
        %2206 = vadd.xlane.f32.xlu0 %v2205
        %v2207 = vpop.xlane.xlu0 %2206
        %v2208 = vsel %vm1166, %v1864, 0.0
        %2209 = vadd.xlane.f32.xlu0 %v2208
        %v2210 = vpop.xlane.xlu0 %2209
        %v2211 = vsel %vm1166, %v1866, 0.0
        %2212 = vadd.xlane.f32.xlu0 %v2211
        %v2213 = vpop.xlane.xlu0 %2212
        %v2214 = vsel %vm1166, %v1868, 0.0
        %2215 = vadd.xlane.f32.xlu0 %v2214
        %v2216 = vpop.xlane.xlu0 %2215
        %v2217 = vsel %vm1166, %v1870, 0.0
        %2218 = vadd.xlane.f32.xlu0 %v2217
        %v2219 = vpop.xlane.xlu0 %2218
        %v2220 = vsel %vm1166, %v1872, 0.0
        %2221 = vadd.xlane.f32.xlu0 %v2220
        %v2222 = vpop.xlane.xlu0 %2221
        %v2223 = vsel %vm1166, %v1874, 0.0
        %2224 = vadd.xlane.f32.xlu0 %v2223
        %v2225 = vpop.xlane.xlu0 %2224
        %v2226 = vsel %vm1166, %v1876, 0.0
        %2227 = vadd.xlane.f32.xlu0 %v2226
        %v2228 = vpop.xlane.xlu0 %2227
        %v2229 = vsel %vm1166, %v1878, 0.0
        %2230 = vadd.xlane.f32.xlu0 %v2229
        %v2231 = vpop.xlane.xlu0 %2230
        %v2232 = vsel %vm1166, %v1880, 0.0
        %2233 = vadd.xlane.f32.xlu0 %v2232
        %v2234 = vpop.xlane.xlu0 %2233
        %v2235 = vsel %vm1166, %v1882, 0.0
        %2236 = vadd.xlane.f32.xlu0 %v2235
        %v2237 = vpop.xlane.xlu0 %2236
        %v2238 = vsel %vm1166, %v1884, 0.0
        %2239 = vadd.xlane.f32.xlu0 %v2238
        %v2240 = vpop.xlane.xlu0 %2239
        %v2241 = vsel %vm1166, %v1886, 0.0
        %2242 = vadd.xlane.f32.xlu0 %v2241
        %v2243 = vpop.xlane.xlu0 %2242
        %v2244 = vsel %vm1166, %v1888, 0.0
        %2245 = vadd.xlane.f32.xlu0 %v2244
        %v2246 = vpop.xlane.xlu0 %2245
        %v2247 = vsel %vm1166, %v1890, 0.0
        %2248 = vadd.xlane.f32.xlu0 %v2247
        %v2249 = vpop.xlane.xlu0 %2248
        %v2250 = vsel %vm1166, %v1892, 0.0
        %2251 = vadd.xlane.f32.xlu0 %v2250
        %v2252 = vpop.xlane.xlu0 %2251
        %v2253 = vsel %vm1166, %v1894, 0.0
        %2254 = vadd.xlane.f32.xlu0 %v2253
        %v2255 = vpop.xlane.xlu0 %2254
        %v2256 = vsel %vm1166, %v1896, 0.0
        %2257 = vadd.xlane.f32.xlu0 %v2256
        %v2258 = vpop.xlane.xlu0 %2257
        %v2259 = vsel %vm1166, %v1898, 0.0
        %2260 = vadd.xlane.f32.xlu0 %v2259
        %v2261 = vpop.xlane.xlu0 %2260
        %v2262 = vsel %vm1166, %v1900, 0.0
        %2263 = vadd.xlane.f32.xlu0 %v2262
        %v2264 = vpop.xlane.xlu0 %2263
        %v2265 = vsel %vm1166, %v1902, 0.0
        %2266 = vadd.xlane.f32.xlu0 %v2265
        %v2267 = vpop.xlane.xlu0 %2266
        %v2268 = vsel %vm1166, %v1904, 0.0
        %2269 = vadd.xlane.f32.xlu0 %v2268
        %v2270 = vpop.xlane.xlu0 %2269
        %v2271 = vsel %vm1166, %v1906, 0.0
        %2272 = vadd.xlane.f32.xlu0 %v2271
        %v2273 = vpop.xlane.xlu0 %2272
        %v2274 = vsel %vm1166, %v1908, 0.0
        %2275 = vadd.xlane.f32.xlu0 %v2274
        %v2276 = vpop.xlane.xlu0 %2275
        %v2277 = vsel %vm1166, %v1910, 0.0
        %2278 = vadd.xlane.f32.xlu0 %v2277
        %v2279 = vpop.xlane.xlu0 %2278
        %v2280 = vsel %vm1166, %v1912, 0.0
        %2281 = vadd.xlane.f32.xlu0 %v2280
        %v2282 = vpop.xlane.xlu0 %2281
        %v2283 = vsel %vm1166, %v1914, 0.0
        %2284 = vadd.xlane.f32.xlu0 %v2283
        %v2285 = vpop.xlane.xlu0 %2284
        %v2286 = vsel %vm1166, %v1916, 0.0
        %2287 = vadd.xlane.f32.xlu0 %v2286
        %v2288 = vpop.xlane.xlu0 %2287
        %v2289 = vsel %vm1166, %v1918, 0.0
        %2290 = vadd.xlane.f32.xlu0 %v2289
        %v2291 = vpop.xlane.xlu0 %2290
        %v2292 = vsel %vm1166, %v1920, 0.0
        %2293 = vadd.xlane.f32.xlu0 %v2292
        %v2294 = vpop.xlane.xlu0 %2293
        %v2295 = vsel %vm1166, %v1922, 0.0
        %2296 = vadd.xlane.f32.xlu0 %v2295
        %v2297 = vpop.xlane.xlu0 %2296
        %v2298 = vsel %vm1166, %v1924, 0.0
        %2299 = vadd.xlane.f32.xlu0 %v2298
        %v2300 = vpop.xlane.xlu0 %2299
        %v2301 = vsel %vm1166, %v1926, 0.0
        %2302 = vadd.xlane.f32.xlu0 %v2301
        %v2303 = vpop.xlane.xlu0 %2302
        %v2304 = vsel %vm1166, %v1928, 0.0
        %2305 = vadd.xlane.f32.xlu0 %v2304
        %v2306 = vpop.xlane.xlu0 %2305
        %v2307 = vsel %vm1166, %v1930, 0.0
        %2308 = vadd.xlane.f32.xlu0 %v2307
        %v2309 = vpop.xlane.xlu0 %2308
        %v2310 = vsel %vm1166, %v1932, 0.0
        %2311 = vadd.xlane.f32.xlu0 %v2310
        %v2312 = vpop.xlane.xlu0 %2311
        %v2313 = vsel %vm1166, %v1934, 0.0
        %2314 = vadd.xlane.f32.xlu0 %v2313
        %v2315 = vpop.xlane.xlu0 %2314
        %v2316 = vsel %vm1166, %v1936, 0.0
        %2317 = vadd.xlane.f32.xlu0 %v2316
        %v2318 = vpop.xlane.xlu0 %2317
        %v2319 = vsel %vm1166, %v1938, 0.0
        %2320 = vadd.xlane.f32.xlu0 %v2319
        %v2321 = vpop.xlane.xlu0 %2320
        %v2322 = vsel %vm1166, %v1940, 0.0
        %2323 = vadd.xlane.f32.xlu0 %v2322
        %v2324 = vpop.xlane.xlu0 %2323
        %v2325 = vadd.f32 %v2006, %v2135
        %v2326 = vadd.f32 %v2008, %v2138
        %v2327 = vadd.f32 %v2010, %v2141
        %v2328 = vadd.f32 %v2012, %v2144
        %v2329 = vadd.f32 %v2014, %v2147
        %v2330 = vadd.f32 %v2016, %v2150
        %v2331 = vadd.f32 %v2018, %v2153
        %v2332 = vadd.f32 %v2020, %v2156
        %v2333 = vadd.f32 %v2022, %v2159
        %v2334 = vadd.f32 %v2024, %v2162
        %v2335 = vadd.f32 %v2026, %v2165
        %v2336 = vadd.f32 %v2028, %v2168
        %v2337 = vadd.f32 %v2030, %v2171
        %v2338 = vadd.f32 %v2032, %v2174
        %v2339 = vadd.f32 %v2034, %v2177
        %v2340 = vadd.f32 %v2036, %v2180
        %v2341 = vadd.f32 %v2038, %v2183
        %v2342 = vadd.f32 %v2040, %v2186
        %v2343 = vadd.f32 %v2042, %v2189
        %v2344 = vadd.f32 %v2044, %v2192
        %v2345 = vadd.f32 %v2046, %v2195
        %v2346 = vadd.f32 %v2048, %v2198
        %v2347 = vadd.f32 %v2050, %v2201
        %v2348 = vadd.f32 %v2052, %v2204
        %v2349 = vadd.f32 %v2054, %v2207
        %v2350 = vadd.f32 %v2056, %v2210
        %v2351 = vadd.f32 %v2058, %v2213
        %v2352 = vadd.f32 %v2060, %v2216
        %v2353 = vadd.f32 %v2062, %v2219
        %v2354 = vadd.f32 %v2064, %v2222
        %v2355 = vadd.f32 %v2066, %v2225
        %v2356 = vadd.f32 %v2068, %v2228
        %v2357 = vadd.f32 %v2070, %v2231
        %v2358 = vadd.f32 %v2072, %v2234
        %v2359 = vadd.f32 %v2074, %v2237
        %v2360 = vadd.f32 %v2076, %v2240
        %v2361 = vadd.f32 %v2078, %v2243
        %v2362 = vadd.f32 %v2080, %v2246
        %v2363 = vadd.f32 %v2082, %v2249
        %v2364 = vadd.f32 %v2084, %v2252
        %v2365 = vadd.f32 %v2086, %v2255
        %v2366 = vadd.f32 %v2088, %v2258
        %v2367 = vadd.f32 %v2090, %v2261
        %v2368 = vadd.f32 %v2092, %v2264
        %v2369 = vadd.f32 %v2094, %v2267
        %v2370 = vadd.f32 %v2096, %v2270
        %v2371 = vadd.f32 %v2098, %v2273
        %v2372 = vadd.f32 %v2100, %v2276
        %v2373 = vadd.f32 %v2102, %v2279
        %v2374 = vadd.f32 %v2104, %v2282
        %v2375 = vadd.f32 %v2106, %v2285
        %v2376 = vadd.f32 %v2108, %v2288
        %v2377 = vadd.f32 %v2110, %v2291
        %v2378 = vadd.f32 %v2112, %v2294
        %v2379 = vadd.f32 %v2114, %v2297
        %v2380 = vadd.f32 %v2116, %v2300
        %v2381 = vadd.f32 %v2118, %v2303
        %v2382 = vadd.f32 %v2120, %v2306
        %v2383 = vadd.f32 %v2122, %v2309
        %v2384 = vadd.f32 %v2124, %v2312
        %v2385 = vadd.f32 %v2126, %v2315
        %v2386 = vadd.f32 %v2128, %v2318
        %v2387 = vadd.f32 %v2130, %v2321
        %v2388 = vadd.f32 %v2132, %v2324
        %v2389 = vrcp.pop %v2325
        %v2390 = vmul.f32 1.0, %v2389
        %v2391 = vrcp.pop %v2326
        %v2392 = vmul.f32 1.0, %v2391
        %v2393 = vrcp.pop %v2327
        %v2394 = vmul.f32 1.0, %v2393
        %v2395 = vrcp.pop %v2328
        %v2396 = vmul.f32 1.0, %v2395
        %v2397 = vrcp.pop %v2329
        %v2398 = vmul.f32 1.0, %v2397
        %v2399 = vrcp.pop %v2330
        %v2400 = vmul.f32 1.0, %v2399
        %v2401 = vrcp.pop %v2331
        %v2402 = vmul.f32 1.0, %v2401
        %v2403 = vrcp.pop %v2332
        %v2404 = vmul.f32 1.0, %v2403
        %v2405 = vrcp.pop %v2333
        %v2406 = vmul.f32 1.0, %v2405
        %v2407 = vrcp.pop %v2334
        %v2408 = vmul.f32 1.0, %v2407
        %v2409 = vrcp.pop %v2335
        %v2410 = vmul.f32 1.0, %v2409
        %v2411 = vrcp.pop %v2336
        %v2412 = vmul.f32 1.0, %v2411
        %v2413 = vrcp.pop %v2337
        %v2414 = vmul.f32 1.0, %v2413
        %v2415 = vrcp.pop %v2338
        %v2416 = vmul.f32 1.0, %v2415
        %v2417 = vrcp.pop %v2339
        %v2418 = vmul.f32 1.0, %v2417
        %v2419 = vrcp.pop %v2340
        %v2420 = vmul.f32 1.0, %v2419
        %v2421 = vrcp.pop %v2341
        %v2422 = vmul.f32 1.0, %v2421
        %v2423 = vrcp.pop %v2342
        %v2424 = vmul.f32 1.0, %v2423
        %v2425 = vrcp.pop %v2343
        %v2426 = vmul.f32 1.0, %v2425
        %v2427 = vrcp.pop %v2344
        %v2428 = vmul.f32 1.0, %v2427
        %v2429 = vrcp.pop %v2345
        %v2430 = vmul.f32 1.0, %v2429
        %v2431 = vrcp.pop %v2346
        %v2432 = vmul.f32 1.0, %v2431
        %v2433 = vrcp.pop %v2347
        %v2434 = vmul.f32 1.0, %v2433
        %v2435 = vrcp.pop %v2348
        %v2436 = vmul.f32 1.0, %v2435
        %v2437 = vrcp.pop %v2349
        %v2438 = vmul.f32 1.0, %v2437
        %v2439 = vrcp.pop %v2350
        %v2440 = vmul.f32 1.0, %v2439
        %v2441 = vrcp.pop %v2351
        %v2442 = vmul.f32 1.0, %v2441
        %v2443 = vrcp.pop %v2352
        %v2444 = vmul.f32 1.0, %v2443
        %v2445 = vrcp.pop %v2353
        %v2446 = vmul.f32 1.0, %v2445
        %v2447 = vrcp.pop %v2354
        %v2448 = vmul.f32 1.0, %v2447
        %v2449 = vrcp.pop %v2355
        %v2450 = vmul.f32 1.0, %v2449
        %v2451 = vrcp.pop %v2356
        %v2452 = vmul.f32 1.0, %v2451
        %v2453 = vrcp.pop %v2357
        %v2454 = vmul.f32 1.0, %v2453
        %v2455 = vrcp.pop %v2358
        %v2456 = vmul.f32 1.0, %v2455
        %v2457 = vrcp.pop %v2359
        %v2458 = vmul.f32 1.0, %v2457
        %v2459 = vrcp.pop %v2360
        %v2460 = vmul.f32 1.0, %v2459
        %v2461 = vrcp.pop %v2361
        %v2462 = vmul.f32 1.0, %v2461
        %v2463 = vrcp.pop %v2362
        %v2464 = vmul.f32 1.0, %v2463
        %v2465 = vrcp.pop %v2363
        %v2466 = vmul.f32 1.0, %v2465
        %v2467 = vrcp.pop %v2364
        %v2468 = vmul.f32 1.0, %v2467
        %v2469 = vrcp.pop %v2365
        %v2470 = vmul.f32 1.0, %v2469
        %v2471 = vrcp.pop %v2366
        %v2472 = vmul.f32 1.0, %v2471
        %v2473 = vrcp.pop %v2367
        %v2474 = vmul.f32 1.0, %v2473
        %v2475 = vrcp.pop %v2368
        %v2476 = vmul.f32 1.0, %v2475
        %v2477 = vrcp.pop %v2369
        %v2478 = vmul.f32 1.0, %v2477
        %v2479 = vrcp.pop %v2370
        %v2480 = vmul.f32 1.0, %v2479
        %v2481 = vrcp.pop %v2371
        %v2482 = vmul.f32 1.0, %v2481
        %v2483 = vrcp.pop %v2372
        %v2484 = vmul.f32 1.0, %v2483
        %v2485 = vrcp.pop %v2373
        %v2486 = vmul.f32 1.0, %v2485
        %v2487 = vrcp.pop %v2374
        %v2488 = vmul.f32 1.0, %v2487
        %v2489 = vrcp.pop %v2375
        %v2490 = vmul.f32 1.0, %v2489
        %v2491 = vrcp.pop %v2376
        %v2492 = vmul.f32 1.0, %v2491
        %v2493 = vrcp.pop %v2377
        %v2494 = vmul.f32 1.0, %v2493
        %v2495 = vrcp.pop %v2378
        %v2496 = vmul.f32 1.0, %v2495
        %v2497 = vrcp.pop %v2379
        %v2498 = vmul.f32 1.0, %v2497
        %v2499 = vrcp.pop %v2380
        %v2500 = vmul.f32 1.0, %v2499
        %v2501 = vrcp.pop %v2381
        %v2502 = vmul.f32 1.0, %v2501
        %v2503 = vrcp.pop %v2382
        %v2504 = vmul.f32 1.0, %v2503
        %v2505 = vrcp.pop %v2383
        %v2506 = vmul.f32 1.0, %v2505
        %v2507 = vrcp.pop %v2384
        %v2508 = vmul.f32 1.0, %v2507
        %v2509 = vrcp.pop %v2385
        %v2510 = vmul.f32 1.0, %v2509
        %v2511 = vrcp.pop %v2386
        %v2512 = vmul.f32 1.0, %v2511
        %v2513 = vrcp.pop %v2387
        %v2514 = vmul.f32 1.0, %v2513
        %v2515 = vrcp.pop %v2388
        %v2516 = vmul.f32 1.0, %v2515
        %2518 = vset.pattern.permute.xlu0 0
        %2519 = vperm.xlu0 %2518, %v2390
        %v2520 = vpop.permute.xlu0 %2519
        %2523 = vset.pattern.permute.xlu0 0
        %2524 = vperm.xlu0 %2523, %v2392
        %v2525 = vpop.permute.xlu0 %2524
        %2528 = vset.pattern.permute.xlu0 0
        %2529 = vperm.xlu0 %2528, %v2394
        %v2530 = vpop.permute.xlu0 %2529
        %2533 = vset.pattern.permute.xlu0 0
        %2534 = vperm.xlu0 %2533, %v2396
        %v2535 = vpop.permute.xlu0 %2534
        %2538 = vset.pattern.permute.xlu0 0
        %2539 = vperm.xlu0 %2538, %v2398
        %v2540 = vpop.permute.xlu0 %2539
        %2543 = vset.pattern.permute.xlu0 0
        %2544 = vperm.xlu0 %2543, %v2400
        %v2545 = vpop.permute.xlu0 %2544
        %2548 = vset.pattern.permute.xlu0 0
        %2549 = vperm.xlu0 %2548, %v2402
        %v2550 = vpop.permute.xlu0 %2549
        %2553 = vset.pattern.permute.xlu0 0
        %2554 = vperm.xlu0 %2553, %v2404
        %v2555 = vpop.permute.xlu0 %2554
        %2558 = vset.pattern.permute.xlu0 0
        %2559 = vperm.xlu0 %2558, %v2406
        %v2560 = vpop.permute.xlu0 %2559
        %2563 = vset.pattern.permute.xlu0 0
        %2564 = vperm.xlu0 %2563, %v2408
        %v2565 = vpop.permute.xlu0 %2564
        %2568 = vset.pattern.permute.xlu0 0
        %2569 = vperm.xlu0 %2568, %v2410
        %v2570 = vpop.permute.xlu0 %2569
        %2573 = vset.pattern.permute.xlu0 0
        %2574 = vperm.xlu0 %2573, %v2412
        %v2575 = vpop.permute.xlu0 %2574
        %2578 = vset.pattern.permute.xlu0 0
        %2579 = vperm.xlu0 %2578, %v2414
        %v2580 = vpop.permute.xlu0 %2579
        %2583 = vset.pattern.permute.xlu0 0
        %2584 = vperm.xlu0 %2583, %v2416
        %v2585 = vpop.permute.xlu0 %2584
        %2588 = vset.pattern.permute.xlu0 0
        %2589 = vperm.xlu0 %2588, %v2418
        %v2590 = vpop.permute.xlu0 %2589
        %2593 = vset.pattern.permute.xlu0 0
        %2594 = vperm.xlu0 %2593, %v2420
        %v2595 = vpop.permute.xlu0 %2594
        %2598 = vset.pattern.permute.xlu0 0
        %2599 = vperm.xlu0 %2598, %v2422
        %v2600 = vpop.permute.xlu0 %2599
        %2603 = vset.pattern.permute.xlu0 0
        %2604 = vperm.xlu0 %2603, %v2424
        %v2605 = vpop.permute.xlu0 %2604
        %2608 = vset.pattern.permute.xlu0 0
        %2609 = vperm.xlu0 %2608, %v2426
        %v2610 = vpop.permute.xlu0 %2609
        %2613 = vset.pattern.permute.xlu0 0
        %2614 = vperm.xlu0 %2613, %v2428
        %v2615 = vpop.permute.xlu0 %2614
        %2618 = vset.pattern.permute.xlu0 0
        %2619 = vperm.xlu0 %2618, %v2430
        %v2620 = vpop.permute.xlu0 %2619
        %2623 = vset.pattern.permute.xlu0 0
        %2624 = vperm.xlu0 %2623, %v2432
        %v2625 = vpop.permute.xlu0 %2624
        %2628 = vset.pattern.permute.xlu0 0
        %2629 = vperm.xlu0 %2628, %v2434
        %v2630 = vpop.permute.xlu0 %2629
        %2633 = vset.pattern.permute.xlu0 0
        %2634 = vperm.xlu0 %2633, %v2436
        %v2635 = vpop.permute.xlu0 %2634
        %2638 = vset.pattern.permute.xlu0 0
        %2639 = vperm.xlu0 %2638, %v2438
        %v2640 = vpop.permute.xlu0 %2639
        %2643 = vset.pattern.permute.xlu0 0
        %2644 = vperm.xlu0 %2643, %v2440
        %v2645 = vpop.permute.xlu0 %2644
        %2648 = vset.pattern.permute.xlu0 0
        %2649 = vperm.xlu0 %2648, %v2442
        %v2650 = vpop.permute.xlu0 %2649
        %2653 = vset.pattern.permute.xlu0 0
        %2654 = vperm.xlu0 %2653, %v2444
        %v2655 = vpop.permute.xlu0 %2654
        %2658 = vset.pattern.permute.xlu0 0
        %2659 = vperm.xlu0 %2658, %v2446
        %v2660 = vpop.permute.xlu0 %2659
        %2663 = vset.pattern.permute.xlu0 0
        %2664 = vperm.xlu0 %2663, %v2448
        %v2665 = vpop.permute.xlu0 %2664
        %2668 = vset.pattern.permute.xlu0 0
        %2669 = vperm.xlu0 %2668, %v2450
        %v2670 = vpop.permute.xlu0 %2669
        %2673 = vset.pattern.permute.xlu0 0
        %2674 = vperm.xlu0 %2673, %v2452
        %v2675 = vpop.permute.xlu0 %2674
        %2678 = vset.pattern.permute.xlu0 0
        %2679 = vperm.xlu0 %2678, %v2454
        %v2680 = vpop.permute.xlu0 %2679
        %2683 = vset.pattern.permute.xlu0 0
        %2684 = vperm.xlu0 %2683, %v2456
        %v2685 = vpop.permute.xlu0 %2684
        %2688 = vset.pattern.permute.xlu0 0
        %2689 = vperm.xlu0 %2688, %v2458
        %v2690 = vpop.permute.xlu0 %2689
        %2693 = vset.pattern.permute.xlu0 0
        %2694 = vperm.xlu0 %2693, %v2460
        %v2695 = vpop.permute.xlu0 %2694
        %2698 = vset.pattern.permute.xlu0 0
        %2699 = vperm.xlu0 %2698, %v2462
        %v2700 = vpop.permute.xlu0 %2699
        %2703 = vset.pattern.permute.xlu0 0
        %2704 = vperm.xlu0 %2703, %v2464
        %v2705 = vpop.permute.xlu0 %2704
        %2708 = vset.pattern.permute.xlu0 0
        %2709 = vperm.xlu0 %2708, %v2466
        %v2710 = vpop.permute.xlu0 %2709
        %2713 = vset.pattern.permute.xlu0 0
        %2714 = vperm.xlu0 %2713, %v2468
        %v2715 = vpop.permute.xlu0 %2714
        %2718 = vset.pattern.permute.xlu0 0
        %2719 = vperm.xlu0 %2718, %v2470
        %v2720 = vpop.permute.xlu0 %2719
        %2723 = vset.pattern.permute.xlu0 0
        %2724 = vperm.xlu0 %2723, %v2472
        %v2725 = vpop.permute.xlu0 %2724
        %2728 = vset.pattern.permute.xlu0 0
        %2729 = vperm.xlu0 %2728, %v2474
        %v2730 = vpop.permute.xlu0 %2729
        %2733 = vset.pattern.permute.xlu0 0
        %2734 = vperm.xlu0 %2733, %v2476
        %v2735 = vpop.permute.xlu0 %2734
        %2738 = vset.pattern.permute.xlu0 0
        %2739 = vperm.xlu0 %2738, %v2478
        %v2740 = vpop.permute.xlu0 %2739
        %2743 = vset.pattern.permute.xlu0 0
        %2744 = vperm.xlu0 %2743, %v2480
        %v2745 = vpop.permute.xlu0 %2744
        %2748 = vset.pattern.permute.xlu0 0
        %2749 = vperm.xlu0 %2748, %v2482
        %v2750 = vpop.permute.xlu0 %2749
        %2753 = vset.pattern.permute.xlu0 0
        %2754 = vperm.xlu0 %2753, %v2484
        %v2755 = vpop.permute.xlu0 %2754
        %2758 = vset.pattern.permute.xlu0 0
        %2759 = vperm.xlu0 %2758, %v2486
        %v2760 = vpop.permute.xlu0 %2759
        %2763 = vset.pattern.permute.xlu0 0
        %2764 = vperm.xlu0 %2763, %v2488
        %v2765 = vpop.permute.xlu0 %2764
        %2768 = vset.pattern.permute.xlu0 0
        %2769 = vperm.xlu0 %2768, %v2490
        %v2770 = vpop.permute.xlu0 %2769
        %2773 = vset.pattern.permute.xlu0 0
        %2774 = vperm.xlu0 %2773, %v2492
        %v2775 = vpop.permute.xlu0 %2774
        %2778 = vset.pattern.permute.xlu0 0
        %2779 = vperm.xlu0 %2778, %v2494
        %v2780 = vpop.permute.xlu0 %2779
        %2783 = vset.pattern.permute.xlu0 0
        %2784 = vperm.xlu0 %2783, %v2496
        %v2785 = vpop.permute.xlu0 %2784
        %2788 = vset.pattern.permute.xlu0 0
        %2789 = vperm.xlu0 %2788, %v2498
        %v2790 = vpop.permute.xlu0 %2789
        %2793 = vset.pattern.permute.xlu0 0
        %2794 = vperm.xlu0 %2793, %v2500
        %v2795 = vpop.permute.xlu0 %2794
        %2798 = vset.pattern.permute.xlu0 0
        %2799 = vperm.xlu0 %2798, %v2502
        %v2800 = vpop.permute.xlu0 %2799
        %2803 = vset.pattern.permute.xlu0 0
        %2804 = vperm.xlu0 %2803, %v2504
        %v2805 = vpop.permute.xlu0 %2804
        %2808 = vset.pattern.permute.xlu0 0
        %2809 = vperm.xlu0 %2808, %v2506
        %v2810 = vpop.permute.xlu0 %2809
        %2813 = vset.pattern.permute.xlu0 0
        %2814 = vperm.xlu0 %2813, %v2508
        %v2815 = vpop.permute.xlu0 %2814
        %2818 = vset.pattern.permute.xlu0 0
        %2819 = vperm.xlu0 %2818, %v2510
        %v2820 = vpop.permute.xlu0 %2819
        %2823 = vset.pattern.permute.xlu0 0
        %2824 = vperm.xlu0 %2823, %v2512
        %v2825 = vpop.permute.xlu0 %2824
        %2828 = vset.pattern.permute.xlu0 0
        %2829 = vperm.xlu0 %2828, %v2514
        %v2830 = vpop.permute.xlu0 %2829
        %2833 = vset.pattern.permute.xlu0 0
        %2834 = vperm.xlu0 %2833, %v2516
        %v2835 = vpop.permute.xlu0 %2834
        %v2837 = vmul.f32 %v1814, %v2520
        %v2838 = vmul.f32 %v1816, %v2525
        %v2839 = vmul.f32 %v1818, %v2530
        %v2840 = vmul.f32 %v1820, %v2535
        %v2841 = vmul.f32 %v1822, %v2540
        %v2842 = vmul.f32 %v1824, %v2545
        %v2843 = vmul.f32 %v1826, %v2550
        %v2844 = vmul.f32 %v1828, %v2555
        %v2845 = vmul.f32 %v1830, %v2560
        %v2846 = vmul.f32 %v1832, %v2565
        %v2847 = vmul.f32 %v1834, %v2570
        %v2848 = vmul.f32 %v1836, %v2575
        %v2849 = vmul.f32 %v1838, %v2580
        %v2850 = vmul.f32 %v1840, %v2585
        %v2851 = vmul.f32 %v1842, %v2590
        %v2852 = vmul.f32 %v1844, %v2595
        %v2853 = vmul.f32 %v1846, %v2600
        %v2854 = vmul.f32 %v1848, %v2605
        %v2855 = vmul.f32 %v1850, %v2610
        %v2856 = vmul.f32 %v1852, %v2615
        %v2857 = vmul.f32 %v1854, %v2620
        %v2858 = vmul.f32 %v1856, %v2625
        %v2859 = vmul.f32 %v1858, %v2630
        %v2860 = vmul.f32 %v1860, %v2635
        %v2861 = vmul.f32 %v1862, %v2640
        %v2862 = vmul.f32 %v1864, %v2645
        %v2863 = vmul.f32 %v1866, %v2650
        %v2864 = vmul.f32 %v1868, %v2655
        %v2865 = vmul.f32 %v1870, %v2660
        %v2866 = vmul.f32 %v1872, %v2665
        %v2867 = vmul.f32 %v1874, %v2670
        %v2868 = vmul.f32 %v1876, %v2675
        %v2869 = vmul.f32 %v1878, %v2680
        %v2870 = vmul.f32 %v1880, %v2685
        %v2871 = vmul.f32 %v1882, %v2690
        %v2872 = vmul.f32 %v1884, %v2695
        %v2873 = vmul.f32 %v1886, %v2700
        %v2874 = vmul.f32 %v1888, %v2705
        %v2875 = vmul.f32 %v1890, %v2710
        %v2876 = vmul.f32 %v1892, %v2715
        %v2877 = vmul.f32 %v1894, %v2720
        %v2878 = vmul.f32 %v1896, %v2725
        %v2879 = vmul.f32 %v1898, %v2730
        %v2880 = vmul.f32 %v1900, %v2735
        %v2881 = vmul.f32 %v1902, %v2740
        %v2882 = vmul.f32 %v1904, %v2745
        %v2883 = vmul.f32 %v1906, %v2750
        %v2884 = vmul.f32 %v1908, %v2755
        %v2885 = vmul.f32 %v1910, %v2760
        %v2886 = vmul.f32 %v1912, %v2765
        %v2887 = vmul.f32 %v1914, %v2770
        %v2888 = vmul.f32 %v1916, %v2775
        %v2889 = vmul.f32 %v1918, %v2780
        %v2890 = vmul.f32 %v1920, %v2785
        %v2891 = vmul.f32 %v1922, %v2790
        %v2892 = vmul.f32 %v1924, %v2795
        %v2893 = vmul.f32 %v1926, %v2800
        %v2894 = vmul.f32 %v1928, %v2805
        %v2895 = vmul.f32 %v1930, %v2810
        %v2896 = vmul.f32 %v1932, %v2815
        %v2897 = vmul.f32 %v1934, %v2820
        %v2898 = vmul.f32 %v1936, %v2825
        %v2899 = vmul.f32 %v1938, %v2830
        %v2900 = vmul.f32 %v1940, %v2835
        %v2901 = vmul.f32 %v2006, %v2390
        %v2902 = vmul.f32 %v2008, %v2392
        %v2903 = vmul.f32 %v2010, %v2394
        %v2904 = vmul.f32 %v2012, %v2396
        %v2905 = vmul.f32 %v2014, %v2398
        %v2906 = vmul.f32 %v2016, %v2400
        %v2907 = vmul.f32 %v2018, %v2402
        %v2908 = vmul.f32 %v2020, %v2404
        %v2909 = vmul.f32 %v2022, %v2406
        %v2910 = vmul.f32 %v2024, %v2408
        %v2911 = vmul.f32 %v2026, %v2410
        %v2912 = vmul.f32 %v2028, %v2412
        %v2913 = vmul.f32 %v2030, %v2414
        %v2914 = vmul.f32 %v2032, %v2416
        %v2915 = vmul.f32 %v2034, %v2418
        %v2916 = vmul.f32 %v2036, %v2420
        %v2917 = vmul.f32 %v2038, %v2422
        %v2918 = vmul.f32 %v2040, %v2424
        %v2919 = vmul.f32 %v2042, %v2426
        %v2920 = vmul.f32 %v2044, %v2428
        %v2921 = vmul.f32 %v2046, %v2430
        %v2922 = vmul.f32 %v2048, %v2432
        %v2923 = vmul.f32 %v2050, %v2434
        %v2924 = vmul.f32 %v2052, %v2436
        %v2925 = vmul.f32 %v2054, %v2438
        %v2926 = vmul.f32 %v2056, %v2440
        %v2927 = vmul.f32 %v2058, %v2442
        %v2928 = vmul.f32 %v2060, %v2444
        %v2929 = vmul.f32 %v2062, %v2446
        %v2930 = vmul.f32 %v2064, %v2448
        %v2931 = vmul.f32 %v2066, %v2450
        %v2932 = vmul.f32 %v2068, %v2452
        %v2933 = vmul.f32 %v2070, %v2454
        %v2934 = vmul.f32 %v2072, %v2456
        %v2935 = vmul.f32 %v2074, %v2458
        %v2936 = vmul.f32 %v2076, %v2460
        %v2937 = vmul.f32 %v2078, %v2462
        %v2938 = vmul.f32 %v2080, %v2464
        %v2939 = vmul.f32 %v2082, %v2466
        %v2940 = vmul.f32 %v2084, %v2468
        %v2941 = vmul.f32 %v2086, %v2470
        %v2942 = vmul.f32 %v2088, %v2472
        %v2943 = vmul.f32 %v2090, %v2474
        %v2944 = vmul.f32 %v2092, %v2476
        %v2945 = vmul.f32 %v2094, %v2478
        %v2946 = vmul.f32 %v2096, %v2480
        %v2947 = vmul.f32 %v2098, %v2482
        %v2948 = vmul.f32 %v2100, %v2484
        %v2949 = vmul.f32 %v2102, %v2486
        %v2950 = vmul.f32 %v2104, %v2488
        %v2951 = vmul.f32 %v2106, %v2490
        %v2952 = vmul.f32 %v2108, %v2492
        %v2953 = vmul.f32 %v2110, %v2494
        %v2954 = vmul.f32 %v2112, %v2496
        %v2955 = vmul.f32 %v2114, %v2498
        %v2956 = vmul.f32 %v2116, %v2500
        %v2957 = vmul.f32 %v2118, %v2502
        %v2958 = vmul.f32 %v2120, %v2504
        %v2959 = vmul.f32 %v2122, %v2506
        %v2960 = vmul.f32 %v2124, %v2508
        %v2961 = vmul.f32 %v2126, %v2510
        %v2962 = vmul.f32 %v2128, %v2512
        %v2963 = vmul.f32 %v2130, %v2514
        %v2964 = vmul.f32 %v2132, %v2516
        %v2965 = vld [vmem:[%s8] sm:$0xff]
        %v2967 = vsel %vm1166, %v2837, 0
        %v2970 = vsel %vm1166, %v2838, 0
        %v2973 = vsel %vm1166, %v2839, 0
        %v2976 = vsel %vm1166, %v2840, 0
        %v2979 = vsel %vm1166, %v2841, 0
        %v2982 = vsel %vm1166, %v2842, 0
        %v2985 = vsel %vm1166, %v2843, 0
        %v2988 = vsel %vm1166, %v2844, 0
        %v2991 = vsel %vm1166, %v2845, 0
        %v2994 = vsel %vm1166, %v2846, 0
        %v2997 = vsel %vm1166, %v2847, 0
        %v3000 = vsel %vm1166, %v2848, 0
        %v3003 = vsel %vm1166, %v2849, 0
        %v3006 = vsel %vm1166, %v2850, 0
        %v3009 = vsel %vm1166, %v2851, 0
        %v3012 = vsel %vm1166, %v2852, 0
        %v3015 = vsel %vm1166, %v2853, 0
        %v3018 = vsel %vm1166, %v2854, 0
        %v3021 = vsel %vm1166, %v2855, 0
        %v3024 = vsel %vm1166, %v2856, 0
        %v3027 = vsel %vm1166, %v2857, 0
        %v3030 = vsel %vm1166, %v2858, 0
        %v3033 = vsel %vm1166, %v2859, 0
        %v3036 = vsel %vm1166, %v2860, 0
        %v3039 = vsel %vm1166, %v2861, 0
        %v3042 = vsel %vm1166, %v2862, 0
        %v3045 = vsel %vm1166, %v2863, 0
        %v3048 = vsel %vm1166, %v2864, 0
        %v3051 = vsel %vm1166, %v2865, 0
        %v3054 = vsel %vm1166, %v2866, 0
        %v3057 = vsel %vm1166, %v2867, 0
        %v3060 = vsel %vm1166, %v2868, 0
        %v3063 = vsel %vm1166, %v2869, 0
        %v3066 = vsel %vm1166, %v2870, 0
        %v3069 = vsel %vm1166, %v2871, 0
        %v3072 = vsel %vm1166, %v2872, 0
        %v3075 = vsel %vm1166, %v2873, 0
        %v3078 = vsel %vm1166, %v2874, 0
        %v3081 = vsel %vm1166, %v2875, 0
        %v3084 = vsel %vm1166, %v2876, 0
        %v3087 = vsel %vm1166, %v2877, 0
        %v3090 = vsel %vm1166, %v2878, 0
        %v3093 = vsel %vm1166, %v2879, 0
        %v3096 = vsel %vm1166, %v2880, 0
        %v3099 = vsel %vm1166, %v2881, 0
        %v3102 = vsel %vm1166, %v2882, 0
        %v3105 = vsel %vm1166, %v2883, 0
        %v3108 = vsel %vm1166, %v2884, 0
        %v3111 = vsel %vm1166, %v2885, 0
        %v3114 = vsel %vm1166, %v2886, 0
        %v3117 = vsel %vm1166, %v2887, 0
        %v3120 = vsel %vm1166, %v2888, 0
        %v3123 = vsel %vm1166, %v2889, 0
        %v3126 = vsel %vm1166, %v2890, 0
        %v3129 = vsel %vm1166, %v2891, 0
        %v3132 = vsel %vm1166, %v2892, 0
        %v3135 = vsel %vm1166, %v2893, 0
        %v3138 = vsel %vm1166, %v2894, 0
        %v3141 = vsel %vm1166, %v2895, 0
        %v3144 = vsel %vm1166, %v2896, 0
        %v3147 = vsel %vm1166, %v2897, 0
        %v3150 = vsel %vm1166, %v2898, 0
        %v3153 = vsel %vm1166, %v2899, 0
        %v3156 = vsel %vm1166, %v2900, 0
        %3158 = vmatprep.subr.mxu0 0.0
        %3159 = vmatpush1.msra.mxu0 %v2965
        %3160 = vmatprep.subr.mxu0 0.0
        %3161 = vmatpush1.msra.mxu0 0.0
        %3162 = vmatprep.subr.mxu0 0.0
        %3163 = vmatpush1.msra.mxu0 0.0
        %3164 = vmatprep.subr.mxu0 0.0
        %3165 = vmatpush1.msra.mxu0 0.0
        %3166 = vmatprep.subr.mxu0 0.0
        %3167 = vmatpush1.msra.mxu0 0.0
        %3168 = vmatprep.subr.mxu0 0.0
        %3169 = vmatpush1.msra.mxu0 0.0
        %3170 = vmatprep.subr.mxu0 0.0
        %3171 = vmatpush1.msra.mxu0 0.0
        %3172 = vmatprep.subr.mxu0 0.0
        %3173 = vmatpush1.msra.mxu0 0.0
        %3174 = vmatprep.subr.mxu0 0.0
        %3175 = vmatpush1.msra.mxu0 0.0
        %3176 = vmatprep.subr.mxu0 0.0
        %3177 = vmatpush1.msra.mxu0 0.0
        %3178 = vmatprep.subr.mxu0 0.0
        %3179 = vmatpush1.msra.mxu0 0.0
        %3180 = vmatprep.subr.mxu0 0.0
        %3181 = vmatpush1.msra.mxu0 0.0
        %3182 = vmatprep.subr.mxu0 0.0
        %3183 = vmatpush1.msra.mxu0 0.0
        %3184 = vmatprep.subr.mxu0 0.0
        %3185 = vmatpush1.msra.mxu0 0.0
        %3186 = vmatprep.subr.mxu0 0.0
        %3187 = vmatpush1.msra.mxu0 0.0
        %3188 = vmatprep.subr.mxu0 0.0
        %3189 = vmatpush1.msra.mxu0 0.0
        %3190 = vmatprep.subr.mxu0 0.0
        %3191 = vmatpush1.msra.mxu0 0.0
        %3192 = vmatprep.subr.mxu0 0.0
        %3193 = vmatpush1.msra.mxu0 0.0
        %3194 = vmatprep.subr.mxu0 0.0
        %3195 = vmatpush1.msra.mxu0 0.0
        %3196 = vmatprep.subr.mxu0 0.0
        %3197 = vmatpush1.msra.mxu0 0.0
        %3198 = vmatprep.subr.mxu0 0.0
        %3199 = vmatpush1.msra.mxu0 0.0
        %3200 = vmatprep.subr.mxu0 0.0
        %3201 = vmatpush1.msra.mxu0 0.0
        %3202 = vmatprep.subr.mxu0 0.0
        %3203 = vmatpush1.msra.mxu0 0.0
        %3204 = vmatprep.subr.mxu0 0.0
        %3205 = vmatpush1.msra.mxu0 0.0
        %3206 = vmatprep.subr.mxu0 0.0
        %3207 = vmatpush1.msra.mxu0 0.0
        %3208 = vmatprep.subr.mxu0 0.0
        %3209 = vmatpush1.msra.mxu0 0.0
        %3210 = vmatprep.subr.mxu0 0.0
        %3211 = vmatpush1.msra.mxu0 0.0
        %3212 = vmatprep.subr.mxu0 0.0
        %3213 = vmatpush1.msra.mxu0 0.0
        %3214 = vmatprep.subr.mxu0 0.0
        %3215 = vmatpush1.msra.mxu0 0.0
        %3216 = vmatprep.subr.mxu0 0.0
        %3217 = vmatpush1.msra.mxu0 0.0
        %3218 = vmatprep.subr.mxu0 0.0
        %3219 = vmatpush1.msra.mxu0 0.0
        %3220 = vmatprep.subr.mxu0 0.0
        %3221 = vmatpush1.msra.mxu0 0.0
        %3222 = vmatprep.mubr.f32.mxu0 0.0
        %3223 = vmatmul.mubr.f32.gmra.mrb[0].mxu0 %v2967
        %v3224 = vpop.f32.mrb[0].mxu0
        %v3225 = vadd.f32 0.0, %v3224
        %v3226 = vpop.f32.mrb[0].mxu0
        %3227 = vmatprep.mubr.f32.mxu0 0.0
        %3228 = vmatmul.mubr.f32.gmra.mrb[0].mxu0 %v2970
        %v3229 = vpop.f32.mrb[0].mxu0
        %v3230 = vadd.f32 0.0, %v3229
        %v3231 = vpop.f32.mrb[0].mxu0
        %3232 = vmatprep.mubr.f32.mxu0 0.0
        %3233 = vmatmul.mubr.f32.gmra.mrb[0].mxu0 %v2973
        %v3234 = vpop.f32.mrb[0].mxu0
        %v3235 = vadd.f32 0.0, %v3234
        %v3236 = vpop.f32.mrb[0].mxu0
        %3237 = vmatprep.mubr.f32.mxu0 0.0
        %3238 = vmatmul.mubr.f32.gmra.mrb[0].mxu0 %v2976
        %v3239 = vpop.f32.mrb[0].mxu0
        %v3240 = vadd.f32 0.0, %v3239
        %v3241 = vpop.f32.mrb[0].mxu0
        %3242 = vmatprep.mubr.f32.mxu0 0.0
        %3243 = vmatmul.mubr.f32.gmra.mrb[0].mxu0 %v2979
        %v3244 = vpop.f32.mrb[0].mxu0
        %v3245 = vadd.f32 0.0, %v3244
        %v3246 = vpop.f32.mrb[0].mxu0
        %3247 = vmatprep.mubr.f32.mxu0 0.0
        %3248 = vmatmul.mubr.f32.gmra.mrb[0].mxu0 %v2982
        %v3249 = vpop.f32.mrb[0].mxu0
        %v3250 = vadd.f32 0.0, %v3249
        %v3251 = vpop.f32.mrb[0].mxu0
        %3252 = vmatprep.mubr.f32.mxu0 0.0
        %3253 = vmatmul.mubr.f32.gmra.mrb[0].mxu0 %v2985
        %v3254 = vpop.f32.mrb[0].mxu0
        %v3255 = vadd.f32 0.0, %v3254
        %v3256 = vpop.f32.mrb[0].mxu0
        %3257 = vmatprep.mubr.f32.mxu0 0.0
        %3258 = vmatmul.mubr.f32.gmra.mrb[0].mxu0 %v2988
        %v3259 = vpop.f32.mrb[0].mxu0
        %v3260 = vadd.f32 0.0, %v3259
        %v3261 = vpop.f32.mrb[0].mxu0
        %3262 = vmatprep.mubr.f32.mxu0 0.0
        %3263 = vmatmul.mubr.f32.gmra.mrb[0].mxu0 %v2991
        %v3264 = vpop.f32.mrb[0].mxu0
        %v3265 = vadd.f32 0.0, %v3264
        %v3266 = vpop.f32.mrb[0].mxu0
        %3267 = vmatprep.mubr.f32.mxu0 0.0
        %3268 = vmatmul.mubr.f32.gmra.mrb[0].mxu0 %v2994
        %v3269 = vpop.f32.mrb[0].mxu0
        %v3270 = vadd.f32 0.0, %v3269
        %v3271 = vpop.f32.mrb[0].mxu0
        %3272 = vmatprep.mubr.f32.mxu0 0.0
        %3273 = vmatmul.mubr.f32.gmra.mrb[0].mxu0 %v2997
        %v3274 = vpop.f32.mrb[0].mxu0
        %v3275 = vadd.f32 0.0, %v3274
        %v3276 = vpop.f32.mrb[0].mxu0
        %3277 = vmatprep.mubr.f32.mxu0 0.0
        %3278 = vmatmul.mubr.f32.gmra.mrb[0].mxu0 %v3000
        %v3279 = vpop.f32.mrb[0].mxu0
        %v3280 = vadd.f32 0.0, %v3279
        %v3281 = vpop.f32.mrb[0].mxu0
        %3282 = vmatprep.mubr.f32.mxu0 0.0
        %3283 = vmatmul.mubr.f32.gmra.mrb[0].mxu0 %v3003
        %v3284 = vpop.f32.mrb[0].mxu0
        %v3285 = vadd.f32 0.0, %v3284
        %v3286 = vpop.f32.mrb[0].mxu0
        %3287 = vmatprep.mubr.f32.mxu0 0.0
        %3288 = vmatmul.mubr.f32.gmra.mrb[0].mxu0 %v3006
        %v3289 = vpop.f32.mrb[0].mxu0
        %v3290 = vadd.f32 0.0, %v3289
        %v3291 = vpop.f32.mrb[0].mxu0
        %3292 = vmatprep.mubr.f32.mxu0 0.0
        %3293 = vmatmul.mubr.f32.gmra.mrb[0].mxu0 %v3009
        %v3294 = vpop.f32.mrb[0].mxu0
        %v3295 = vadd.f32 0.0, %v3294
        %v3296 = vpop.f32.mrb[0].mxu0
        %3297 = vmatprep.mubr.f32.mxu0 0.0
        %3298 = vmatmul.mubr.f32.gmra.mrb[0].mxu0 %v3012
        %v3299 = vpop.f32.mrb[0].mxu0
        %v3300 = vadd.f32 0.0, %v3299
        %v3301 = vpop.f32.mrb[0].mxu0
        %3302 = vmatprep.mubr.f32.mxu0 0.0
        %3303 = vmatmul.mubr.f32.gmra.mrb[0].mxu0 %v3015
        %v3304 = vpop.f32.mrb[0].mxu0
        %v3305 = vadd.f32 0.0, %v3304
        %v3306 = vpop.f32.mrb[0].mxu0
        %3307 = vmatprep.mubr.f32.mxu0 0.0
        %3308 = vmatmul.mubr.f32.gmra.mrb[0].mxu0 %v3018
        %v3309 = vpop.f32.mrb[0].mxu0
        %v3310 = vadd.f32 0.0, %v3309
        %v3311 = vpop.f32.mrb[0].mxu0
        %3312 = vmatprep.mubr.f32.mxu0 0.0
        %3313 = vmatmul.mubr.f32.gmra.mrb[0].mxu0 %v3021
        %v3314 = vpop.f32.mrb[0].mxu0
        %v3315 = vadd.f32 0.0, %v3314
        %v3316 = vpop.f32.mrb[0].mxu0
        %3317 = vmatprep.mubr.f32.mxu0 0.0
        %3318 = vmatmul.mubr.f32.gmra.mrb[0].mxu0 %v3024
        %v3319 = vpop.f32.mrb[0].mxu0
        %v3320 = vadd.f32 0.0, %v3319
        %v3321 = vpop.f32.mrb[0].mxu0
        %3322 = vmatprep.mubr.f32.mxu0 0.0
        %3323 = vmatmul.mubr.f32.gmra.mrb[0].mxu0 %v3027
        %v3324 = vpop.f32.mrb[0].mxu0
        %v3325 = vadd.f32 0.0, %v3324
        %v3326 = vpop.f32.mrb[0].mxu0
        %3327 = vmatprep.mubr.f32.mxu0 0.0
        %3328 = vmatmul.mubr.f32.gmra.mrb[0].mxu0 %v3030
        %v3329 = vpop.f32.mrb[0].mxu0
        %v3330 = vadd.f32 0.0, %v3329
        %v3331 = vpop.f32.mrb[0].mxu0
        %3332 = vmatprep.mubr.f32.mxu0 0.0
        %3333 = vmatmul.mubr.f32.gmra.mrb[0].mxu0 %v3033
        %v3334 = vpop.f32.mrb[0].mxu0
        %v3335 = vadd.f32 0.0, %v3334
        %v3336 = vpop.f32.mrb[0].mxu0
        %3337 = vmatprep.mubr.f32.mxu0 0.0
        %3338 = vmatmul.mubr.f32.gmra.mrb[0].mxu0 %v3036
        %v3339 = vpop.f32.mrb[0].mxu0
        %v3340 = vadd.f32 0.0, %v3339
        %v3341 = vpop.f32.mrb[0].mxu0
        %3342 = vmatprep.mubr.f32.mxu0 0.0
        %3343 = vmatmul.mubr.f32.gmra.mrb[0].mxu0 %v3039
        %v3344 = vpop.f32.mrb[0].mxu0
        %v3345 = vadd.f32 0.0, %v3344
        %v3346 = vpop.f32.mrb[0].mxu0
        %3347 = vmatprep.mubr.f32.mxu0 0.0
        %3348 = vmatmul.mubr.f32.gmra.mrb[0].mxu0 %v3042
        %v3349 = vpop.f32.mrb[0].mxu0
        %v3350 = vadd.f32 0.0, %v3349
        %v3351 = vpop.f32.mrb[0].mxu0
        %3352 = vmatprep.mubr.f32.mxu0 0.0
        %3353 = vmatmul.mubr.f32.gmra.mrb[0].mxu0 %v3045
        %v3354 = vpop.f32.mrb[0].mxu0
        %v3355 = vadd.f32 0.0, %v3354
        %v3356 = vpop.f32.mrb[0].mxu0
        %3357 = vmatprep.mubr.f32.mxu0 0.0
        %3358 = vmatmul.mubr.f32.gmra.mrb[0].mxu0 %v3048
        %v3359 = vpop.f32.mrb[0].mxu0
        %v3360 = vadd.f32 0.0, %v3359
        %v3361 = vpop.f32.mrb[0].mxu0
        %3362 = vmatprep.mubr.f32.mxu0 0.0
        %3363 = vmatmul.mubr.f32.gmra.mrb[0].mxu0 %v3051
        %v3364 = vpop.f32.mrb[0].mxu0
        %v3365 = vadd.f32 0.0, %v3364
        %v3366 = vpop.f32.mrb[0].mxu0
        %3367 = vmatprep.mubr.f32.mxu0 0.0
        %3368 = vmatmul.mubr.f32.gmra.mrb[0].mxu0 %v3054
        %v3369 = vpop.f32.mrb[0].mxu0
        %v3370 = vadd.f32 0.0, %v3369
        %v3371 = vpop.f32.mrb[0].mxu0
        %3372 = vmatprep.mubr.f32.mxu0 0.0
        %3373 = vmatmul.mubr.f32.gmra.mrb[0].mxu0 %v3057
        %v3374 = vpop.f32.mrb[0].mxu0
        %v3375 = vadd.f32 0.0, %v3374
        %v3376 = vpop.f32.mrb[0].mxu0
        %3377 = vmatprep.mubr.f32.mxu0 0.0
        %3378 = vmatmul.mubr.f32.gmra.mrb[0].mxu0 %v3060
        %v3379 = vpop.f32.mrb[0].mxu0
        %v3380 = vadd.f32 0.0, %v3379
        %v3381 = vpop.f32.mrb[0].mxu0
        %3382 = vmatprep.mubr.f32.mxu0 0.0
        %3383 = vmatmul.mubr.f32.gmra.mrb[0].mxu0 %v3063
        %v3384 = vpop.f32.mrb[0].mxu0
        %v3385 = vadd.f32 0.0, %v3384
        %v3386 = vpop.f32.mrb[0].mxu0
        %3387 = vmatprep.mubr.f32.mxu0 0.0
        %3388 = vmatmul.mubr.f32.gmra.mrb[0].mxu0 %v3066
        %v3389 = vpop.f32.mrb[0].mxu0
        %v3390 = vadd.f32 0.0, %v3389
        %v3391 = vpop.f32.mrb[0].mxu0
        %3392 = vmatprep.mubr.f32.mxu0 0.0
        %3393 = vmatmul.mubr.f32.gmra.mrb[0].mxu0 %v3069
        %v3394 = vpop.f32.mrb[0].mxu0
        %v3395 = vadd.f32 0.0, %v3394
        %v3396 = vpop.f32.mrb[0].mxu0
        %3397 = vmatprep.mubr.f32.mxu0 0.0
        %3398 = vmatmul.mubr.f32.gmra.mrb[0].mxu0 %v3072
        %v3399 = vpop.f32.mrb[0].mxu0
        %v3400 = vadd.f32 0.0, %v3399
        %v3401 = vpop.f32.mrb[0].mxu0
        %3402 = vmatprep.mubr.f32.mxu0 0.0
        %3403 = vmatmul.mubr.f32.gmra.mrb[0].mxu0 %v3075
        %v3404 = vpop.f32.mrb[0].mxu0
        %v3405 = vadd.f32 0.0, %v3404
        %v3406 = vpop.f32.mrb[0].mxu0
        %3407 = vmatprep.mubr.f32.mxu0 0.0
        %3408 = vmatmul.mubr.f32.gmra.mrb[0].mxu0 %v3078
        %v3409 = vpop.f32.mrb[0].mxu0
        %v3410 = vadd.f32 0.0, %v3409
        %v3411 = vpop.f32.mrb[0].mxu0
        %3412 = vmatprep.mubr.f32.mxu0 0.0
        %3413 = vmatmul.mubr.f32.gmra.mrb[0].mxu0 %v3081
        %v3414 = vpop.f32.mrb[0].mxu0
        %v3415 = vadd.f32 0.0, %v3414
        %v3416 = vpop.f32.mrb[0].mxu0
        %3417 = vmatprep.mubr.f32.mxu0 0.0
        %3418 = vmatmul.mubr.f32.gmra.mrb[0].mxu0 %v3084
        %v3419 = vpop.f32.mrb[0].mxu0
        %v3420 = vadd.f32 0.0, %v3419
        %v3421 = vpop.f32.mrb[0].mxu0
        %3422 = vmatprep.mubr.f32.mxu0 0.0
        %3423 = vmatmul.mubr.f32.gmra.mrb[0].mxu0 %v3087
        %v3424 = vpop.f32.mrb[0].mxu0
        %v3425 = vadd.f32 0.0, %v3424
        %v3426 = vpop.f32.mrb[0].mxu0
        %3427 = vmatprep.mubr.f32.mxu0 0.0
        %3428 = vmatmul.mubr.f32.gmra.mrb[0].mxu0 %v3090
        %v3429 = vpop.f32.mrb[0].mxu0
        %v3430 = vadd.f32 0.0, %v3429
        %v3431 = vpop.f32.mrb[0].mxu0
        %3432 = vmatprep.mubr.f32.mxu0 0.0
        %3433 = vmatmul.mubr.f32.gmra.mrb[0].mxu0 %v3093
        %v3434 = vpop.f32.mrb[0].mxu0
        %v3435 = vadd.f32 0.0, %v3434
        %v3436 = vpop.f32.mrb[0].mxu0
        %3437 = vmatprep.mubr.f32.mxu0 0.0
        %3438 = vmatmul.mubr.f32.gmra.mrb[0].mxu0 %v3096
        %v3439 = vpop.f32.mrb[0].mxu0
        %v3440 = vadd.f32 0.0, %v3439
        %v3441 = vpop.f32.mrb[0].mxu0
        %3442 = vmatprep.mubr.f32.mxu0 0.0
        %3443 = vmatmul.mubr.f32.gmra.mrb[0].mxu0 %v3099
        %v3444 = vpop.f32.mrb[0].mxu0
        %v3445 = vadd.f32 0.0, %v3444
        %v3446 = vpop.f32.mrb[0].mxu0
        %3447 = vmatprep.mubr.f32.mxu0 0.0
        %3448 = vmatmul.mubr.f32.gmra.mrb[0].mxu0 %v3102
        %v3449 = vpop.f32.mrb[0].mxu0
        %v3450 = vadd.f32 0.0, %v3449
        %v3451 = vpop.f32.mrb[0].mxu0
        %3452 = vmatprep.mubr.f32.mxu0 0.0
        %3453 = vmatmul.mubr.f32.gmra.mrb[0].mxu0 %v3105
        %v3454 = vpop.f32.mrb[0].mxu0
        %v3455 = vadd.f32 0.0, %v3454
        %v3456 = vpop.f32.mrb[0].mxu0
        %3457 = vmatprep.mubr.f32.mxu0 0.0
        %3458 = vmatmul.mubr.f32.gmra.mrb[0].mxu0 %v3108
        %v3459 = vpop.f32.mrb[0].mxu0
        %v3460 = vadd.f32 0.0, %v3459
        %v3461 = vpop.f32.mrb[0].mxu0
        %3462 = vmatprep.mubr.f32.mxu0 0.0
        %3463 = vmatmul.mubr.f32.gmra.mrb[0].mxu0 %v3111
        %v3464 = vpop.f32.mrb[0].mxu0
        %v3465 = vadd.f32 0.0, %v3464
        %v3466 = vpop.f32.mrb[0].mxu0
        %3467 = vmatprep.mubr.f32.mxu0 0.0
        %3468 = vmatmul.mubr.f32.gmra.mrb[0].mxu0 %v3114
        %v3469 = vpop.f32.mrb[0].mxu0
        %v3470 = vadd.f32 0.0, %v3469
        %v3471 = vpop.f32.mrb[0].mxu0
        %3472 = vmatprep.mubr.f32.mxu0 0.0
        %3473 = vmatmul.mubr.f32.gmra.mrb[0].mxu0 %v3117
        %v3474 = vpop.f32.mrb[0].mxu0
        %v3475 = vadd.f32 0.0, %v3474
        %v3476 = vpop.f32.mrb[0].mxu0
        %3477 = vmatprep.mubr.f32.mxu0 0.0
        %3478 = vmatmul.mubr.f32.gmra.mrb[0].mxu0 %v3120
        %v3479 = vpop.f32.mrb[0].mxu0
        %v3480 = vadd.f32 0.0, %v3479
        %v3481 = vpop.f32.mrb[0].mxu0
        %3482 = vmatprep.mubr.f32.mxu0 0.0
        %3483 = vmatmul.mubr.f32.gmra.mrb[0].mxu0 %v3123
        %v3484 = vpop.f32.mrb[0].mxu0
        %v3485 = vadd.f32 0.0, %v3484
        %v3486 = vpop.f32.mrb[0].mxu0
        %3487 = vmatprep.mubr.f32.mxu0 0.0
        %3488 = vmatmul.mubr.f32.gmra.mrb[0].mxu0 %v3126
        %v3489 = vpop.f32.mrb[0].mxu0
        %v3490 = vadd.f32 0.0, %v3489
        %v3491 = vpop.f32.mrb[0].mxu0
        %3492 = vmatprep.mubr.f32.mxu0 0.0
        %3493 = vmatmul.mubr.f32.gmra.mrb[0].mxu0 %v3129
        %v3494 = vpop.f32.mrb[0].mxu0
        %v3495 = vadd.f32 0.0, %v3494
        %v3496 = vpop.f32.mrb[0].mxu0
        %3497 = vmatprep.mubr.f32.mxu0 0.0
        %3498 = vmatmul.mubr.f32.gmra.mrb[0].mxu0 %v3132
        %v3499 = vpop.f32.mrb[0].mxu0
        %v3500 = vadd.f32 0.0, %v3499
        %v3501 = vpop.f32.mrb[0].mxu0
        %3502 = vmatprep.mubr.f32.mxu0 0.0
        %3503 = vmatmul.mubr.f32.gmra.mrb[0].mxu0 %v3135
        %v3504 = vpop.f32.mrb[0].mxu0
        %v3505 = vadd.f32 0.0, %v3504
        %v3506 = vpop.f32.mrb[0].mxu0
        %3507 = vmatprep.mubr.f32.mxu0 0.0
        %3508 = vmatmul.mubr.f32.gmra.mrb[0].mxu0 %v3138
        %v3509 = vpop.f32.mrb[0].mxu0
        %v3510 = vadd.f32 0.0, %v3509
        %v3511 = vpop.f32.mrb[0].mxu0
        %3512 = vmatprep.mubr.f32.mxu0 0.0
        %3513 = vmatmul.mubr.f32.gmra.mrb[0].mxu0 %v3141
        %v3514 = vpop.f32.mrb[0].mxu0
        %v3515 = vadd.f32 0.0, %v3514
        %v3516 = vpop.f32.mrb[0].mxu0
        %3517 = vmatprep.mubr.f32.mxu0 0.0
        %3518 = vmatmul.mubr.f32.gmra.mrb[0].mxu0 %v3144
        %v3519 = vpop.f32.mrb[0].mxu0
        %v3520 = vadd.f32 0.0, %v3519
        %v3521 = vpop.f32.mrb[0].mxu0
        %3522 = vmatprep.mubr.f32.mxu0 0.0
        %3523 = vmatmul.mubr.f32.gmra.mrb[0].mxu0 %v3147
        %v3524 = vpop.f32.mrb[0].mxu0
        %v3525 = vadd.f32 0.0, %v3524
        %v3526 = vpop.f32.mrb[0].mxu0
        %3527 = vmatprep.mubr.f32.mxu0 0.0
        %3528 = vmatmul.mubr.f32.gmra.mrb[0].mxu0 %v3150
        %v3529 = vpop.f32.mrb[0].mxu0
        %v3530 = vadd.f32 0.0, %v3529
        %v3531 = vpop.f32.mrb[0].mxu0
        %3532 = vmatprep.mubr.f32.mxu0 0.0
        %3533 = vmatmul.mubr.f32.gmra.mrb[0].mxu0 %v3153
        %v3534 = vpop.f32.mrb[0].mxu0
        %v3535 = vadd.f32 0.0, %v3534
        %v3536 = vpop.f32.mrb[0].mxu0
        %3537 = vmatprep.mubr.f32.mxu0 0.0
        %3538 = vmatmul.mubr.f32.gmra.mrb[0].mxu0 %v3156
        %v3539 = vpop.f32.mrb[0].mxu0
        %v3540 = vadd.f32 0.0, %v3539
        %v3541 = vpop.f32.mrb[0].mxu0
        %3542 = vdwg.mxu0
        %v3543 = vmul.f32 %v512, %v3225
        %v3544 = vmul.f32 %v513, %v3230
        %v3545 = vmul.f32 %v514, %v3235
        %v3546 = vmul.f32 %v515, %v3240
        %v3547 = vmul.f32 %v516, %v3245
        %v3548 = vmul.f32 %v517, %v3250
        %v3549 = vmul.f32 %v518, %v3255
        %v3550 = vmul.f32 %v519, %v3260
        %v3551 = vmul.f32 %v520, %v3265
        %v3552 = vmul.f32 %v521, %v3270
        %v3553 = vmul.f32 %v522, %v3275
        %v3554 = vmul.f32 %v523, %v3280
        %v3555 = vmul.f32 %v524, %v3285
        %v3556 = vmul.f32 %v525, %v3290
        %v3557 = vmul.f32 %v526, %v3295
        %v3558 = vmul.f32 %v527, %v3300
        %v3559 = vmul.f32 %v528, %v3305
        %v3560 = vmul.f32 %v529, %v3310
        %v3561 = vmul.f32 %v530, %v3315
        %v3562 = vmul.f32 %v531, %v3320
        %v3563 = vmul.f32 %v532, %v3325
        %v3564 = vmul.f32 %v533, %v3330
        %v3565 = vmul.f32 %v534, %v3335
        %v3566 = vmul.f32 %v535, %v3340
        %v3567 = vmul.f32 %v536, %v3345
        %v3568 = vmul.f32 %v537, %v3350
        %v3569 = vmul.f32 %v538, %v3355
        %v3570 = vmul.f32 %v539, %v3360
        %v3571 = vmul.f32 %v540, %v3365
        %v3572 = vmul.f32 %v541, %v3370
        %v3573 = vmul.f32 %v542, %v3375
        %v3574 = vmul.f32 %v543, %v3380
        %v3575 = vmul.f32 %v544, %v3385
        %v3576 = vmul.f32 %v545, %v3390
        %v3577 = vmul.f32 %v546, %v3395
        %v3578 = vmul.f32 %v547, %v3400
        %v3579 = vmul.f32 %v548, %v3405
        %v3580 = vmul.f32 %v549, %v3410
        %v3581 = vmul.f32 %v550, %v3415
        %v3582 = vmul.f32 %v551, %v3420
        %v3583 = vmul.f32 %v552, %v3425
        %v3584 = vmul.f32 %v553, %v3430
        %v3585 = vmul.f32 %v554, %v3435
        %v3586 = vmul.f32 %v555, %v3440
        %v3587 = vmul.f32 %v556, %v3445
        %v3588 = vmul.f32 %v557, %v3450
        %v3589 = vmul.f32 %v558, %v3455
        %v3590 = vmul.f32 %v559, %v3460
        %v3591 = vmul.f32 %v560, %v3465
        %v3592 = vmul.f32 %v561, %v3470
        %v3593 = vmul.f32 %v562, %v3475
        %v3594 = vmul.f32 %v563, %v3480
        %v3595 = vmul.f32 %v564, %v3485
        %v3596 = vmul.f32 %v565, %v3490
        %v3597 = vmul.f32 %v566, %v3495
        %v3598 = vmul.f32 %v567, %v3500
        %v3599 = vmul.f32 %v568, %v3505
        %v3600 = vmul.f32 %v569, %v3510
        %v3601 = vmul.f32 %v570, %v3515
        %v3602 = vmul.f32 %v571, %v3520
        %v3603 = vmul.f32 %v572, %v3525
        %v3604 = vmul.f32 %v573, %v3530
        %v3605 = vmul.f32 %v574, %v3535
        %v3606 = vmul.f32 %v575, %v3540
        %v3607 = vpack.c.bf16 %v3544, %v3543
        %v3608 = vpack.c.bf16 %v3546, %v3545
        %v3609 = vpack.c.bf16 %v3548, %v3547
        %v3610 = vpack.c.bf16 %v3550, %v3549
        %v3611 = vpack.c.bf16 %v3552, %v3551
        %v3612 = vpack.c.bf16 %v3554, %v3553
        %v3613 = vpack.c.bf16 %v3556, %v3555
        %v3614 = vpack.c.bf16 %v3558, %v3557
        %v3615 = vpack.c.bf16 %v3560, %v3559
        %v3616 = vpack.c.bf16 %v3562, %v3561
        %v3617 = vpack.c.bf16 %v3564, %v3563
        %v3618 = vpack.c.bf16 %v3566, %v3565
        %v3619 = vpack.c.bf16 %v3568, %v3567
        %v3620 = vpack.c.bf16 %v3570, %v3569
        %v3621 = vpack.c.bf16 %v3572, %v3571
        %v3622 = vpack.c.bf16 %v3574, %v3573
        %v3623 = vpack.c.bf16 %v3576, %v3575
        %v3624 = vpack.c.bf16 %v3578, %v3577
        %v3625 = vpack.c.bf16 %v3580, %v3579
        %v3626 = vpack.c.bf16 %v3582, %v3581
        %v3627 = vpack.c.bf16 %v3584, %v3583
        %v3628 = vpack.c.bf16 %v3586, %v3585
        %v3629 = vpack.c.bf16 %v3588, %v3587
        %v3630 = vpack.c.bf16 %v3590, %v3589
        %v3631 = vpack.c.bf16 %v3592, %v3591
        %v3632 = vpack.c.bf16 %v3594, %v3593
        %v3633 = vpack.c.bf16 %v3596, %v3595
        %v3634 = vpack.c.bf16 %v3598, %v3597
        %v3635 = vpack.c.bf16 %v3600, %v3599
        %v3636 = vpack.c.bf16 %v3602, %v3601
        %v3637 = vpack.c.bf16 %v3604, %v3603
        %v3638 = vpack.c.bf16 %v3606, %v3605
        %v3639 = vld [vmem:[%s7] sm:$0xf]
        %v3640 = vld [vmem:[%s7 + $0x4] sm:$0xf]
        %v3641 = vld [vmem:[%s7 + $0x8] sm:$0xf]
        %v3642 = vld [vmem:[%s7 + $0xc] sm:$0xf]
        %v3643 = vld [vmem:[%s503] sm:$0xff]
        %3644 = vmatprep.subr.mxu0 0.0
        %3645 = vmatpush1.msra.mxu0 %v3643
        %3646 = vmatprep.subr.mxu0 0.0
        %3647 = vmatpush1.msra.mxu0 0.0
        %3648 = vmatprep.subr.mxu0 0.0
        %3649 = vmatpush1.msra.mxu0 0.0
        %3650 = vmatprep.subr.mxu0 0.0
        %3651 = vmatpush1.msra.mxu0 0.0
        %3652 = vmatprep.subr.mxu0 0.0
        %3653 = vmatpush1.msra.mxu0 0.0
        %3654 = vmatprep.subr.mxu0 0.0
        %3655 = vmatpush1.msra.mxu0 0.0
        %3656 = vmatprep.subr.mxu0 0.0
        %3657 = vmatpush1.msra.mxu0 0.0
        %3658 = vmatprep.subr.mxu0 0.0
        %3659 = vmatpush1.msra.mxu0 0.0
        %3660 = vmatprep.subr.mxu0 0.0
        %3661 = vmatpush1.msra.mxu0 0.0
        %3662 = vmatprep.subr.mxu0 0.0
        %3663 = vmatpush1.msra.mxu0 0.0
        %3664 = vmatprep.subr.mxu0 0.0
        %3665 = vmatpush1.msra.mxu0 0.0
        %3666 = vmatprep.subr.mxu0 0.0
        %3667 = vmatpush1.msra.mxu0 0.0
        %3668 = vmatprep.subr.mxu0 0.0
        %3669 = vmatpush1.msra.mxu0 0.0
        %3670 = vmatprep.subr.mxu0 0.0
        %3671 = vmatpush1.msra.mxu0 0.0
        %3672 = vmatprep.subr.mxu0 0.0
        %3673 = vmatpush1.msra.mxu0 0.0
        %3674 = vmatprep.subr.mxu0 0.0
        %3675 = vmatpush1.msra.mxu0 0.0
        %3676 = vmatprep.subr.mxu0 0.0
        %3677 = vmatpush1.msra.mxu0 0.0
        %3678 = vmatprep.subr.mxu0 0.0
        %3679 = vmatpush1.msra.mxu0 0.0
        %3680 = vmatprep.subr.mxu0 0.0
        %3681 = vmatpush1.msra.mxu0 0.0
        %3682 = vmatprep.subr.mxu0 0.0
        %3683 = vmatpush1.msra.mxu0 0.0
        %3684 = vmatprep.subr.mxu0 0.0
        %3685 = vmatpush1.msra.mxu0 0.0
        %3686 = vmatprep.subr.mxu0 0.0
        %3687 = vmatpush1.msra.mxu0 0.0
        %3688 = vmatprep.subr.mxu0 0.0
        %3689 = vmatpush1.msra.mxu0 0.0
        %3690 = vmatprep.subr.mxu0 0.0
        %3691 = vmatpush1.msra.mxu0 0.0
        %3692 = vmatprep.subr.mxu0 0.0
        %3693 = vmatpush1.msra.mxu0 0.0
        %3694 = vmatprep.subr.mxu0 0.0
        %3695 = vmatpush1.msra.mxu0 0.0
        %3696 = vmatprep.subr.mxu0 0.0
        %3697 = vmatpush1.msra.mxu0 0.0
        %3698 = vmatprep.subr.mxu0 0.0
        %3699 = vmatpush1.msra.mxu0 0.0
        %3700 = vmatprep.subr.mxu0 0.0
        %3701 = vmatpush1.msra.mxu0 0.0
        %3702 = vmatprep.subr.mxu0 0.0
        %3703 = vmatpush1.msra.mxu0 0.0
        %3704 = vmatprep.subr.mxu0 0.0
        %3705 = vmatpush1.msra.mxu0 0.0
        %3706 = vmatprep.subr.mxu0 0.0
        %3707 = vmatpush1.msra.mxu0 0.0
        %3708 = vmatprep.mubr.f32.mxu0 0.0
        %3709 = vmatmul.mubr.f32.gmra.mrb[0].mxu0 %v2967
        %v3710 = vpop.f32.mrb[0].mxu0
        %v3711 = vadd.f32 0.0, %v3710
        %v3712 = vpop.f32.mrb[0].mxu0
        %3713 = vmatprep.mubr.f32.mxu0 0.0
        %3714 = vmatmul.mubr.f32.gmra.mrb[0].mxu0 %v2970
        %v3715 = vpop.f32.mrb[0].mxu0
        %v3716 = vadd.f32 0.0, %v3715
        %v3717 = vpop.f32.mrb[0].mxu0
        %3718 = vmatprep.mubr.f32.mxu0 0.0
        %3719 = vmatmul.mubr.f32.gmra.mrb[0].mxu0 %v2973
        %v3720 = vpop.f32.mrb[0].mxu0
        %v3721 = vadd.f32 0.0, %v3720
        %v3722 = vpop.f32.mrb[0].mxu0
        %3723 = vmatprep.mubr.f32.mxu0 0.0
        %3724 = vmatmul.mubr.f32.gmra.mrb[0].mxu0 %v2976
        %v3725 = vpop.f32.mrb[0].mxu0
        %v3726 = vadd.f32 0.0, %v3725
        %v3727 = vpop.f32.mrb[0].mxu0
        %3728 = vmatprep.mubr.f32.mxu0 0.0
        %3729 = vmatmul.mubr.f32.gmra.mrb[0].mxu0 %v2979
        %v3730 = vpop.f32.mrb[0].mxu0
        %v3731 = vadd.f32 0.0, %v3730
        %v3732 = vpop.f32.mrb[0].mxu0
        %3733 = vmatprep.mubr.f32.mxu0 0.0
        %3734 = vmatmul.mubr.f32.gmra.mrb[0].mxu0 %v2982
        %v3735 = vpop.f32.mrb[0].mxu0
        %v3736 = vadd.f32 0.0, %v3735
        %v3737 = vpop.f32.mrb[0].mxu0
        %3738 = vmatprep.mubr.f32.mxu0 0.0
        %3739 = vmatmul.mubr.f32.gmra.mrb[0].mxu0 %v2985
        %v3740 = vpop.f32.mrb[0].mxu0
        %v3741 = vadd.f32 0.0, %v3740
        %v3742 = vpop.f32.mrb[0].mxu0
        %3743 = vmatprep.mubr.f32.mxu0 0.0
        %3744 = vmatmul.mubr.f32.gmra.mrb[0].mxu0 %v2988
        %v3745 = vpop.f32.mrb[0].mxu0
        %v3746 = vadd.f32 0.0, %v3745
        %v3747 = vpop.f32.mrb[0].mxu0
        %3748 = vmatprep.mubr.f32.mxu0 0.0
        %3749 = vmatmul.mubr.f32.gmra.mrb[0].mxu0 %v2991
        %v3750 = vpop.f32.mrb[0].mxu0
        %v3751 = vadd.f32 0.0, %v3750
        %v3752 = vpop.f32.mrb[0].mxu0
        %3753 = vmatprep.mubr.f32.mxu0 0.0
        %3754 = vmatmul.mubr.f32.gmra.mrb[0].mxu0 %v2994
        %v3755 = vpop.f32.mrb[0].mxu0
        %v3756 = vadd.f32 0.0, %v3755
        %v3757 = vpop.f32.mrb[0].mxu0
        %3758 = vmatprep.mubr.f32.mxu0 0.0
        %3759 = vmatmul.mubr.f32.gmra.mrb[0].mxu0 %v2997
        %v3760 = vpop.f32.mrb[0].mxu0
        %v3761 = vadd.f32 0.0, %v3760
        %v3762 = vpop.f32.mrb[0].mxu0
        %3763 = vmatprep.mubr.f32.mxu0 0.0
        %3764 = vmatmul.mubr.f32.gmra.mrb[0].mxu0 %v3000
        %v3765 = vpop.f32.mrb[0].mxu0
        %v3766 = vadd.f32 0.0, %v3765
        %v3767 = vpop.f32.mrb[0].mxu0
        %3768 = vmatprep.mubr.f32.mxu0 0.0
        %3769 = vmatmul.mubr.f32.gmra.mrb[0].mxu0 %v3003
        %v3770 = vpop.f32.mrb[0].mxu0
        %v3771 = vadd.f32 0.0, %v3770
        %v3772 = vpop.f32.mrb[0].mxu0
        %3773 = vmatprep.mubr.f32.mxu0 0.0
        %3774 = vmatmul.mubr.f32.gmra.mrb[0].mxu0 %v3006
        %v3775 = vpop.f32.mrb[0].mxu0
        %v3776 = vadd.f32 0.0, %v3775
        %v3777 = vpop.f32.mrb[0].mxu0
        %3778 = vmatprep.mubr.f32.mxu0 0.0
        %3779 = vmatmul.mubr.f32.gmra.mrb[0].mxu0 %v3009
        %v3780 = vpop.f32.mrb[0].mxu0
        %v3781 = vadd.f32 0.0, %v3780
        %v3782 = vpop.f32.mrb[0].mxu0
        %3783 = vmatprep.mubr.f32.mxu0 0.0
        %3784 = vmatmul.mubr.f32.gmra.mrb[0].mxu0 %v3012
        %v3785 = vpop.f32.mrb[0].mxu0
        %v3786 = vadd.f32 0.0, %v3785
        %v3787 = vpop.f32.mrb[0].mxu0
        %3788 = vmatprep.mubr.f32.mxu0 0.0
        %3789 = vmatmul.mubr.f32.gmra.mrb[0].mxu0 %v3015
        %v3790 = vpop.f32.mrb[0].mxu0
        %v3791 = vadd.f32 0.0, %v3790
        %v3792 = vpop.f32.mrb[0].mxu0
        %3793 = vmatprep.mubr.f32.mxu0 0.0
        %3794 = vmatmul.mubr.f32.gmra.mrb[0].mxu0 %v3018
        %v3795 = vpop.f32.mrb[0].mxu0
        %v3796 = vadd.f32 0.0, %v3795
        %v3797 = vpop.f32.mrb[0].mxu0
        %3798 = vmatprep.mubr.f32.mxu0 0.0
        %3799 = vmatmul.mubr.f32.gmra.mrb[0].mxu0 %v3021
        %v3800 = vpop.f32.mrb[0].mxu0
        %v3801 = vadd.f32 0.0, %v3800
        %v3802 = vpop.f32.mrb[0].mxu0
        %3803 = vmatprep.mubr.f32.mxu0 0.0
        %3804 = vmatmul.mubr.f32.gmra.mrb[0].mxu0 %v3024
        %v3805 = vpop.f32.mrb[0].mxu0
        %v3806 = vadd.f32 0.0, %v3805
        %v3807 = vpop.f32.mrb[0].mxu0
        %3808 = vmatprep.mubr.f32.mxu0 0.0
        %3809 = vmatmul.mubr.f32.gmra.mrb[0].mxu0 %v3027
        %v3810 = vpop.f32.mrb[0].mxu0
        %v3811 = vadd.f32 0.0, %v3810
        %v3812 = vpop.f32.mrb[0].mxu0
        %3813 = vmatprep.mubr.f32.mxu0 0.0
        %3814 = vmatmul.mubr.f32.gmra.mrb[0].mxu0 %v3030
        %v3815 = vpop.f32.mrb[0].mxu0
        %v3816 = vadd.f32 0.0, %v3815
        %v3817 = vpop.f32.mrb[0].mxu0
        %3818 = vmatprep.mubr.f32.mxu0 0.0
        %3819 = vmatmul.mubr.f32.gmra.mrb[0].mxu0 %v3033
        %v3820 = vpop.f32.mrb[0].mxu0
        %v3821 = vadd.f32 0.0, %v3820
        %v3822 = vpop.f32.mrb[0].mxu0
        %3823 = vmatprep.mubr.f32.mxu0 0.0
        %3824 = vmatmul.mubr.f32.gmra.mrb[0].mxu0 %v3036
        %v3825 = vpop.f32.mrb[0].mxu0
        %v3826 = vadd.f32 0.0, %v3825
        %v3827 = vpop.f32.mrb[0].mxu0
        %3828 = vmatprep.mubr.f32.mxu0 0.0
        %3829 = vmatmul.mubr.f32.gmra.mrb[0].mxu0 %v3039
        %v3830 = vpop.f32.mrb[0].mxu0
        %v3831 = vadd.f32 0.0, %v3830
        %v3832 = vpop.f32.mrb[0].mxu0
        %3833 = vmatprep.mubr.f32.mxu0 0.0
        %3834 = vmatmul.mubr.f32.gmra.mrb[0].mxu0 %v3042
        %v3835 = vpop.f32.mrb[0].mxu0
        %v3836 = vadd.f32 0.0, %v3835
        %v3837 = vpop.f32.mrb[0].mxu0
        %3838 = vmatprep.mubr.f32.mxu0 0.0
        %3839 = vmatmul.mubr.f32.gmra.mrb[0].mxu0 %v3045
        %v3840 = vpop.f32.mrb[0].mxu0
        %v3841 = vadd.f32 0.0, %v3840
        %v3842 = vpop.f32.mrb[0].mxu0
        %3843 = vmatprep.mubr.f32.mxu0 0.0
        %3844 = vmatmul.mubr.f32.gmra.mrb[0].mxu0 %v3048
        %v3845 = vpop.f32.mrb[0].mxu0
        %v3846 = vadd.f32 0.0, %v3845
        %v3847 = vpop.f32.mrb[0].mxu0
        %3848 = vmatprep.mubr.f32.mxu0 0.0
        %3849 = vmatmul.mubr.f32.gmra.mrb[0].mxu0 %v3051
        %v3850 = vpop.f32.mrb[0].mxu0
        %v3851 = vadd.f32 0.0, %v3850
        %v3852 = vpop.f32.mrb[0].mxu0
        %3853 = vmatprep.mubr.f32.mxu0 0.0
        %3854 = vmatmul.mubr.f32.gmra.mrb[0].mxu0 %v3054
        %v3855 = vpop.f32.mrb[0].mxu0
        %v3856 = vadd.f32 0.0, %v3855
        %v3857 = vpop.f32.mrb[0].mxu0
        %3858 = vmatprep.mubr.f32.mxu0 0.0
        %3859 = vmatmul.mubr.f32.gmra.mrb[0].mxu0 %v3057
        %v3860 = vpop.f32.mrb[0].mxu0
        %v3861 = vadd.f32 0.0, %v3860
        %v3862 = vpop.f32.mrb[0].mxu0
        %3863 = vmatprep.mubr.f32.mxu0 0.0
        %3864 = vmatmul.mubr.f32.gmra.mrb[0].mxu0 %v3060
        %v3865 = vpop.f32.mrb[0].mxu0
        %v3866 = vadd.f32 0.0, %v3865
        %v3867 = vpop.f32.mrb[0].mxu0
        %3868 = vmatprep.mubr.f32.mxu0 0.0
        %3869 = vmatmul.mubr.f32.gmra.mrb[0].mxu0 %v3063
        %v3870 = vpop.f32.mrb[0].mxu0
        %v3871 = vadd.f32 0.0, %v3870
        %v3872 = vpop.f32.mrb[0].mxu0
        %3873 = vmatprep.mubr.f32.mxu0 0.0
        %3874 = vmatmul.mubr.f32.gmra.mrb[0].mxu0 %v3066
        %v3875 = vpop.f32.mrb[0].mxu0
        %v3876 = vadd.f32 0.0, %v3875
        %v3877 = vpop.f32.mrb[0].mxu0
        %3878 = vmatprep.mubr.f32.mxu0 0.0
        %3879 = vmatmul.mubr.f32.gmra.mrb[0].mxu0 %v3069
        %v3880 = vpop.f32.mrb[0].mxu0
        %v3881 = vadd.f32 0.0, %v3880
        %v3882 = vpop.f32.mrb[0].mxu0
        %3883 = vmatprep.mubr.f32.mxu0 0.0
        %3884 = vmatmul.mubr.f32.gmra.mrb[0].mxu0 %v3072
        %v3885 = vpop.f32.mrb[0].mxu0
        %v3886 = vadd.f32 0.0, %v3885
        %v3887 = vpop.f32.mrb[0].mxu0
        %3888 = vmatprep.mubr.f32.mxu0 0.0
        %3889 = vmatmul.mubr.f32.gmra.mrb[0].mxu0 %v3075
        %v3890 = vpop.f32.mrb[0].mxu0
        %v3891 = vadd.f32 0.0, %v3890
        %v3892 = vpop.f32.mrb[0].mxu0
        %3893 = vmatprep.mubr.f32.mxu0 0.0
        %3894 = vmatmul.mubr.f32.gmra.mrb[0].mxu0 %v3078
        %v3895 = vpop.f32.mrb[0].mxu0
        %v3896 = vadd.f32 0.0, %v3895
        %v3897 = vpop.f32.mrb[0].mxu0
        %3898 = vmatprep.mubr.f32.mxu0 0.0
        %3899 = vmatmul.mubr.f32.gmra.mrb[0].mxu0 %v3081
        %v3900 = vpop.f32.mrb[0].mxu0
        %v3901 = vadd.f32 0.0, %v3900
        %v3902 = vpop.f32.mrb[0].mxu0
        %3903 = vmatprep.mubr.f32.mxu0 0.0
        %3904 = vmatmul.mubr.f32.gmra.mrb[0].mxu0 %v3084
        %v3905 = vpop.f32.mrb[0].mxu0
        %v3906 = vadd.f32 0.0, %v3905
        %v3907 = vpop.f32.mrb[0].mxu0
        %3908 = vmatprep.mubr.f32.mxu0 0.0
        %3909 = vmatmul.mubr.f32.gmra.mrb[0].mxu0 %v3087
        %v3910 = vpop.f32.mrb[0].mxu0
        %v3911 = vadd.f32 0.0, %v3910
        %v3912 = vpop.f32.mrb[0].mxu0
        %3913 = vmatprep.mubr.f32.mxu0 0.0
        %3914 = vmatmul.mubr.f32.gmra.mrb[0].mxu0 %v3090
        %v3915 = vpop.f32.mrb[0].mxu0
        %v3916 = vadd.f32 0.0, %v3915
        %v3917 = vpop.f32.mrb[0].mxu0
        %3918 = vmatprep.mubr.f32.mxu0 0.0
        %3919 = vmatmul.mubr.f32.gmra.mrb[0].mxu0 %v3093
        %v3920 = vpop.f32.mrb[0].mxu0
        %v3921 = vadd.f32 0.0, %v3920
        %v3922 = vpop.f32.mrb[0].mxu0
        %3923 = vmatprep.mubr.f32.mxu0 0.0
        %3924 = vmatmul.mubr.f32.gmra.mrb[0].mxu0 %v3096
        %v3925 = vpop.f32.mrb[0].mxu0
        %v3926 = vadd.f32 0.0, %v3925
        %v3927 = vpop.f32.mrb[0].mxu0
        %3928 = vmatprep.mubr.f32.mxu0 0.0
        %3929 = vmatmul.mubr.f32.gmra.mrb[0].mxu0 %v3099
        %v3930 = vpop.f32.mrb[0].mxu0
        %v3931 = vadd.f32 0.0, %v3930
        %v3932 = vpop.f32.mrb[0].mxu0
        %3933 = vmatprep.mubr.f32.mxu0 0.0
        %3934 = vmatmul.mubr.f32.gmra.mrb[0].mxu0 %v3102
        %v3935 = vpop.f32.mrb[0].mxu0
        %v3936 = vadd.f32 0.0, %v3935
        %v3937 = vpop.f32.mrb[0].mxu0
        %3938 = vmatprep.mubr.f32.mxu0 0.0
        %3939 = vmatmul.mubr.f32.gmra.mrb[0].mxu0 %v3105
        %v3940 = vpop.f32.mrb[0].mxu0
        %v3941 = vadd.f32 0.0, %v3940
        %v3942 = vpop.f32.mrb[0].mxu0
        %3943 = vmatprep.mubr.f32.mxu0 0.0
        %3944 = vmatmul.mubr.f32.gmra.mrb[0].mxu0 %v3108
        %v3945 = vpop.f32.mrb[0].mxu0
        %v3946 = vadd.f32 0.0, %v3945
        %v3947 = vpop.f32.mrb[0].mxu0
        %3948 = vmatprep.mubr.f32.mxu0 0.0
        %3949 = vmatmul.mubr.f32.gmra.mrb[0].mxu0 %v3111
        %v3950 = vpop.f32.mrb[0].mxu0
        %v3951 = vadd.f32 0.0, %v3950
        %v3952 = vpop.f32.mrb[0].mxu0
        %3953 = vmatprep.mubr.f32.mxu0 0.0
        %3954 = vmatmul.mubr.f32.gmra.mrb[0].mxu0 %v3114
        %v3955 = vpop.f32.mrb[0].mxu0
        %v3956 = vadd.f32 0.0, %v3955
        %v3957 = vpop.f32.mrb[0].mxu0
        %3958 = vmatprep.mubr.f32.mxu0 0.0
        %3959 = vmatmul.mubr.f32.gmra.mrb[0].mxu0 %v3117
        %v3960 = vpop.f32.mrb[0].mxu0
        %v3961 = vadd.f32 0.0, %v3960
        %v3962 = vpop.f32.mrb[0].mxu0
        %3963 = vmatprep.mubr.f32.mxu0 0.0
        %3964 = vmatmul.mubr.f32.gmra.mrb[0].mxu0 %v3120
        %v3965 = vpop.f32.mrb[0].mxu0
        %v3966 = vadd.f32 0.0, %v3965
        %v3967 = vpop.f32.mrb[0].mxu0
        %3968 = vmatprep.mubr.f32.mxu0 0.0
        %3969 = vmatmul.mubr.f32.gmra.mrb[0].mxu0 %v3123
        %v3970 = vpop.f32.mrb[0].mxu0
        %v3971 = vadd.f32 0.0, %v3970
        %v3972 = vpop.f32.mrb[0].mxu0
        %3973 = vmatprep.mubr.f32.mxu0 0.0
        %3974 = vmatmul.mubr.f32.gmra.mrb[0].mxu0 %v3126
        %v3975 = vpop.f32.mrb[0].mxu0
        %v3976 = vadd.f32 0.0, %v3975
        %v3977 = vpop.f32.mrb[0].mxu0
        %3978 = vmatprep.mubr.f32.mxu0 0.0
        %3979 = vmatmul.mubr.f32.gmra.mrb[0].mxu0 %v3129
        %v3980 = vpop.f32.mrb[0].mxu0
        %v3981 = vadd.f32 0.0, %v3980
        %v3982 = vpop.f32.mrb[0].mxu0
        %3983 = vmatprep.mubr.f32.mxu0 0.0
        %3984 = vmatmul.mubr.f32.gmra.mrb[0].mxu0 %v3132
        %v3985 = vpop.f32.mrb[0].mxu0
        %v3986 = vadd.f32 0.0, %v3985
        %v3987 = vpop.f32.mrb[0].mxu0
        %3988 = vmatprep.mubr.f32.mxu0 0.0
        %3989 = vmatmul.mubr.f32.gmra.mrb[0].mxu0 %v3135
        %v3990 = vpop.f32.mrb[0].mxu0
        %v3991 = vadd.f32 0.0, %v3990
        %v3992 = vpop.f32.mrb[0].mxu0
        %3993 = vmatprep.mubr.f32.mxu0 0.0
        %3994 = vmatmul.mubr.f32.gmra.mrb[0].mxu0 %v3138
        %v3995 = vpop.f32.mrb[0].mxu0
        %v3996 = vadd.f32 0.0, %v3995
        %v3997 = vpop.f32.mrb[0].mxu0
        %3998 = vmatprep.mubr.f32.mxu0 0.0
        %3999 = vmatmul.mubr.f32.gmra.mrb[0].mxu0 %v3141
        %v4000 = vpop.f32.mrb[0].mxu0
        %v4001 = vadd.f32 0.0, %v4000
        %v4002 = vpop.f32.mrb[0].mxu0
        %4003 = vmatprep.mubr.f32.mxu0 0.0
        %4004 = vmatmul.mubr.f32.gmra.mrb[0].mxu0 %v3144
        %v4005 = vpop.f32.mrb[0].mxu0
        %v4006 = vadd.f32 0.0, %v4005
        %v4007 = vpop.f32.mrb[0].mxu0
        %4008 = vmatprep.mubr.f32.mxu0 0.0
        %4009 = vmatmul.mubr.f32.gmra.mrb[0].mxu0 %v3147
        %v4010 = vpop.f32.mrb[0].mxu0
        %v4011 = vadd.f32 0.0, %v4010
        %v4012 = vpop.f32.mrb[0].mxu0
        %4013 = vmatprep.mubr.f32.mxu0 0.0
        %4014 = vmatmul.mubr.f32.gmra.mrb[0].mxu0 %v3150
        %v4015 = vpop.f32.mrb[0].mxu0
        %v4016 = vadd.f32 0.0, %v4015
        %v4017 = vpop.f32.mrb[0].mxu0
        %4018 = vmatprep.mubr.f32.mxu0 0.0
        %4019 = vmatmul.mubr.f32.gmra.mrb[0].mxu0 %v3153
        %v4020 = vpop.f32.mrb[0].mxu0
        %v4021 = vadd.f32 0.0, %v4020
        %v4022 = vpop.f32.mrb[0].mxu0
        %4023 = vmatprep.mubr.f32.mxu0 0.0
        %4024 = vmatmul.mubr.f32.gmra.mrb[0].mxu0 %v3156
        %v4025 = vpop.f32.mrb[0].mxu0
        %v4026 = vadd.f32 0.0, %v4025
        %v4027 = vpop.f32.mrb[0].mxu0
        %4028 = vdwg.mxu0
        %v4033 = vunpack.c.l.b16 %v3639
        %v4034 = vunpack.c.l.b16 %v3640
        %v4035 = vunpack.c.l.b16 %v3641
        %v4036 = vunpack.c.l.b16 %v3642
        %v4037 = vpack.c.b16 %v4034, %v4033
        %v4038 = vpack.c.b16 %v4036, %v4035
        %v4042 = vsel %vm587, %v3607, 0
        %v4045 = vsel %vm587, %v3608, 0
        %v4048 = vsel %vm587, %v3609, 0
        %v4051 = vsel %vm587, %v3610, 0
        %v4054 = vsel %vm587, %v3611, 0
        %v4057 = vsel %vm587, %v3612, 0
        %v4060 = vsel %vm587, %v3613, 0
        %v4063 = vsel %vm587, %v3614, 0
        %v4066 = vsel %vm587, %v3615, 0
        %v4069 = vsel %vm587, %v3616, 0
        %v4072 = vsel %vm587, %v3617, 0
        %v4075 = vsel %vm587, %v3618, 0
        %v4078 = vsel %vm587, %v3619, 0
        %v4081 = vsel %vm587, %v3620, 0
        %v4084 = vsel %vm587, %v3621, 0
        %v4087 = vsel %vm587, %v3622, 0
        %v4090 = vsel %vm587, %v3623, 0
        %v4093 = vsel %vm587, %v3624, 0
        %v4096 = vsel %vm587, %v3625, 0
        %v4099 = vsel %vm587, %v3626, 0
        %v4102 = vsel %vm587, %v3627, 0
        %v4105 = vsel %vm587, %v3628, 0
        %v4108 = vsel %vm587, %v3629, 0
        %v4111 = vsel %vm587, %v3630, 0
        %v4114 = vsel %vm587, %v3631, 0
        %v4117 = vsel %vm587, %v3632, 0
        %v4120 = vsel %vm587, %v3633, 0
        %v4123 = vsel %vm587, %v3634, 0
        %v4126 = vsel %vm587, %v3635, 0
        %v4129 = vsel %vm587, %v3636, 0
        %v4132 = vsel %vm587, %v3637, 0
        %v4135 = vsel %vm587, %v3638, 0
        %4137 = vmatprep.subr.bf16.mxu0 0
        %4138 = vmatpush1.bf16.msra.mxu0 %v4037
        %4139 = vmatprep.subr.bf16.mxu0 0
        %4140 = vmatpush1.bf16.msra.mxu0 %v4038
        %4141 = vmatprep.subr.bf16.mxu0 0
        %4142 = vmatpush1.bf16.msra.mxu0 0
        %4143 = vmatprep.subr.bf16.mxu0 0
        %4144 = vmatpush1.bf16.msra.mxu0 0
        %4145 = vmatprep.subr.bf16.mxu0 0
        %4146 = vmatpush1.bf16.msra.mxu0 0
        %4147 = vmatprep.subr.bf16.mxu0 0
        %4148 = vmatpush1.bf16.msra.mxu0 0
        %4149 = vmatprep.subr.bf16.mxu0 0
        %4150 = vmatpush1.bf16.msra.mxu0 0
        %4151 = vmatprep.subr.bf16.mxu0 0
        %4152 = vmatpush1.bf16.msra.mxu0 0
        %4153 = vmatprep.subr.bf16.mxu0 0
        %4154 = vmatpush1.bf16.msra.mxu0 0
        %4155 = vmatprep.subr.bf16.mxu0 0
        %4156 = vmatpush1.bf16.msra.mxu0 0
        %4157 = vmatprep.subr.bf16.mxu0 0
        %4158 = vmatpush1.bf16.msra.mxu0 0
        %4159 = vmatprep.subr.bf16.mxu0 0
        %4160 = vmatpush1.bf16.msra.mxu0 0
        %4161 = vmatprep.subr.bf16.mxu0 0
        %4162 = vmatpush1.bf16.msra.mxu0 0
        %4163 = vmatprep.subr.bf16.mxu0 0
        %4164 = vmatpush1.bf16.msra.mxu0 0
        %4165 = vmatprep.subr.bf16.mxu0 0
        %4166 = vmatpush1.bf16.msra.mxu0 0
        %4167 = vmatprep.subr.bf16.mxu0 0
        %4168 = vmatpush1.bf16.msra.mxu0 0
        %4169 = vmatprep.mubr.bf16.mxu0 0
        %4170 = vmatmul.mubr.bf16.gmra.mrb[0].mxu0 %v4042
        %v4171 = vpop.f32.mrb[0].mxu0
        %v4172 = vadd.f32 %v3711, %v4171
        %v4173 = vpop.f32.mrb[0].mxu0
        %v4174 = vpop.f32.mrb[0].mxu0
        %v4175 = vadd.f32 %v3716, %v4174
        %v4176 = vpop.f32.mrb[0].mxu0
        %4177 = vmatprep.mubr.bf16.mxu0 0
        %4178 = vmatmul.mubr.bf16.gmra.mrb[0].mxu0 %v4045
        %v4179 = vpop.f32.mrb[0].mxu0
        %v4180 = vadd.f32 %v3721, %v4179
        %v4181 = vpop.f32.mrb[0].mxu0
        %v4182 = vpop.f32.mrb[0].mxu0
        %v4183 = vadd.f32 %v3726, %v4182
        %v4184 = vpop.f32.mrb[0].mxu0
        %4185 = vmatprep.mubr.bf16.mxu0 0
        %4186 = vmatmul.mubr.bf16.gmra.mrb[0].mxu0 %v4048
        %v4187 = vpop.f32.mrb[0].mxu0
        %v4188 = vadd.f32 %v3731, %v4187
        %v4189 = vpop.f32.mrb[0].mxu0
        %v4190 = vpop.f32.mrb[0].mxu0
        %v4191 = vadd.f32 %v3736, %v4190
        %v4192 = vpop.f32.mrb[0].mxu0
        %4193 = vmatprep.mubr.bf16.mxu0 0
        %4194 = vmatmul.mubr.bf16.gmra.mrb[0].mxu0 %v4051
        %v4195 = vpop.f32.mrb[0].mxu0
        %v4196 = vadd.f32 %v3741, %v4195
        %v4197 = vpop.f32.mrb[0].mxu0
        %v4198 = vpop.f32.mrb[0].mxu0
        %v4199 = vadd.f32 %v3746, %v4198
        %v4200 = vpop.f32.mrb[0].mxu0
        %4201 = vmatprep.mubr.bf16.mxu0 0
        %4202 = vmatmul.mubr.bf16.gmra.mrb[0].mxu0 %v4054
        %v4203 = vpop.f32.mrb[0].mxu0
        %v4204 = vadd.f32 %v3751, %v4203
        %v4205 = vpop.f32.mrb[0].mxu0
        %v4206 = vpop.f32.mrb[0].mxu0
        %v4207 = vadd.f32 %v3756, %v4206
        %v4208 = vpop.f32.mrb[0].mxu0
        %4209 = vmatprep.mubr.bf16.mxu0 0
        %4210 = vmatmul.mubr.bf16.gmra.mrb[0].mxu0 %v4057
        %v4211 = vpop.f32.mrb[0].mxu0
        %v4212 = vadd.f32 %v3761, %v4211
        %v4213 = vpop.f32.mrb[0].mxu0
        %v4214 = vpop.f32.mrb[0].mxu0
        %v4215 = vadd.f32 %v3766, %v4214
        %v4216 = vpop.f32.mrb[0].mxu0
        %4217 = vmatprep.mubr.bf16.mxu0 0
        %4218 = vmatmul.mubr.bf16.gmra.mrb[0].mxu0 %v4060
        %v4219 = vpop.f32.mrb[0].mxu0
        %v4220 = vadd.f32 %v3771, %v4219
        %v4221 = vpop.f32.mrb[0].mxu0
        %v4222 = vpop.f32.mrb[0].mxu0
        %v4223 = vadd.f32 %v3776, %v4222
        %v4224 = vpop.f32.mrb[0].mxu0
        %4225 = vmatprep.mubr.bf16.mxu0 0
        %4226 = vmatmul.mubr.bf16.gmra.mrb[0].mxu0 %v4063
        %v4227 = vpop.f32.mrb[0].mxu0
        %v4228 = vadd.f32 %v3781, %v4227
        %v4229 = vpop.f32.mrb[0].mxu0
        %v4230 = vpop.f32.mrb[0].mxu0
        %v4231 = vadd.f32 %v3786, %v4230
        %v4232 = vpop.f32.mrb[0].mxu0
        %4233 = vmatprep.mubr.bf16.mxu0 0
        %4234 = vmatmul.mubr.bf16.gmra.mrb[0].mxu0 %v4066
        %v4235 = vpop.f32.mrb[0].mxu0
        %v4236 = vadd.f32 %v3791, %v4235
        %v4237 = vpop.f32.mrb[0].mxu0
        %v4238 = vpop.f32.mrb[0].mxu0
        %v4239 = vadd.f32 %v3796, %v4238
        %v4240 = vpop.f32.mrb[0].mxu0
        %4241 = vmatprep.mubr.bf16.mxu0 0
        %4242 = vmatmul.mubr.bf16.gmra.mrb[0].mxu0 %v4069
        %v4243 = vpop.f32.mrb[0].mxu0
        %v4244 = vadd.f32 %v3801, %v4243
        %v4245 = vpop.f32.mrb[0].mxu0
        %v4246 = vpop.f32.mrb[0].mxu0
        %v4247 = vadd.f32 %v3806, %v4246
        %v4248 = vpop.f32.mrb[0].mxu0
        %4249 = vmatprep.mubr.bf16.mxu0 0
        %4250 = vmatmul.mubr.bf16.gmra.mrb[0].mxu0 %v4072
        %v4251 = vpop.f32.mrb[0].mxu0
        %v4252 = vadd.f32 %v3811, %v4251
        %v4253 = vpop.f32.mrb[0].mxu0
        %v4254 = vpop.f32.mrb[0].mxu0
        %v4255 = vadd.f32 %v3816, %v4254
        %v4256 = vpop.f32.mrb[0].mxu0
        %4257 = vmatprep.mubr.bf16.mxu0 0
        %4258 = vmatmul.mubr.bf16.gmra.mrb[0].mxu0 %v4075
        %v4259 = vpop.f32.mrb[0].mxu0
        %v4260 = vadd.f32 %v3821, %v4259
        %v4261 = vpop.f32.mrb[0].mxu0
        %v4262 = vpop.f32.mrb[0].mxu0
        %v4263 = vadd.f32 %v3826, %v4262
        %v4264 = vpop.f32.mrb[0].mxu0
        %4265 = vmatprep.mubr.bf16.mxu0 0
        %4266 = vmatmul.mubr.bf16.gmra.mrb[0].mxu0 %v4078
        %v4267 = vpop.f32.mrb[0].mxu0
        %v4268 = vadd.f32 %v3831, %v4267
        %v4269 = vpop.f32.mrb[0].mxu0
        %v4270 = vpop.f32.mrb[0].mxu0
        %v4271 = vadd.f32 %v3836, %v4270
        %v4272 = vpop.f32.mrb[0].mxu0
        %4273 = vmatprep.mubr.bf16.mxu0 0
        %4274 = vmatmul.mubr.bf16.gmra.mrb[0].mxu0 %v4081
        %v4275 = vpop.f32.mrb[0].mxu0
        %v4276 = vadd.f32 %v3841, %v4275
        %v4277 = vpop.f32.mrb[0].mxu0
        %v4278 = vpop.f32.mrb[0].mxu0
        %v4279 = vadd.f32 %v3846, %v4278
        %v4280 = vpop.f32.mrb[0].mxu0
        %4281 = vmatprep.mubr.bf16.mxu0 0
        %4282 = vmatmul.mubr.bf16.gmra.mrb[0].mxu0 %v4084
        %v4283 = vpop.f32.mrb[0].mxu0
        %v4284 = vadd.f32 %v3851, %v4283
        %v4285 = vpop.f32.mrb[0].mxu0
        %v4286 = vpop.f32.mrb[0].mxu0
        %v4287 = vadd.f32 %v3856, %v4286
        %v4288 = vpop.f32.mrb[0].mxu0
        %4289 = vmatprep.mubr.bf16.mxu0 0
        %4290 = vmatmul.mubr.bf16.gmra.mrb[0].mxu0 %v4087
        %v4291 = vpop.f32.mrb[0].mxu0
        %v4292 = vadd.f32 %v3861, %v4291
        %v4293 = vpop.f32.mrb[0].mxu0
        %v4294 = vpop.f32.mrb[0].mxu0
        %v4295 = vadd.f32 %v3866, %v4294
        %v4296 = vpop.f32.mrb[0].mxu0
        %4297 = vmatprep.mubr.bf16.mxu0 0
        %4298 = vmatmul.mubr.bf16.gmra.mrb[0].mxu0 %v4090
        %v4299 = vpop.f32.mrb[0].mxu0
        %v4300 = vadd.f32 %v3871, %v4299
        %v4301 = vpop.f32.mrb[0].mxu0
        %v4302 = vpop.f32.mrb[0].mxu0
        %v4303 = vadd.f32 %v3876, %v4302
        %v4304 = vpop.f32.mrb[0].mxu0
        %4305 = vmatprep.mubr.bf16.mxu0 0
        %4306 = vmatmul.mubr.bf16.gmra.mrb[0].mxu0 %v4093
        %v4307 = vpop.f32.mrb[0].mxu0
        %v4308 = vadd.f32 %v3881, %v4307
        %v4309 = vpop.f32.mrb[0].mxu0
        %v4310 = vpop.f32.mrb[0].mxu0
        %v4311 = vadd.f32 %v3886, %v4310
        %v4312 = vpop.f32.mrb[0].mxu0
        %4313 = vmatprep.mubr.bf16.mxu0 0
        %4314 = vmatmul.mubr.bf16.gmra.mrb[0].mxu0 %v4096
        %v4315 = vpop.f32.mrb[0].mxu0
        %v4316 = vadd.f32 %v3891, %v4315
        %v4317 = vpop.f32.mrb[0].mxu0
        %v4318 = vpop.f32.mrb[0].mxu0
        %v4319 = vadd.f32 %v3896, %v4318
        %v4320 = vpop.f32.mrb[0].mxu0
        %4321 = vmatprep.mubr.bf16.mxu0 0
        %4322 = vmatmul.mubr.bf16.gmra.mrb[0].mxu0 %v4099
        %v4323 = vpop.f32.mrb[0].mxu0
        %v4324 = vadd.f32 %v3901, %v4323
        %v4325 = vpop.f32.mrb[0].mxu0
        %v4326 = vpop.f32.mrb[0].mxu0
        %v4327 = vadd.f32 %v3906, %v4326
        %v4328 = vpop.f32.mrb[0].mxu0
        %4329 = vmatprep.mubr.bf16.mxu0 0
        %4330 = vmatmul.mubr.bf16.gmra.mrb[0].mxu0 %v4102
        %v4331 = vpop.f32.mrb[0].mxu0
        %v4332 = vadd.f32 %v3911, %v4331
        %v4333 = vpop.f32.mrb[0].mxu0
        %v4334 = vpop.f32.mrb[0].mxu0
        %v4335 = vadd.f32 %v3916, %v4334
        %v4336 = vpop.f32.mrb[0].mxu0
        %4337 = vmatprep.mubr.bf16.mxu0 0
        %4338 = vmatmul.mubr.bf16.gmra.mrb[0].mxu0 %v4105
        %v4339 = vpop.f32.mrb[0].mxu0
        %v4340 = vadd.f32 %v3921, %v4339
        %v4341 = vpop.f32.mrb[0].mxu0
        %v4342 = vpop.f32.mrb[0].mxu0
        %v4343 = vadd.f32 %v3926, %v4342
        %v4344 = vpop.f32.mrb[0].mxu0
        %4345 = vmatprep.mubr.bf16.mxu0 0
        %4346 = vmatmul.mubr.bf16.gmra.mrb[0].mxu0 %v4108
        %v4347 = vpop.f32.mrb[0].mxu0
        %v4348 = vadd.f32 %v3931, %v4347
        %v4349 = vpop.f32.mrb[0].mxu0
        %v4350 = vpop.f32.mrb[0].mxu0
        %v4351 = vadd.f32 %v3936, %v4350
        %v4352 = vpop.f32.mrb[0].mxu0
        %4353 = vmatprep.mubr.bf16.mxu0 0
        %4354 = vmatmul.mubr.bf16.gmra.mrb[0].mxu0 %v4111
        %v4355 = vpop.f32.mrb[0].mxu0
        %v4356 = vadd.f32 %v3941, %v4355
        %v4357 = vpop.f32.mrb[0].mxu0
        %v4358 = vpop.f32.mrb[0].mxu0
        %v4359 = vadd.f32 %v3946, %v4358
        %v4360 = vpop.f32.mrb[0].mxu0
        %4361 = vmatprep.mubr.bf16.mxu0 0
        %4362 = vmatmul.mubr.bf16.gmra.mrb[0].mxu0 %v4114
        %v4363 = vpop.f32.mrb[0].mxu0
        %v4364 = vadd.f32 %v3951, %v4363
        %v4365 = vpop.f32.mrb[0].mxu0
        %v4366 = vpop.f32.mrb[0].mxu0
        %v4367 = vadd.f32 %v3956, %v4366
        %v4368 = vpop.f32.mrb[0].mxu0
        %4369 = vmatprep.mubr.bf16.mxu0 0
        %4370 = vmatmul.mubr.bf16.gmra.mrb[0].mxu0 %v4117
        %v4371 = vpop.f32.mrb[0].mxu0
        %v4372 = vadd.f32 %v3961, %v4371
        %v4373 = vpop.f32.mrb[0].mxu0
        %v4374 = vpop.f32.mrb[0].mxu0
        %v4375 = vadd.f32 %v3966, %v4374
        %v4376 = vpop.f32.mrb[0].mxu0
        %4377 = vmatprep.mubr.bf16.mxu0 0
        %4378 = vmatmul.mubr.bf16.gmra.mrb[0].mxu0 %v4120
        %v4379 = vpop.f32.mrb[0].mxu0
        %v4380 = vadd.f32 %v3971, %v4379
        %v4381 = vpop.f32.mrb[0].mxu0
        %v4382 = vpop.f32.mrb[0].mxu0
        %v4383 = vadd.f32 %v3976, %v4382
        %v4384 = vpop.f32.mrb[0].mxu0
        %4385 = vmatprep.mubr.bf16.mxu0 0
        %4386 = vmatmul.mubr.bf16.gmra.mrb[0].mxu0 %v4123
        %v4387 = vpop.f32.mrb[0].mxu0
        %v4388 = vadd.f32 %v3981, %v4387
        %v4389 = vpop.f32.mrb[0].mxu0
        %v4390 = vpop.f32.mrb[0].mxu0
        %v4391 = vadd.f32 %v3986, %v4390
        %v4392 = vpop.f32.mrb[0].mxu0
        %4393 = vmatprep.mubr.bf16.mxu0 0
        %4394 = vmatmul.mubr.bf16.gmra.mrb[0].mxu0 %v4126
        %v4395 = vpop.f32.mrb[0].mxu0
        %v4396 = vadd.f32 %v3991, %v4395
        %v4397 = vpop.f32.mrb[0].mxu0
        %v4398 = vpop.f32.mrb[0].mxu0
        %v4399 = vadd.f32 %v3996, %v4398
        %v4400 = vpop.f32.mrb[0].mxu0
        %4401 = vmatprep.mubr.bf16.mxu0 0
        %4402 = vmatmul.mubr.bf16.gmra.mrb[0].mxu0 %v4129
        %v4403 = vpop.f32.mrb[0].mxu0
        %v4404 = vadd.f32 %v4001, %v4403
        %v4405 = vpop.f32.mrb[0].mxu0
        %v4406 = vpop.f32.mrb[0].mxu0
        %v4407 = vadd.f32 %v4006, %v4406
        %v4408 = vpop.f32.mrb[0].mxu0
        %4409 = vmatprep.mubr.bf16.mxu0 0
        %4410 = vmatmul.mubr.bf16.gmra.mrb[0].mxu0 %v4132
        %v4411 = vpop.f32.mrb[0].mxu0
        %v4412 = vadd.f32 %v4011, %v4411
        %v4413 = vpop.f32.mrb[0].mxu0
        %v4414 = vpop.f32.mrb[0].mxu0
        %v4415 = vadd.f32 %v4016, %v4414
        %v4416 = vpop.f32.mrb[0].mxu0
        %4417 = vmatprep.mubr.bf16.mxu0 0
        %4418 = vmatmul.mubr.bf16.gmra.mrb[0].mxu0 %v4135
        %v4419 = vpop.f32.mrb[0].mxu0
        %v4420 = vadd.f32 %v4021, %v4419
        %v4421 = vpop.f32.mrb[0].mxu0
        %v4422 = vpop.f32.mrb[0].mxu0
        %v4423 = vadd.f32 %v4026, %v4422
        %v4424 = vpop.f32.mrb[0].mxu0
        %4425 = vdwg.mxu0
        %v4426 = vld [vmem:[%s506] sm:$0x1]
        %4428 = vset.pattern.permute.xlu0 0
        %4429 = vperm.xlu0 %4428, %v2901
        %v4430 = vpop.permute.xlu0 %4429
        %4433 = vset.pattern.permute.xlu0 0
        %4434 = vperm.xlu0 %4433, %v2902
        %v4435 = vpop.permute.xlu0 %4434
        %4438 = vset.pattern.permute.xlu0 0
        %4439 = vperm.xlu0 %4438, %v2903
        %v4440 = vpop.permute.xlu0 %4439
        %4443 = vset.pattern.permute.xlu0 0
        %4444 = vperm.xlu0 %4443, %v2904
        %v4445 = vpop.permute.xlu0 %4444
        %4448 = vset.pattern.permute.xlu0 0
        %4449 = vperm.xlu0 %4448, %v2905
        %v4450 = vpop.permute.xlu0 %4449
        %4453 = vset.pattern.permute.xlu0 0
        %4454 = vperm.xlu0 %4453, %v2906
        %v4455 = vpop.permute.xlu0 %4454
        %4458 = vset.pattern.permute.xlu0 0
        %4459 = vperm.xlu0 %4458, %v2907
        %v4460 = vpop.permute.xlu0 %4459
        %4463 = vset.pattern.permute.xlu0 0
        %4464 = vperm.xlu0 %4463, %v2908
        %v4465 = vpop.permute.xlu0 %4464
        %4468 = vset.pattern.permute.xlu0 0
        %4469 = vperm.xlu0 %4468, %v2909
        %v4470 = vpop.permute.xlu0 %4469
        %4473 = vset.pattern.permute.xlu0 0
        %4474 = vperm.xlu0 %4473, %v2910
        %v4475 = vpop.permute.xlu0 %4474
        %4478 = vset.pattern.permute.xlu0 0
        %4479 = vperm.xlu0 %4478, %v2911
        %v4480 = vpop.permute.xlu0 %4479
        %4483 = vset.pattern.permute.xlu0 0
        %4484 = vperm.xlu0 %4483, %v2912
        %v4485 = vpop.permute.xlu0 %4484
        %4488 = vset.pattern.permute.xlu0 0
        %4489 = vperm.xlu0 %4488, %v2913
        %v4490 = vpop.permute.xlu0 %4489
        %4493 = vset.pattern.permute.xlu0 0
        %4494 = vperm.xlu0 %4493, %v2914
        %v4495 = vpop.permute.xlu0 %4494
        %4498 = vset.pattern.permute.xlu0 0
        %4499 = vperm.xlu0 %4498, %v2915
        %v4500 = vpop.permute.xlu0 %4499
        %4503 = vset.pattern.permute.xlu0 0
        %4504 = vperm.xlu0 %4503, %v2916
        %v4505 = vpop.permute.xlu0 %4504
        %4508 = vset.pattern.permute.xlu0 0
        %4509 = vperm.xlu0 %4508, %v2917
        %v4510 = vpop.permute.xlu0 %4509
        %4513 = vset.pattern.permute.xlu0 0
        %4514 = vperm.xlu0 %4513, %v2918
        %v4515 = vpop.permute.xlu0 %4514
        %4518 = vset.pattern.permute.xlu0 0
        %4519 = vperm.xlu0 %4518, %v2919
        %v4520 = vpop.permute.xlu0 %4519
        %4523 = vset.pattern.permute.xlu0 0
        %4524 = vperm.xlu0 %4523, %v2920
        %v4525 = vpop.permute.xlu0 %4524
        %4528 = vset.pattern.permute.xlu0 0
        %4529 = vperm.xlu0 %4528, %v2921
        %v4530 = vpop.permute.xlu0 %4529
        %4533 = vset.pattern.permute.xlu0 0
        %4534 = vperm.xlu0 %4533, %v2922
        %v4535 = vpop.permute.xlu0 %4534
        %4538 = vset.pattern.permute.xlu0 0
        %4539 = vperm.xlu0 %4538, %v2923
        %v4540 = vpop.permute.xlu0 %4539
        %4543 = vset.pattern.permute.xlu0 0
        %4544 = vperm.xlu0 %4543, %v2924
        %v4545 = vpop.permute.xlu0 %4544
        %4548 = vset.pattern.permute.xlu0 0
        %4549 = vperm.xlu0 %4548, %v2925
        %v4550 = vpop.permute.xlu0 %4549
        %4553 = vset.pattern.permute.xlu0 0
        %4554 = vperm.xlu0 %4553, %v2926
        %v4555 = vpop.permute.xlu0 %4554
        %4558 = vset.pattern.permute.xlu0 0
        %4559 = vperm.xlu0 %4558, %v2927
        %v4560 = vpop.permute.xlu0 %4559
        %4563 = vset.pattern.permute.xlu0 0
        %4564 = vperm.xlu0 %4563, %v2928
        %v4565 = vpop.permute.xlu0 %4564
        %4568 = vset.pattern.permute.xlu0 0
        %4569 = vperm.xlu0 %4568, %v2929
        %v4570 = vpop.permute.xlu0 %4569
        %4573 = vset.pattern.permute.xlu0 0
        %4574 = vperm.xlu0 %4573, %v2930
        %v4575 = vpop.permute.xlu0 %4574
        %4578 = vset.pattern.permute.xlu0 0
        %4579 = vperm.xlu0 %4578, %v2931
        %v4580 = vpop.permute.xlu0 %4579
        %4583 = vset.pattern.permute.xlu0 0
        %4584 = vperm.xlu0 %4583, %v2932
        %v4585 = vpop.permute.xlu0 %4584
        %4588 = vset.pattern.permute.xlu0 0
        %4589 = vperm.xlu0 %4588, %v2933
        %v4590 = vpop.permute.xlu0 %4589
        %4593 = vset.pattern.permute.xlu0 0
        %4594 = vperm.xlu0 %4593, %v2934
        %v4595 = vpop.permute.xlu0 %4594
        %4598 = vset.pattern.permute.xlu0 0
        %4599 = vperm.xlu0 %4598, %v2935
        %v4600 = vpop.permute.xlu0 %4599
        %4603 = vset.pattern.permute.xlu0 0
        %4604 = vperm.xlu0 %4603, %v2936
        %v4605 = vpop.permute.xlu0 %4604
        %4608 = vset.pattern.permute.xlu0 0
        %4609 = vperm.xlu0 %4608, %v2937
        %v4610 = vpop.permute.xlu0 %4609
        %4613 = vset.pattern.permute.xlu0 0
        %4614 = vperm.xlu0 %4613, %v2938
        %v4615 = vpop.permute.xlu0 %4614
        %4618 = vset.pattern.permute.xlu0 0
        %4619 = vperm.xlu0 %4618, %v2939
        %v4620 = vpop.permute.xlu0 %4619
        %4623 = vset.pattern.permute.xlu0 0
        %4624 = vperm.xlu0 %4623, %v2940
        %v4625 = vpop.permute.xlu0 %4624
        %4628 = vset.pattern.permute.xlu0 0
        %4629 = vperm.xlu0 %4628, %v2941
        %v4630 = vpop.permute.xlu0 %4629
        %4633 = vset.pattern.permute.xlu0 0
        %4634 = vperm.xlu0 %4633, %v2942
        %v4635 = vpop.permute.xlu0 %4634
        %4638 = vset.pattern.permute.xlu0 0
        %4639 = vperm.xlu0 %4638, %v2943
        %v4640 = vpop.permute.xlu0 %4639
        %4643 = vset.pattern.permute.xlu0 0
        %4644 = vperm.xlu0 %4643, %v2944
        %v4645 = vpop.permute.xlu0 %4644
        %4648 = vset.pattern.permute.xlu0 0
        %4649 = vperm.xlu0 %4648, %v2945
        %v4650 = vpop.permute.xlu0 %4649
        %4653 = vset.pattern.permute.xlu0 0
        %4654 = vperm.xlu0 %4653, %v2946
        %v4655 = vpop.permute.xlu0 %4654
        %4658 = vset.pattern.permute.xlu0 0
        %4659 = vperm.xlu0 %4658, %v2947
        %v4660 = vpop.permute.xlu0 %4659
        %4663 = vset.pattern.permute.xlu0 0
        %4664 = vperm.xlu0 %4663, %v2948
        %v4665 = vpop.permute.xlu0 %4664
        %4668 = vset.pattern.permute.xlu0 0
        %4669 = vperm.xlu0 %4668, %v2949
        %v4670 = vpop.permute.xlu0 %4669
        %4673 = vset.pattern.permute.xlu0 0
        %4674 = vperm.xlu0 %4673, %v2950
        %v4675 = vpop.permute.xlu0 %4674
        %4678 = vset.pattern.permute.xlu0 0
        %4679 = vperm.xlu0 %4678, %v2951
        %v4680 = vpop.permute.xlu0 %4679
        %4683 = vset.pattern.permute.xlu0 0
        %4684 = vperm.xlu0 %4683, %v2952
        %v4685 = vpop.permute.xlu0 %4684
        %4688 = vset.pattern.permute.xlu0 0
        %4689 = vperm.xlu0 %4688, %v2953
        %v4690 = vpop.permute.xlu0 %4689
        %4693 = vset.pattern.permute.xlu0 0
        %4694 = vperm.xlu0 %4693, %v2954
        %v4695 = vpop.permute.xlu0 %4694
        %4698 = vset.pattern.permute.xlu0 0
        %4699 = vperm.xlu0 %4698, %v2955
        %v4700 = vpop.permute.xlu0 %4699
        %4703 = vset.pattern.permute.xlu0 0
        %4704 = vperm.xlu0 %4703, %v2956
        %v4705 = vpop.permute.xlu0 %4704
        %4708 = vset.pattern.permute.xlu0 0
        %4709 = vperm.xlu0 %4708, %v2957
        %v4710 = vpop.permute.xlu0 %4709
        %4713 = vset.pattern.permute.xlu0 0
        %4714 = vperm.xlu0 %4713, %v2958
        %v4715 = vpop.permute.xlu0 %4714
        %4718 = vset.pattern.permute.xlu0 0
        %4719 = vperm.xlu0 %4718, %v2959
        %v4720 = vpop.permute.xlu0 %4719
        %4723 = vset.pattern.permute.xlu0 0
        %4724 = vperm.xlu0 %4723, %v2960
        %v4725 = vpop.permute.xlu0 %4724
        %4728 = vset.pattern.permute.xlu0 0
        %4729 = vperm.xlu0 %4728, %v2961
        %v4730 = vpop.permute.xlu0 %4729
        %4733 = vset.pattern.permute.xlu0 0
        %4734 = vperm.xlu0 %4733, %v2962
        %v4735 = vpop.permute.xlu0 %4734
        %4738 = vset.pattern.permute.xlu0 0
        %4739 = vperm.xlu0 %4738, %v2963
        %v4740 = vpop.permute.xlu0 %4739
        %4743 = vset.pattern.permute.xlu0 0
        %4744 = vperm.xlu0 %4743, %v2964
        %v4745 = vpop.permute.xlu0 %4744
        %v4748 = vlaneseq
        %v4749 = vshrl.u32 %v4748, 7
        %v4750 = vsub.s32 0, %v4749
        %v4751 = vrot.slane %v4426, %v4750
        %v4753 = vmul.f32 %v4430, %v4751
        %v4754 = vmul.f32 %v4435, %v4751
        %v4755 = vmul.f32 %v4440, %v4751
        %v4756 = vmul.f32 %v4445, %v4751
        %v4757 = vmul.f32 %v4450, %v4751
        %v4758 = vmul.f32 %v4455, %v4751
        %v4759 = vmul.f32 %v4460, %v4751
        %v4760 = vmul.f32 %v4465, %v4751
        %v4761 = vmul.f32 %v4470, %v4751
        %v4762 = vmul.f32 %v4475, %v4751
        %v4763 = vmul.f32 %v4480, %v4751
        %v4764 = vmul.f32 %v4485, %v4751
        %v4765 = vmul.f32 %v4490, %v4751
        %v4766 = vmul.f32 %v4495, %v4751
        %v4767 = vmul.f32 %v4500, %v4751
        %v4768 = vmul.f32 %v4505, %v4751
        %v4769 = vmul.f32 %v4510, %v4751
        %v4770 = vmul.f32 %v4515, %v4751
        %v4771 = vmul.f32 %v4520, %v4751
        %v4772 = vmul.f32 %v4525, %v4751
        %v4773 = vmul.f32 %v4530, %v4751
        %v4774 = vmul.f32 %v4535, %v4751
        %v4775 = vmul.f32 %v4540, %v4751
        %v4776 = vmul.f32 %v4545, %v4751
        %v4777 = vmul.f32 %v4550, %v4751
        %v4778 = vmul.f32 %v4555, %v4751
        %v4779 = vmul.f32 %v4560, %v4751
        %v4780 = vmul.f32 %v4565, %v4751
        %v4781 = vmul.f32 %v4570, %v4751
        %v4782 = vmul.f32 %v4575, %v4751
        %v4783 = vmul.f32 %v4580, %v4751
        %v4784 = vmul.f32 %v4585, %v4751
        %v4785 = vmul.f32 %v4590, %v4751
        %v4786 = vmul.f32 %v4595, %v4751
        %v4787 = vmul.f32 %v4600, %v4751
        %v4788 = vmul.f32 %v4605, %v4751
        %v4789 = vmul.f32 %v4610, %v4751
        %v4790 = vmul.f32 %v4615, %v4751
        %v4791 = vmul.f32 %v4620, %v4751
        %v4792 = vmul.f32 %v4625, %v4751
        %v4793 = vmul.f32 %v4630, %v4751
        %v4794 = vmul.f32 %v4635, %v4751
        %v4795 = vmul.f32 %v4640, %v4751
        %v4796 = vmul.f32 %v4645, %v4751
        %v4797 = vmul.f32 %v4650, %v4751
        %v4798 = vmul.f32 %v4655, %v4751
        %v4799 = vmul.f32 %v4660, %v4751
        %v4800 = vmul.f32 %v4665, %v4751
        %v4801 = vmul.f32 %v4670, %v4751
        %v4802 = vmul.f32 %v4675, %v4751
        %v4803 = vmul.f32 %v4680, %v4751
        %v4804 = vmul.f32 %v4685, %v4751
        %v4805 = vmul.f32 %v4690, %v4751
        %v4806 = vmul.f32 %v4695, %v4751
        %v4807 = vmul.f32 %v4700, %v4751
        %v4808 = vmul.f32 %v4705, %v4751
        %v4809 = vmul.f32 %v4710, %v4751
        %v4810 = vmul.f32 %v4715, %v4751
        %v4811 = vmul.f32 %v4720, %v4751
        %v4812 = vmul.f32 %v4725, %v4751
        %v4813 = vmul.f32 %v4730, %v4751
        %v4814 = vmul.f32 %v4735, %v4751
        %v4815 = vmul.f32 %v4740, %v4751
        %v4816 = vmul.f32 %v4745, %v4751
        %v4817 = vadd.f32 %v4172, %v4753
        %v4818 = vadd.f32 %v4175, %v4754
        %v4819 = vadd.f32 %v4180, %v4755
        %v4820 = vadd.f32 %v4183, %v4756
        %v4821 = vadd.f32 %v4188, %v4757
        %v4822 = vadd.f32 %v4191, %v4758
        %v4823 = vadd.f32 %v4196, %v4759
        %v4824 = vadd.f32 %v4199, %v4760
        %v4825 = vadd.f32 %v4204, %v4761
        %v4826 = vadd.f32 %v4207, %v4762
        %v4827 = vadd.f32 %v4212, %v4763
        %v4828 = vadd.f32 %v4215, %v4764
        %v4829 = vadd.f32 %v4220, %v4765
        %v4830 = vadd.f32 %v4223, %v4766
        %v4831 = vadd.f32 %v4228, %v4767
        %v4832 = vadd.f32 %v4231, %v4768
        %v4833 = vadd.f32 %v4236, %v4769
        %v4834 = vadd.f32 %v4239, %v4770
        %v4835 = vadd.f32 %v4244, %v4771
        %v4836 = vadd.f32 %v4247, %v4772
        %v4837 = vadd.f32 %v4252, %v4773
        %v4838 = vadd.f32 %v4255, %v4774
        %v4839 = vadd.f32 %v4260, %v4775
        %v4840 = vadd.f32 %v4263, %v4776
        %v4841 = vadd.f32 %v4268, %v4777
        %v4842 = vadd.f32 %v4271, %v4778
        %v4843 = vadd.f32 %v4276, %v4779
        %v4844 = vadd.f32 %v4279, %v4780
        %v4845 = vadd.f32 %v4284, %v4781
        %v4846 = vadd.f32 %v4287, %v4782
        %v4847 = vadd.f32 %v4292, %v4783
        %v4848 = vadd.f32 %v4295, %v4784
        %v4849 = vadd.f32 %v4300, %v4785
        %v4850 = vadd.f32 %v4303, %v4786
        %v4851 = vadd.f32 %v4308, %v4787
        %v4852 = vadd.f32 %v4311, %v4788
        %v4853 = vadd.f32 %v4316, %v4789
        %v4854 = vadd.f32 %v4319, %v4790
        %v4855 = vadd.f32 %v4324, %v4791
        %v4856 = vadd.f32 %v4327, %v4792
        %v4857 = vadd.f32 %v4332, %v4793
        %v4858 = vadd.f32 %v4335, %v4794
        %v4859 = vadd.f32 %v4340, %v4795
        %v4860 = vadd.f32 %v4343, %v4796
        %v4861 = vadd.f32 %v4348, %v4797
        %v4862 = vadd.f32 %v4351, %v4798
        %v4863 = vadd.f32 %v4356, %v4799
        %v4864 = vadd.f32 %v4359, %v4800
        %v4865 = vadd.f32 %v4364, %v4801
        %v4866 = vadd.f32 %v4367, %v4802
        %v4867 = vadd.f32 %v4372, %v4803
        %v4868 = vadd.f32 %v4375, %v4804
        %v4869 = vadd.f32 %v4380, %v4805
        %v4870 = vadd.f32 %v4383, %v4806
        %v4871 = vadd.f32 %v4388, %v4807
        %v4872 = vadd.f32 %v4391, %v4808
        %v4873 = vadd.f32 %v4396, %v4809
        %v4874 = vadd.f32 %v4399, %v4810
        %v4875 = vadd.f32 %v4404, %v4811
        %v4876 = vadd.f32 %v4407, %v4812
        %v4877 = vadd.f32 %v4412, %v4813
        %v4878 = vadd.f32 %v4415, %v4814
        %v4879 = vadd.f32 %v4420, %v4815
        %v4880 = vadd.f32 %v4423, %v4816
        %v4881 = vld [vmem:[%s509] sm:$0x1]
        %v4883 = vlaneseq
        %v4884 = vshrl.u32 %v4883, 7
        %v4885 = vsub.s32 0, %v4884
        %v4886 = vrot.slane %v4881, %v4885
        %v4888 = vadd.f32 %v4817, %v4886
        %v4889 = vadd.f32 %v4818, %v4886
        %v4890 = vadd.f32 %v4819, %v4886
        %v4891 = vadd.f32 %v4820, %v4886
        %v4892 = vadd.f32 %v4821, %v4886
        %v4893 = vadd.f32 %v4822, %v4886
        %v4894 = vadd.f32 %v4823, %v4886
        %v4895 = vadd.f32 %v4824, %v4886
        %v4896 = vadd.f32 %v4825, %v4886
        %v4897 = vadd.f32 %v4826, %v4886
        %v4898 = vadd.f32 %v4827, %v4886
        %v4899 = vadd.f32 %v4828, %v4886
        %v4900 = vadd.f32 %v4829, %v4886
        %v4901 = vadd.f32 %v4830, %v4886
        %v4902 = vadd.f32 %v4831, %v4886
        %v4903 = vadd.f32 %v4832, %v4886
        %v4904 = vadd.f32 %v4833, %v4886
        %v4905 = vadd.f32 %v4834, %v4886
        %v4906 = vadd.f32 %v4835, %v4886
        %v4907 = vadd.f32 %v4836, %v4886
        %v4908 = vadd.f32 %v4837, %v4886
        %v4909 = vadd.f32 %v4838, %v4886
        %v4910 = vadd.f32 %v4839, %v4886
        %v4911 = vadd.f32 %v4840, %v4886
        %v4912 = vadd.f32 %v4841, %v4886
        %v4913 = vadd.f32 %v4842, %v4886
        %v4914 = vadd.f32 %v4843, %v4886
        %v4915 = vadd.f32 %v4844, %v4886
        %v4916 = vadd.f32 %v4845, %v4886
        %v4917 = vadd.f32 %v4846, %v4886
        %v4918 = vadd.f32 %v4847, %v4886
        %v4919 = vadd.f32 %v4848, %v4886
        %v4920 = vadd.f32 %v4849, %v4886
        %v4921 = vadd.f32 %v4850, %v4886
        %v4922 = vadd.f32 %v4851, %v4886
        %v4923 = vadd.f32 %v4852, %v4886
        %v4924 = vadd.f32 %v4853, %v4886
        %v4925 = vadd.f32 %v4854, %v4886
        %v4926 = vadd.f32 %v4855, %v4886
        %v4927 = vadd.f32 %v4856, %v4886
        %v4928 = vadd.f32 %v4857, %v4886
        %v4929 = vadd.f32 %v4858, %v4886
        %v4930 = vadd.f32 %v4859, %v4886
        %v4931 = vadd.f32 %v4860, %v4886
        %v4932 = vadd.f32 %v4861, %v4886
        %v4933 = vadd.f32 %v4862, %v4886
        %v4934 = vadd.f32 %v4863, %v4886
        %v4935 = vadd.f32 %v4864, %v4886
        %v4936 = vadd.f32 %v4865, %v4886
        %v4937 = vadd.f32 %v4866, %v4886
        %v4938 = vadd.f32 %v4867, %v4886
        %v4939 = vadd.f32 %v4868, %v4886
        %v4940 = vadd.f32 %v4869, %v4886
        %v4941 = vadd.f32 %v4870, %v4886
        %v4942 = vadd.f32 %v4871, %v4886
        %v4943 = vadd.f32 %v4872, %v4886
        %v4944 = vadd.f32 %v4873, %v4886
        %v4945 = vadd.f32 %v4874, %v4886
        %v4946 = vadd.f32 %v4875, %v4886
        %v4947 = vadd.f32 %v4876, %v4886
        %v4948 = vadd.f32 %v4877, %v4886
        %v4949 = vadd.f32 %v4878, %v4886
        %v4950 = vadd.f32 %v4879, %v4886
        %v4951 = vadd.f32 %v4880, %v4886
        %v4952 = vmax.f32 %v4888, 0.0
        %v4953 = vmax.f32 %v4889, 0.0
        %v4954 = vmax.f32 %v4890, 0.0
        %v4955 = vmax.f32 %v4891, 0.0
        %v4956 = vmax.f32 %v4892, 0.0
        %v4957 = vmax.f32 %v4893, 0.0
        %v4958 = vmax.f32 %v4894, 0.0
        %v4959 = vmax.f32 %v4895, 0.0
        %v4960 = vmax.f32 %v4896, 0.0
        %v4961 = vmax.f32 %v4897, 0.0
        %v4962 = vmax.f32 %v4898, 0.0
        %v4963 = vmax.f32 %v4899, 0.0
        %v4964 = vmax.f32 %v4900, 0.0
        %v4965 = vmax.f32 %v4901, 0.0
        %v4966 = vmax.f32 %v4902, 0.0
        %v4967 = vmax.f32 %v4903, 0.0
        %v4968 = vmax.f32 %v4904, 0.0
        %v4969 = vmax.f32 %v4905, 0.0
        %v4970 = vmax.f32 %v4906, 0.0
        %v4971 = vmax.f32 %v4907, 0.0
        %v4972 = vmax.f32 %v4908, 0.0
        %v4973 = vmax.f32 %v4909, 0.0
        %v4974 = vmax.f32 %v4910, 0.0
        %v4975 = vmax.f32 %v4911, 0.0
        %v4976 = vmax.f32 %v4912, 0.0
        %v4977 = vmax.f32 %v4913, 0.0
        %v4978 = vmax.f32 %v4914, 0.0
        %v4979 = vmax.f32 %v4915, 0.0
        %v4980 = vmax.f32 %v4916, 0.0
        %v4981 = vmax.f32 %v4917, 0.0
        %v4982 = vmax.f32 %v4918, 0.0
        %v4983 = vmax.f32 %v4919, 0.0
        %v4984 = vmax.f32 %v4920, 0.0
        %v4985 = vmax.f32 %v4921, 0.0
        %v4986 = vmax.f32 %v4922, 0.0
        %v4987 = vmax.f32 %v4923, 0.0
        %v4988 = vmax.f32 %v4924, 0.0
        %v4989 = vmax.f32 %v4925, 0.0
        %v4990 = vmax.f32 %v4926, 0.0
        %v4991 = vmax.f32 %v4927, 0.0
        %v4992 = vmax.f32 %v4928, 0.0
        %v4993 = vmax.f32 %v4929, 0.0
        %v4994 = vmax.f32 %v4930, 0.0
        %v4995 = vmax.f32 %v4931, 0.0
        %v4996 = vmax.f32 %v4932, 0.0
        %v4997 = vmax.f32 %v4933, 0.0
        %v4998 = vmax.f32 %v4934, 0.0
        %v4999 = vmax.f32 %v4935, 0.0
        %v5000 = vmax.f32 %v4936, 0.0
        %v5001 = vmax.f32 %v4937, 0.0
        %v5002 = vmax.f32 %v4938, 0.0
        %v5003 = vmax.f32 %v4939, 0.0
        %v5004 = vmax.f32 %v4940, 0.0
        %v5005 = vmax.f32 %v4941, 0.0
        %v5006 = vmax.f32 %v4942, 0.0
        %v5007 = vmax.f32 %v4943, 0.0
        %v5008 = vmax.f32 %v4944, 0.0
        %v5009 = vmax.f32 %v4945, 0.0
        %v5010 = vmax.f32 %v4946, 0.0
        %v5011 = vmax.f32 %v4947, 0.0
        %v5012 = vmax.f32 %v4948, 0.0
        %v5013 = vmax.f32 %v4949, 0.0
        %v5014 = vmax.f32 %v4950, 0.0
        %v5015 = vmax.f32 %v4951, 0.0
        %v5016 = vld [vmem:[%s9] sm:$0xff]
        %v5017 = vld [vmem:[%s9 + $0x8] sm:$0xff]
        %v5018 = vld [vmem:[%s9 + $0x10] sm:$0xff]
        %v5019 = vld [vmem:[%s9 + $0x18] sm:$0xff]
        %v5020 = vld [vmem:[%s9 + $0x20] sm:$0xff]
        %v5021 = vld [vmem:[%s9 + $0x28] sm:$0xff]
        %v5022 = vld [vmem:[%s9 + $0x30] sm:$0xff]
        %v5023 = vld [vmem:[%s9 + $0x38] sm:$0xff]
        %v5024 = vld [vmem:[%s9 + $0x40] sm:$0xff]
        %v5025 = vld [vmem:[%s9 + $0x48] sm:$0xff]
        %v5026 = vld [vmem:[%s9 + $0x50] sm:$0xff]
        %v5027 = vld [vmem:[%s9 + $0x58] sm:$0xff]
        %v5028 = vld [vmem:[%s9 + $0x60] sm:$0xff]
        %v5029 = vld [vmem:[%s9 + $0x68] sm:$0xff]
        %v5030 = vld [vmem:[%s9 + $0x70] sm:$0xff]
        %v5031 = vld [vmem:[%s9 + $0x78] sm:$0xff]
        %v5032 = vld [vmem:[#allocation2] sm:$0x1]
        %v5034 = vlaneseq
        %v5035 = vshrl.u32 %v5034, 7
        %v5036 = vsub.s32 0, %v5035
        %v5037 = vrot.slane %v5032, %v5036
        %5039 = vmatprep.subr.mxu0 0.0
        %5040 = vmatpush1.msra.mxu0 %v5016
        %5041 = vmatprep.subr.mxu0 0.0
        %5042 = vmatpush1.msra.mxu0 %v5017
        %5043 = vmatprep.subr.mxu0 0.0
        %5044 = vmatpush1.msra.mxu0 %v5018
        %5045 = vmatprep.subr.mxu0 0.0
        %5046 = vmatpush1.msra.mxu0 %v5019
        %5047 = vmatprep.subr.mxu0 0.0
        %5048 = vmatpush1.msra.mxu0 %v5020
        %5049 = vmatprep.subr.mxu0 0.0
        %5050 = vmatpush1.msra.mxu0 %v5021
        %5051 = vmatprep.subr.mxu0 0.0
        %5052 = vmatpush1.msra.mxu0 %v5022
        %5053 = vmatprep.subr.mxu0 0.0
        %5054 = vmatpush1.msra.mxu0 %v5023
        %5055 = vmatprep.subr.mxu0 0.0
        %5056 = vmatpush1.msra.mxu0 %v5024
        %5057 = vmatprep.subr.mxu0 0.0
        %5058 = vmatpush1.msra.mxu0 %v5025
        %5059 = vmatprep.subr.mxu0 0.0
        %5060 = vmatpush1.msra.mxu0 %v5026
        %5061 = vmatprep.subr.mxu0 0.0
        %5062 = vmatpush1.msra.mxu0 %v5027
        %5063 = vmatprep.subr.mxu0 0.0
        %5064 = vmatpush1.msra.mxu0 %v5028
        %5065 = vmatprep.subr.mxu0 0.0
        %5066 = vmatpush1.msra.mxu0 %v5029
        %5067 = vmatprep.subr.mxu0 0.0
        %5068 = vmatpush1.msra.mxu0 %v5030
        %5069 = vmatprep.subr.mxu0 0.0
        %5070 = vmatpush1.msra.mxu0 %v5031
        %5071 = vmatprep.subr.mxu0 0.0
        %5072 = vmatpush1.msra.mxu0 0.0
        %5073 = vmatprep.subr.mxu0 0.0
        %5074 = vmatpush1.msra.mxu0 0.0
        %5075 = vmatprep.subr.mxu0 0.0
        %5076 = vmatpush1.msra.mxu0 0.0
        %5077 = vmatprep.subr.mxu0 0.0
        %5078 = vmatpush1.msra.mxu0 0.0
        %5079 = vmatprep.subr.mxu0 0.0
        %5080 = vmatpush1.msra.mxu0 0.0
        %5081 = vmatprep.subr.mxu0 0.0
        %5082 = vmatpush1.msra.mxu0 0.0
        %5083 = vmatprep.subr.mxu0 0.0
        %5084 = vmatpush1.msra.mxu0 0.0
        %5085 = vmatprep.subr.mxu0 0.0
        %5086 = vmatpush1.msra.mxu0 0.0
        %5087 = vmatprep.subr.mxu0 0.0
        %5088 = vmatpush1.msra.mxu0 0.0
        %5089 = vmatprep.subr.mxu0 0.0
        %5090 = vmatpush1.msra.mxu0 0.0
        %5091 = vmatprep.subr.mxu0 0.0
        %5092 = vmatpush1.msra.mxu0 0.0
        %5093 = vmatprep.subr.mxu0 0.0
        %5094 = vmatpush1.msra.mxu0 0.0
        %5095 = vmatprep.subr.mxu0 0.0
        %5096 = vmatpush1.msra.mxu0 0.0
        %5097 = vmatprep.subr.mxu0 0.0
        %5098 = vmatpush1.msra.mxu0 0.0
        %5099 = vmatprep.subr.mxu0 0.0
        %5100 = vmatpush1.msra.mxu0 0.0
        %5101 = vmatprep.subr.mxu0 0.0
        %5102 = vmatpush1.msra.mxu0 0.0
        %5103 = vmatprep.mubr.f32.mxu0 0.0
        %5104 = vmatmul.mubr.f32.gmra.mrb[0].mxu0 %v4952
        %v5105 = vpop.f32.mrb[0].mxu0
        %v5106 = vadd.f32 %v5037, %v5105
        %v5107 = vpop.f32.mrb[0].mxu0
        %5108 = vmatprep.mubr.f32.mxu0 0.0
        %5109 = vmatmul.mubr.f32.gmra.mrb[0].mxu0 %v4953
        %v5110 = vpop.f32.mrb[0].mxu0
        %v5111 = vadd.f32 %v5037, %v5110
        %v5112 = vpop.f32.mrb[0].mxu0
        %5113 = vmatprep.mubr.f32.mxu0 0.0
        %5114 = vmatmul.mubr.f32.gmra.mrb[0].mxu0 %v4954
        %v5115 = vpop.f32.mrb[0].mxu0
        %v5116 = vadd.f32 %v5037, %v5115
        %v5117 = vpop.f32.mrb[0].mxu0
        %5118 = vmatprep.mubr.f32.mxu0 0.0
        %5119 = vmatmul.mubr.f32.gmra.mrb[0].mxu0 %v4955
        %v5120 = vpop.f32.mrb[0].mxu0
        %v5121 = vadd.f32 %v5037, %v5120
        %v5122 = vpop.f32.mrb[0].mxu0
        %5123 = vmatprep.mubr.f32.mxu0 0.0
        %5124 = vmatmul.mubr.f32.gmra.mrb[0].mxu0 %v4956
        %v5125 = vpop.f32.mrb[0].mxu0
        %v5126 = vadd.f32 %v5037, %v5125
        %v5127 = vpop.f32.mrb[0].mxu0
        %5128 = vmatprep.mubr.f32.mxu0 0.0
        %5129 = vmatmul.mubr.f32.gmra.mrb[0].mxu0 %v4957
        %v5130 = vpop.f32.mrb[0].mxu0
        %v5131 = vadd.f32 %v5037, %v5130
        %v5132 = vpop.f32.mrb[0].mxu0
        %5133 = vmatprep.mubr.f32.mxu0 0.0
        %5134 = vmatmul.mubr.f32.gmra.mrb[0].mxu0 %v4958
        %v5135 = vpop.f32.mrb[0].mxu0
        %v5136 = vadd.f32 %v5037, %v5135
        %v5137 = vpop.f32.mrb[0].mxu0
        %5138 = vmatprep.mubr.f32.mxu0 0.0
        %5139 = vmatmul.mubr.f32.gmra.mrb[0].mxu0 %v4959
        %v5140 = vpop.f32.mrb[0].mxu0
        %v5141 = vadd.f32 %v5037, %v5140
        %v5142 = vpop.f32.mrb[0].mxu0
        %5143 = vmatprep.mubr.f32.mxu0 0.0
        %5144 = vmatmul.mubr.f32.gmra.mrb[0].mxu0 %v4960
        %v5145 = vpop.f32.mrb[0].mxu0
        %v5146 = vadd.f32 %v5037, %v5145
        %v5147 = vpop.f32.mrb[0].mxu0
        %5148 = vmatprep.mubr.f32.mxu0 0.0
        %5149 = vmatmul.mubr.f32.gmra.mrb[0].mxu0 %v4961
        %v5150 = vpop.f32.mrb[0].mxu0
        %v5151 = vadd.f32 %v5037, %v5150
        %v5152 = vpop.f32.mrb[0].mxu0
        %5153 = vmatprep.mubr.f32.mxu0 0.0
        %5154 = vmatmul.mubr.f32.gmra.mrb[0].mxu0 %v4962
        %v5155 = vpop.f32.mrb[0].mxu0
        %v5156 = vadd.f32 %v5037, %v5155
        %v5157 = vpop.f32.mrb[0].mxu0
        %5158 = vmatprep.mubr.f32.mxu0 0.0
        %5159 = vmatmul.mubr.f32.gmra.mrb[0].mxu0 %v4963
        %v5160 = vpop.f32.mrb[0].mxu0
        %v5161 = vadd.f32 %v5037, %v5160
        %v5162 = vpop.f32.mrb[0].mxu0
        %5163 = vmatprep.mubr.f32.mxu0 0.0
        %5164 = vmatmul.mubr.f32.gmra.mrb[0].mxu0 %v4964
        %v5165 = vpop.f32.mrb[0].mxu0
        %v5166 = vadd.f32 %v5037, %v5165
        %v5167 = vpop.f32.mrb[0].mxu0
        %5168 = vmatprep.mubr.f32.mxu0 0.0
        %5169 = vmatmul.mubr.f32.gmra.mrb[0].mxu0 %v4965
        %v5170 = vpop.f32.mrb[0].mxu0
        %v5171 = vadd.f32 %v5037, %v5170
        %v5172 = vpop.f32.mrb[0].mxu0
        %5173 = vmatprep.mubr.f32.mxu0 0.0
        %5174 = vmatmul.mubr.f32.gmra.mrb[0].mxu0 %v4966
        %v5175 = vpop.f32.mrb[0].mxu0
        %v5176 = vadd.f32 %v5037, %v5175
        %v5177 = vpop.f32.mrb[0].mxu0
        %5178 = vmatprep.mubr.f32.mxu0 0.0
        %5179 = vmatmul.mubr.f32.gmra.mrb[0].mxu0 %v4967
        %v5180 = vpop.f32.mrb[0].mxu0
        %v5181 = vadd.f32 %v5037, %v5180
        %v5182 = vpop.f32.mrb[0].mxu0
        %5183 = vmatprep.mubr.f32.mxu0 0.0
        %5184 = vmatmul.mubr.f32.gmra.mrb[0].mxu0 %v4968
        %v5185 = vpop.f32.mrb[0].mxu0
        %v5186 = vadd.f32 %v5037, %v5185
        %v5187 = vpop.f32.mrb[0].mxu0
        %5188 = vmatprep.mubr.f32.mxu0 0.0
        %5189 = vmatmul.mubr.f32.gmra.mrb[0].mxu0 %v4969
        %v5190 = vpop.f32.mrb[0].mxu0
        %v5191 = vadd.f32 %v5037, %v5190
        %v5192 = vpop.f32.mrb[0].mxu0
        %5193 = vmatprep.mubr.f32.mxu0 0.0
        %5194 = vmatmul.mubr.f32.gmra.mrb[0].mxu0 %v4970
        %v5195 = vpop.f32.mrb[0].mxu0
        %v5196 = vadd.f32 %v5037, %v5195
        %v5197 = vpop.f32.mrb[0].mxu0
        %5198 = vmatprep.mubr.f32.mxu0 0.0
        %5199 = vmatmul.mubr.f32.gmra.mrb[0].mxu0 %v4971
        %v5200 = vpop.f32.mrb[0].mxu0
        %v5201 = vadd.f32 %v5037, %v5200
        %v5202 = vpop.f32.mrb[0].mxu0
        %5203 = vmatprep.mubr.f32.mxu0 0.0
        %5204 = vmatmul.mubr.f32.gmra.mrb[0].mxu0 %v4972
        %v5205 = vpop.f32.mrb[0].mxu0
        %v5206 = vadd.f32 %v5037, %v5205
        %v5207 = vpop.f32.mrb[0].mxu0
        %5208 = vmatprep.mubr.f32.mxu0 0.0
        %5209 = vmatmul.mubr.f32.gmra.mrb[0].mxu0 %v4973
        %v5210 = vpop.f32.mrb[0].mxu0
        %v5211 = vadd.f32 %v5037, %v5210
        %v5212 = vpop.f32.mrb[0].mxu0
        %5213 = vmatprep.mubr.f32.mxu0 0.0
        %5214 = vmatmul.mubr.f32.gmra.mrb[0].mxu0 %v4974
        %v5215 = vpop.f32.mrb[0].mxu0
        %v5216 = vadd.f32 %v5037, %v5215
        %v5217 = vpop.f32.mrb[0].mxu0
        %5218 = vmatprep.mubr.f32.mxu0 0.0
        %5219 = vmatmul.mubr.f32.gmra.mrb[0].mxu0 %v4975
        %v5220 = vpop.f32.mrb[0].mxu0
        %v5221 = vadd.f32 %v5037, %v5220
        %v5222 = vpop.f32.mrb[0].mxu0
        %5223 = vmatprep.mubr.f32.mxu0 0.0
        %5224 = vmatmul.mubr.f32.gmra.mrb[0].mxu0 %v4976
        %v5225 = vpop.f32.mrb[0].mxu0
        %v5226 = vadd.f32 %v5037, %v5225
        %v5227 = vpop.f32.mrb[0].mxu0
        %5228 = vmatprep.mubr.f32.mxu0 0.0
        %5229 = vmatmul.mubr.f32.gmra.mrb[0].mxu0 %v4977
        %v5230 = vpop.f32.mrb[0].mxu0
        %v5231 = vadd.f32 %v5037, %v5230
        %v5232 = vpop.f32.mrb[0].mxu0
        %5233 = vmatprep.mubr.f32.mxu0 0.0
        %5234 = vmatmul.mubr.f32.gmra.mrb[0].mxu0 %v4978
        %v5235 = vpop.f32.mrb[0].mxu0
        %v5236 = vadd.f32 %v5037, %v5235
        %v5237 = vpop.f32.mrb[0].mxu0
        %5238 = vmatprep.mubr.f32.mxu0 0.0
        %5239 = vmatmul.mubr.f32.gmra.mrb[0].mxu0 %v4979
        %v5240 = vpop.f32.mrb[0].mxu0
        %v5241 = vadd.f32 %v5037, %v5240
        %v5242 = vpop.f32.mrb[0].mxu0
        %5243 = vmatprep.mubr.f32.mxu0 0.0
        %5244 = vmatmul.mubr.f32.gmra.mrb[0].mxu0 %v4980
        %v5245 = vpop.f32.mrb[0].mxu0
        %v5246 = vadd.f32 %v5037, %v5245
        %v5247 = vpop.f32.mrb[0].mxu0
        %5248 = vmatprep.mubr.f32.mxu0 0.0
        %5249 = vmatmul.mubr.f32.gmra.mrb[0].mxu0 %v4981
        %v5250 = vpop.f32.mrb[0].mxu0
        %v5251 = vadd.f32 %v5037, %v5250
        %v5252 = vpop.f32.mrb[0].mxu0
        %5253 = vmatprep.mubr.f32.mxu0 0.0
        %5254 = vmatmul.mubr.f32.gmra.mrb[0].mxu0 %v4982
        %v5255 = vpop.f32.mrb[0].mxu0
        %v5256 = vadd.f32 %v5037, %v5255
        %v5257 = vpop.f32.mrb[0].mxu0
        %5258 = vmatprep.mubr.f32.mxu0 0.0
        %5259 = vmatmul.mubr.f32.gmra.mrb[0].mxu0 %v4983
        %v5260 = vpop.f32.mrb[0].mxu0
        %v5261 = vadd.f32 %v5037, %v5260
        %v5262 = vpop.f32.mrb[0].mxu0
        %5263 = vmatprep.mubr.f32.mxu0 0.0
        %5264 = vmatmul.mubr.f32.gmra.mrb[0].mxu0 %v4984
        %v5265 = vpop.f32.mrb[0].mxu0
        %v5266 = vadd.f32 %v5037, %v5265
        %v5267 = vpop.f32.mrb[0].mxu0
        %5268 = vmatprep.mubr.f32.mxu0 0.0
        %5269 = vmatmul.mubr.f32.gmra.mrb[0].mxu0 %v4985
        %v5270 = vpop.f32.mrb[0].mxu0
        %v5271 = vadd.f32 %v5037, %v5270
        %v5272 = vpop.f32.mrb[0].mxu0
        %5273 = vmatprep.mubr.f32.mxu0 0.0
        %5274 = vmatmul.mubr.f32.gmra.mrb[0].mxu0 %v4986
        %v5275 = vpop.f32.mrb[0].mxu0
        %v5276 = vadd.f32 %v5037, %v5275
        %v5277 = vpop.f32.mrb[0].mxu0
        %5278 = vmatprep.mubr.f32.mxu0 0.0
        %5279 = vmatmul.mubr.f32.gmra.mrb[0].mxu0 %v4987
        %v5280 = vpop.f32.mrb[0].mxu0
        %v5281 = vadd.f32 %v5037, %v5280
        %v5282 = vpop.f32.mrb[0].mxu0
        %5283 = vmatprep.mubr.f32.mxu0 0.0
        %5284 = vmatmul.mubr.f32.gmra.mrb[0].mxu0 %v4988
        %v5285 = vpop.f32.mrb[0].mxu0
        %v5286 = vadd.f32 %v5037, %v5285
        %v5287 = vpop.f32.mrb[0].mxu0
        %5288 = vmatprep.mubr.f32.mxu0 0.0
        %5289 = vmatmul.mubr.f32.gmra.mrb[0].mxu0 %v4989
        %v5290 = vpop.f32.mrb[0].mxu0
        %v5291 = vadd.f32 %v5037, %v5290
        %v5292 = vpop.f32.mrb[0].mxu0
        %5293 = vmatprep.mubr.f32.mxu0 0.0
        %5294 = vmatmul.mubr.f32.gmra.mrb[0].mxu0 %v4990
        %v5295 = vpop.f32.mrb[0].mxu0
        %v5296 = vadd.f32 %v5037, %v5295
        %v5297 = vpop.f32.mrb[0].mxu0
        %5298 = vmatprep.mubr.f32.mxu0 0.0
        %5299 = vmatmul.mubr.f32.gmra.mrb[0].mxu0 %v4991
        %v5300 = vpop.f32.mrb[0].mxu0
        %v5301 = vadd.f32 %v5037, %v5300
        %v5302 = vpop.f32.mrb[0].mxu0
        %5303 = vmatprep.mubr.f32.mxu0 0.0
        %5304 = vmatmul.mubr.f32.gmra.mrb[0].mxu0 %v4992
        %v5305 = vpop.f32.mrb[0].mxu0
        %v5306 = vadd.f32 %v5037, %v5305
        %v5307 = vpop.f32.mrb[0].mxu0
        %5308 = vmatprep.mubr.f32.mxu0 0.0
        %5309 = vmatmul.mubr.f32.gmra.mrb[0].mxu0 %v4993
        %v5310 = vpop.f32.mrb[0].mxu0
        %v5311 = vadd.f32 %v5037, %v5310
        %v5312 = vpop.f32.mrb[0].mxu0
        %5313 = vmatprep.mubr.f32.mxu0 0.0
        %5314 = vmatmul.mubr.f32.gmra.mrb[0].mxu0 %v4994
        %v5315 = vpop.f32.mrb[0].mxu0
        %v5316 = vadd.f32 %v5037, %v5315
        %v5317 = vpop.f32.mrb[0].mxu0
        %5318 = vmatprep.mubr.f32.mxu0 0.0
        %5319 = vmatmul.mubr.f32.gmra.mrb[0].mxu0 %v4995
        %v5320 = vpop.f32.mrb[0].mxu0
        %v5321 = vadd.f32 %v5037, %v5320
        %v5322 = vpop.f32.mrb[0].mxu0
        %5323 = vmatprep.mubr.f32.mxu0 0.0
        %5324 = vmatmul.mubr.f32.gmra.mrb[0].mxu0 %v4996
        %v5325 = vpop.f32.mrb[0].mxu0
        %v5326 = vadd.f32 %v5037, %v5325
        %v5327 = vpop.f32.mrb[0].mxu0
        %5328 = vmatprep.mubr.f32.mxu0 0.0
        %5329 = vmatmul.mubr.f32.gmra.mrb[0].mxu0 %v4997
        %v5330 = vpop.f32.mrb[0].mxu0
        %v5331 = vadd.f32 %v5037, %v5330
        %v5332 = vpop.f32.mrb[0].mxu0
        %5333 = vmatprep.mubr.f32.mxu0 0.0
        %5334 = vmatmul.mubr.f32.gmra.mrb[0].mxu0 %v4998
        %v5335 = vpop.f32.mrb[0].mxu0
        %v5336 = vadd.f32 %v5037, %v5335
        %v5337 = vpop.f32.mrb[0].mxu0
        %5338 = vmatprep.mubr.f32.mxu0 0.0
        %5339 = vmatmul.mubr.f32.gmra.mrb[0].mxu0 %v4999
        %v5340 = vpop.f32.mrb[0].mxu0
        %v5341 = vadd.f32 %v5037, %v5340
        %v5342 = vpop.f32.mrb[0].mxu0
        %5343 = vmatprep.mubr.f32.mxu0 0.0
        %5344 = vmatmul.mubr.f32.gmra.mrb[0].mxu0 %v5000
        %v5345 = vpop.f32.mrb[0].mxu0
        %v5346 = vadd.f32 %v5037, %v5345
        %v5347 = vpop.f32.mrb[0].mxu0
        %5348 = vmatprep.mubr.f32.mxu0 0.0
        %5349 = vmatmul.mubr.f32.gmra.mrb[0].mxu0 %v5001
        %v5350 = vpop.f32.mrb[0].mxu0
        %v5351 = vadd.f32 %v5037, %v5350
        %v5352 = vpop.f32.mrb[0].mxu0
        %5353 = vmatprep.mubr.f32.mxu0 0.0
        %5354 = vmatmul.mubr.f32.gmra.mrb[0].mxu0 %v5002
        %v5355 = vpop.f32.mrb[0].mxu0
        %v5356 = vadd.f32 %v5037, %v5355
        %v5357 = vpop.f32.mrb[0].mxu0
        %5358 = vmatprep.mubr.f32.mxu0 0.0
        %5359 = vmatmul.mubr.f32.gmra.mrb[0].mxu0 %v5003
        %v5360 = vpop.f32.mrb[0].mxu0
        %v5361 = vadd.f32 %v5037, %v5360
        %v5362 = vpop.f32.mrb[0].mxu0
        %5363 = vmatprep.mubr.f32.mxu0 0.0
        %5364 = vmatmul.mubr.f32.gmra.mrb[0].mxu0 %v5004
        %v5365 = vpop.f32.mrb[0].mxu0
        %v5366 = vadd.f32 %v5037, %v5365
        %v5367 = vpop.f32.mrb[0].mxu0
        %5368 = vmatprep.mubr.f32.mxu0 0.0
        %5369 = vmatmul.mubr.f32.gmra.mrb[0].mxu0 %v5005
        %v5370 = vpop.f32.mrb[0].mxu0
        %v5371 = vadd.f32 %v5037, %v5370
        %v5372 = vpop.f32.mrb[0].mxu0
        %5373 = vmatprep.mubr.f32.mxu0 0.0
        %5374 = vmatmul.mubr.f32.gmra.mrb[0].mxu0 %v5006
        %v5375 = vpop.f32.mrb[0].mxu0
        %v5376 = vadd.f32 %v5037, %v5375
        %v5377 = vpop.f32.mrb[0].mxu0
        %5378 = vmatprep.mubr.f32.mxu0 0.0
        %5379 = vmatmul.mubr.f32.gmra.mrb[0].mxu0 %v5007
        %v5380 = vpop.f32.mrb[0].mxu0
        %v5381 = vadd.f32 %v5037, %v5380
        %v5382 = vpop.f32.mrb[0].mxu0
        %5383 = vmatprep.mubr.f32.mxu0 0.0
        %5384 = vmatmul.mubr.f32.gmra.mrb[0].mxu0 %v5008
        %v5385 = vpop.f32.mrb[0].mxu0
        %v5386 = vadd.f32 %v5037, %v5385
        %v5387 = vpop.f32.mrb[0].mxu0
        %5388 = vmatprep.mubr.f32.mxu0 0.0
        %5389 = vmatmul.mubr.f32.gmra.mrb[0].mxu0 %v5009
        %v5390 = vpop.f32.mrb[0].mxu0
        %v5391 = vadd.f32 %v5037, %v5390
        %v5392 = vpop.f32.mrb[0].mxu0
        %5393 = vmatprep.mubr.f32.mxu0 0.0
        %5394 = vmatmul.mubr.f32.gmra.mrb[0].mxu0 %v5010
        %v5395 = vpop.f32.mrb[0].mxu0
        %v5396 = vadd.f32 %v5037, %v5395
        %v5397 = vpop.f32.mrb[0].mxu0
        %5398 = vmatprep.mubr.f32.mxu0 0.0
        %5399 = vmatmul.mubr.f32.gmra.mrb[0].mxu0 %v5011
        %v5400 = vpop.f32.mrb[0].mxu0
        %v5401 = vadd.f32 %v5037, %v5400
        %v5402 = vpop.f32.mrb[0].mxu0
        %5403 = vmatprep.mubr.f32.mxu0 0.0
        %5404 = vmatmul.mubr.f32.gmra.mrb[0].mxu0 %v5012
        %v5405 = vpop.f32.mrb[0].mxu0
        %v5406 = vadd.f32 %v5037, %v5405
        %v5407 = vpop.f32.mrb[0].mxu0
        %5408 = vmatprep.mubr.f32.mxu0 0.0
        %5409 = vmatmul.mubr.f32.gmra.mrb[0].mxu0 %v5013
        %v5410 = vpop.f32.mrb[0].mxu0
        %v5411 = vadd.f32 %v5037, %v5410
        %v5412 = vpop.f32.mrb[0].mxu0
        %5413 = vmatprep.mubr.f32.mxu0 0.0
        %5414 = vmatmul.mubr.f32.gmra.mrb[0].mxu0 %v5014
        %v5415 = vpop.f32.mrb[0].mxu0
        %v5416 = vadd.f32 %v5037, %v5415
        %v5417 = vpop.f32.mrb[0].mxu0
        %5418 = vmatprep.mubr.f32.mxu0 0.0
        %5419 = vmatmul.mubr.f32.gmra.mrb[0].mxu0 %v5015
        %v5420 = vpop.f32.mrb[0].mxu0
        %v5421 = vadd.f32 %v5037, %v5420
        %v5422 = vpop.f32.mrb[0].mxu0
        %5423 = vdwg.mxu0
        %5424 = vxpose.xlu0.b32.start [1/16] %v5106, 128
        %5425 = vxpose.xlu0.b32.cont [2/16] %v5111, 128
        %5426 = vxpose.xlu0.b32.cont [3/16] %v5116, 128
        %5427 = vxpose.xlu0.b32.cont [4/16] %v5121, 128
        %5428 = vxpose.xlu0.b32.cont [5/16] %v5126, 128
        %5429 = vxpose.xlu0.b32.cont [6/16] %v5131, 128
        %5430 = vxpose.xlu0.b32.cont [7/16] %v5136, 128
        %5431 = vxpose.xlu0.b32.cont [8/16] %v5141, 128
        %5432 = vxpose.xlu0.b32.cont [9/16] %v5146, 128
        %5433 = vxpose.xlu0.b32.cont [10/16] %v5151, 128
        %5434 = vxpose.xlu0.b32.cont [11/16] %v5156, 128
        %5435 = vxpose.xlu0.b32.cont [12/16] %v5161, 128
        %5436 = vxpose.xlu0.b32.cont [13/16] %v5166, 128
        %5437 = vxpose.xlu0.b32.cont [14/16] %v5171, 128
        %5438 = vxpose.xlu0.b32.cont [15/16] %v5176, 128
        %5439 = vxpose.xlu0.b32.end [16/16] %v5181, 128
        %v5440 = vpop.trf.xlu0
        %v5441 = vpop.trf.xlu0
        %v5442 = vpop.trf.xlu0
        %v5443 = vpop.trf.xlu0
        %v5444 = vpop.trf.xlu0
        %v5445 = vpop.trf.xlu0
        %v5446 = vpop.trf.xlu0
        %v5447 = vpop.trf.xlu0
        %v5448 = vpop.trf.xlu0
        %v5449 = vpop.trf.xlu0
        %v5450 = vpop.trf.xlu0
        %v5451 = vpop.trf.xlu0
        %v5452 = vpop.trf.xlu0
        %v5453 = vpop.trf.xlu0
        %v5454 = vpop.trf.xlu0
        %v5455 = vpop.trf.xlu0
        %5456 = vxpose.xlu0.b32.start [1/16] %v5186, 128
        %5457 = vxpose.xlu0.b32.cont [2/16] %v5191, 128
        %5458 = vxpose.xlu0.b32.cont [3/16] %v5196, 128
        %5459 = vxpose.xlu0.b32.cont [4/16] %v5201, 128
        %5460 = vxpose.xlu0.b32.cont [5/16] %v5206, 128
        %5461 = vxpose.xlu0.b32.cont [6/16] %v5211, 128
        %5462 = vxpose.xlu0.b32.cont [7/16] %v5216, 128
        %5463 = vxpose.xlu0.b32.cont [8/16] %v5221, 128
        %5464 = vxpose.xlu0.b32.cont [9/16] %v5226, 128
        %5465 = vxpose.xlu0.b32.cont [10/16] %v5231, 128
        %5466 = vxpose.xlu0.b32.cont [11/16] %v5236, 128
        %5467 = vxpose.xlu0.b32.cont [12/16] %v5241, 128
        %5468 = vxpose.xlu0.b32.cont [13/16] %v5246, 128
        %5469 = vxpose.xlu0.b32.cont [14/16] %v5251, 128
        %5470 = vxpose.xlu0.b32.cont [15/16] %v5256, 128
        %5471 = vxpose.xlu0.b32.end [16/16] %v5261, 128
        %v5472 = vpop.trf.xlu0
        %v5473 = vpop.trf.xlu0
        %v5474 = vpop.trf.xlu0
        %v5475 = vpop.trf.xlu0
        %v5476 = vpop.trf.xlu0
        %v5477 = vpop.trf.xlu0
        %v5478 = vpop.trf.xlu0
        %v5479 = vpop.trf.xlu0
        %v5480 = vpop.trf.xlu0
        %v5481 = vpop.trf.xlu0
        %v5482 = vpop.trf.xlu0
        %v5483 = vpop.trf.xlu0
        %v5484 = vpop.trf.xlu0
        %v5485 = vpop.trf.xlu0
        %v5486 = vpop.trf.xlu0
        %v5487 = vpop.trf.xlu0
        %5488 = vxpose.xlu0.b32.start [1/16] %v5266, 128
        %5489 = vxpose.xlu0.b32.cont [2/16] %v5271, 128
        %5490 = vxpose.xlu0.b32.cont [3/16] %v5276, 128
        %5491 = vxpose.xlu0.b32.cont [4/16] %v5281, 128
        %5492 = vxpose.xlu0.b32.cont [5/16] %v5286, 128
        %5493 = vxpose.xlu0.b32.cont [6/16] %v5291, 128
        %5494 = vxpose.xlu0.b32.cont [7/16] %v5296, 128
        %5495 = vxpose.xlu0.b32.cont [8/16] %v5301, 128
        %5496 = vxpose.xlu0.b32.cont [9/16] %v5306, 128
        %5497 = vxpose.xlu0.b32.cont [10/16] %v5311, 128
        %5498 = vxpose.xlu0.b32.cont [11/16] %v5316, 128
        %5499 = vxpose.xlu0.b32.cont [12/16] %v5321, 128
        %5500 = vxpose.xlu0.b32.cont [13/16] %v5326, 128
        %5501 = vxpose.xlu0.b32.cont [14/16] %v5331, 128
        %5502 = vxpose.xlu0.b32.cont [15/16] %v5336, 128
        %5503 = vxpose.xlu0.b32.end [16/16] %v5341, 128
        %v5504 = vpop.trf.xlu0
        %v5505 = vpop.trf.xlu0
        %v5506 = vpop.trf.xlu0
        %v5507 = vpop.trf.xlu0
        %v5508 = vpop.trf.xlu0
        %v5509 = vpop.trf.xlu0
        %v5510 = vpop.trf.xlu0
        %v5511 = vpop.trf.xlu0
        %v5512 = vpop.trf.xlu0
        %v5513 = vpop.trf.xlu0
        %v5514 = vpop.trf.xlu0
        %v5515 = vpop.trf.xlu0
        %v5516 = vpop.trf.xlu0
        %v5517 = vpop.trf.xlu0
        %v5518 = vpop.trf.xlu0
        %v5519 = vpop.trf.xlu0
        %5520 = vxpose.xlu0.b32.start [1/16] %v5346, 128
        %5521 = vxpose.xlu0.b32.cont [2/16] %v5351, 128
        %5522 = vxpose.xlu0.b32.cont [3/16] %v5356, 128
        %5523 = vxpose.xlu0.b32.cont [4/16] %v5361, 128
        %5524 = vxpose.xlu0.b32.cont [5/16] %v5366, 128
        %5525 = vxpose.xlu0.b32.cont [6/16] %v5371, 128
        %5526 = vxpose.xlu0.b32.cont [7/16] %v5376, 128
        %5527 = vxpose.xlu0.b32.cont [8/16] %v5381, 128
        %5528 = vxpose.xlu0.b32.cont [9/16] %v5386, 128
        %5529 = vxpose.xlu0.b32.cont [10/16] %v5391, 128
        %5530 = vxpose.xlu0.b32.cont [11/16] %v5396, 128
        %5531 = vxpose.xlu0.b32.cont [12/16] %v5401, 128
        %5532 = vxpose.xlu0.b32.cont [13/16] %v5406, 128
        %5533 = vxpose.xlu0.b32.cont [14/16] %v5411, 128
        %5534 = vxpose.xlu0.b32.cont [15/16] %v5416, 128
        %5535 = vxpose.xlu0.b32.end [16/16] %v5421, 128
        %v5536 = vpop.trf.xlu0
        %v5537 = vpop.trf.xlu0
        %v5538 = vpop.trf.xlu0
        %v5539 = vpop.trf.xlu0
        %v5540 = vpop.trf.xlu0
        %v5541 = vpop.trf.xlu0
        %v5542 = vpop.trf.xlu0
        %v5543 = vpop.trf.xlu0
        %v5544 = vpop.trf.xlu0
        %v5545 = vpop.trf.xlu0
        %v5546 = vpop.trf.xlu0
        %v5547 = vpop.trf.xlu0
        %v5548 = vpop.trf.xlu0
        %v5549 = vpop.trf.xlu0
        %v5550 = vpop.trf.xlu0
        %v5551 = vpop.trf.xlu0
        %v5556 = vcombine.low %v5440, %v5472
        %v5557 = vcombine.low %v5504, %v5536
        %v5559 = vunpack.c.l.s4 1966171168
        %v5560 = vunpack.c.0.s8 %v5559
        %v5561 = vlaneseq
        %v5562 = vshrl.u32 %v5561, 7
        %v5563 = vsub.s32 %v5560, %v5562
        %v5564 = vrot.slane %v5556, %v5563
        %v5566 = vunpack.c.l.s4 1966171168
        %v5567 = vunpack.c.0.s8 %v5566
        %v5568 = vlaneseq
        %v5569 = vshrl.u32 %v5568, 7
        %v5570 = vsub.s32 %v5567, %v5569
        %v5571 = vrot.slane %v5557, %v5570
        %v5572 = vcombine.low %v5564, %v5571
        %v5574 = vunpack.c.l.s4 1966171168
        %v5575 = vunpack.c.0.s8 %v5574
        %v5576 = vlaneseq
        %v5577 = vshrl.u32 %v5576, 7
        %v5578 = vsub.s32 %v5575, %v5577
        %v5579 = vrot.slane %v5572, %v5578
        %v5581 = vlaneseq
        %vm5582 = vcmp.ge.s32.totalorder %v5581, 0
        %vm5583 = vcmp.lt.s32.totalorder %v5581, 512
        %vm5584 = vmand %vm5582, %vm5583
        %5585 = vst.msk [vmem:[%s478] sm:$0xf] %vm5584, %v5579
        %s5586 = sand.u32 %s317, 1
        %s5587 = scalar_lea.sflag [#allocation4], %s5586
        %s5588 = sand.u32 %s317, 1
        %s5589 = smul.addr %s5588, 4
        %s5590 = scalar_lea.vmem [#allocation3], %s5589
        // Predicated region
        $region65: #{tpu_custom_call.1} parent=63 // pred_check
          %p5591 = pneg %p327
        $region66: #{tpu_custom_call.1} parent=63 // pred_check_branch
          %5593 = sbr.rel (%p5591) target = $region68
        $region67: #{tpu_custom_call.1} parent=63 // pred_region
          %s5594 = smul.u32 4, %s32
          %s5596 = ssub.s32 64, 64
          %5597 = vsyncadd %s5587, %s5596
          %s5598 = smul.addr %s31, 8
          %s5599 = sadd.s32 %s5594, %s5598
          %s5600 = smul.addr %s5599, 16
          %s5601 = scalar_lea.hbm %s11, %s5600
          %s5603 = sshll.u32 %s5590, 4
          %s5604 = int_to_ptr.vmem [resolvable:$true] %s5603
          %5606 = dma.vmem_to_hbm [thread:$0]  %s5604, 64, %s5601, %s5587
        $region68: #{tpu_custom_call.1} parent=63 // pred_fallthru
          _
      $region64: #{tpu_custom_call.1} parent=5 // pred_fallthru
        _
      %p5607 = scmp.le.s32.totalorder 2, %s22
      // Predicated region
      $region69: #{tpu_custom_call.1} parent=5 // pred_check
        %p5608 = pneg %p5607
      $region70: #{tpu_custom_call.1} parent=5 // pred_check_branch
        %5610 = sbr.rel (%p5608) target = $region72
      $region71: #{tpu_custom_call.1} parent=5 // pred_region
        %s5611 = ssub.s32 %s22, 2
        // Predicated region
        $region73: #{tpu_custom_call.1} parent=71 // pred_check
          %p5612 = pneg %p333
        $region74: #{tpu_custom_call.1} parent=71 // pred_check_branch
          %5614 = sbr.rel (%p5612) target = $region76
        $region75: #{tpu_custom_call.1} parent=71 // pred_region
          %s5615 = sand.u32 %s318, 1
          %s5616 = scalar_lea.sflag [#allocation4], %s5615
          %s5617 = sand.u32 %s318, 1
          %s5618 = smul.addr %s5617, 4
          %s5619 = scalar_lea.vmem [#allocation3], %s5618
          %5620 = dma.done %s5616, 64
        $region76: #{tpu_custom_call.1} parent=71 // pred_fallthru
          _
      $region72: #{tpu_custom_call.1} parent=5 // pred_fallthru
        _
    $region6: #{tpu_custom_call.1} parent=1 // loop_footer
      %s26 = sadd.s32 1, %s22
    $region7: #{tpu_custom_call.1} parent=1 // loop_footer_branch
      %21 = sbr.rel target = $region3
    $region8: #{tpu_custom_call.1} parent=1 // loop_exit
      _
    %5621 = vsyncpa [#allocation4], 1
    %s5622 = scalar_lea.sflag [#allocation4], 1
    %5623 = vsyncpa %s5622, 1

</llo_original>
